<compile_context>
chip_gen: v6e
topology: v6e:2x2x1
jax: 0.10.0
libtpu: 0.0.40
codegen_flags: <defaults>
</compile_context>

<pallas_src>
import jax
import jax.numpy as jnp
from jax.experimental import pallas as pl
from jax.experimental.pallas import tpu as pltpu


def _round_up(x, m):
    return (x + m - 1) // m * m


# --------------------------- tiled MXU matmul -------------------------------

def _mm_kernel(a_ref, b_ref, o_ref, acc_ref):
    @pl.when(pl.program_id(2) == 0)
    def _():
        acc_ref[...] = jnp.zeros_like(acc_ref)

    acc_ref[...] += jnp.dot(a_ref[...], b_ref[...],
                            preferred_element_type=jnp.float32)

    @pl.when(pl.program_id(2) == pl.num_programs(2) - 1)
    def _():
        o_ref[...] = acc_ref[...]


def _mm_bias_kernel(a_ref, b_ref, bias_ref, o_ref, acc_ref):
    @pl.when(pl.program_id(2) == 0)
    def _():
        acc_ref[...] = jnp.zeros_like(acc_ref)

    acc_ref[...] += jnp.dot(a_ref[...], b_ref[...],
                            preferred_element_type=jnp.float32)

    @pl.when(pl.program_id(2) == pl.num_programs(2) - 1)
    def _():
        o_ref[...] = acc_ref[...] + bias_ref[...]


def pallas_matmul(a, b, bias=None, tm=256, tk=256, tn=256):
    """o = a @ b (+ bias). Tiled/pipelined; pads to (8,128)-friendly tiles, slices back."""
    M, K = a.shape
    K2, N = b.shape
    assert K == K2
    a = a.astype(jnp.float32)
    b = b.astype(jnp.float32)

    tm = min(tm, _round_up(M, 8))
    tk = min(tk, _round_up(K, 128))
    tn = min(tn, _round_up(N, 128))
    Mp, Kp, Np = _round_up(M, tm), _round_up(K, tk), _round_up(N, tn)
    if (Mp, Kp) != (M, K):
        a = jnp.pad(a, ((0, Mp - M), (0, Kp - K)))
    if (Kp, Np) != (K, N):
        b = jnp.pad(b, ((0, Kp - K), (0, Np - N)))

    grid = (Mp // tm, Np // tn, Kp // tk)
    a_spec = pl.BlockSpec((tm, tk), lambda i, j, k: (i, k))
    b_spec = pl.BlockSpec((tk, tn), lambda i, j, k: (k, j))
    o_spec = pl.BlockSpec((tm, tn), lambda i, j, k: (i, j))
    scratch = [pltpu.VMEM((tm, tn), jnp.float32)]
    cparams = pltpu.CompilerParams(
        dimension_semantics=("parallel", "parallel", "arbitrary"))

    if bias is None:
        out = pl.pallas_call(
            _mm_kernel,
            out_shape=jax.ShapeDtypeStruct((Mp, Np), jnp.float32),
            grid=grid,
            in_specs=[a_spec, b_spec],
            out_specs=o_spec,
            scratch_shapes=scratch,
            compiler_params=cparams,
        )(a, b)
    else:
        bias = bias.reshape(1, N).astype(jnp.float32)
        if Np != N:
            bias = jnp.pad(bias, ((0, 0), (0, Np - N)))
        bias_spec = pl.BlockSpec((1, tn), lambda i, j, k: (0, j))
        out = pl.pallas_call(
            _mm_bias_kernel,
            out_shape=jax.ShapeDtypeStruct((Mp, Np), jnp.float32),
            grid=grid,
            in_specs=[a_spec, b_spec, bias_spec],
            out_specs=o_spec,
            scratch_shapes=scratch,
            compiler_params=cparams,
        )(a, b, bias)

    if (Mp, Np) != (M, N):
        out = out[:M, :N]
    return out


# --------------------- tiled abs-column-sum reduction -----------------------

def _abs_colsum_kernel(m_ref, o_ref):
    @pl.when(pl.program_id(0) == 0)
    def _():
        o_ref[...] = jnp.zeros_like(o_ref)

    o_ref[...] += jnp.sum(jnp.abs(m_ref[...]), axis=0, keepdims=True)


def pallas_abs_colsum(m, tr=512):
    """o[0, c] = sum_r |m[r, c]| — tiled over rows, output-resident accumulator."""
    R, N = m.shape
    m = m.astype(jnp.float32)
    tr = min(tr, _round_up(R, 8))
    Rp = _round_up(R, tr)
    Np = _round_up(N, 128)
    if (Rp, Np) != (R, N):
        m = jnp.pad(m, ((0, Rp - R), (0, Np - N)))
    out = pl.pallas_call(
        _abs_colsum_kernel,
        out_shape=jax.ShapeDtypeStruct((1, Np), jnp.float32),
        grid=(Rp // tr,),
        in_specs=[pl.BlockSpec((tr, Np), lambda i: (i, 0))],
        out_specs=pl.BlockSpec((1, Np), lambda i: (0, 0)),
        compiler_params=pltpu.CompilerParams(dimension_semantics=("arbitrary",)),
    )(m)
    return out[:, :N]


# ------------------------------ tiny "net" ----------------------------------

class Normalization:
    def __init__(self, mean, sigma):
        self.mean, self.sigma = float(mean), float(sigma)

    def forward(self, x):
        return (x - self.mean) / self.sigma


class Conv2d:
    def __init__(self, weight, bias, stride, padding):
        self.weight = jnp.asarray(weight, jnp.float32)
        self.bias = None if bias is None else jnp.asarray(bias, jnp.float32)
        self.stride, self.padding = int(stride), int(padding)
        self.padding_mode = "zeros"
        # TODO(synk): circular padding_mode branch of conv2d_zono not implemented.

    def conv_matrix(self, in_shape):
        """Materialize the conv as a dense (Cin*H*W, Cout*OH*OW) linear map.

        Static weight preprocessing (identity basis pushed through the conv once);
        the per-forward heavy work then runs as lane-dense Pallas matmuls.
        """
        Cin, H, W = in_shape
        n_in = Cin * H * W
        eye = jnp.eye(n_in, dtype=jnp.float32).reshape(n_in, Cin, H, W)
        y = jax.lax.conv_general_dilated(
            eye, self.weight, (self.stride, self.stride),
            [(self.padding, self.padding), (self.padding, self.padding)],
            dimension_numbers=("NCHW", "OIHW", "NCHW"))
        Cout, OH, OW = y.shape[1], y.shape[2], y.shape[3]
        conv_mat = y.reshape(n_in, Cout * OH * OW)
        bias_row = None
        if self.bias is not None:
            bias_row = jnp.broadcast_to(
                self.bias[:, None, None], (Cout, OH, OW)).reshape(1, -1)
        return conv_mat, bias_row, (Cout, OH, OW)

    def forward(self, x):
        N, Cin, H, W = x.shape
        conv_mat, bias_row, (Cout, OH, OW) = self.conv_matrix((Cin, H, W))
        out = pallas_matmul(x.reshape(N, Cin * H * W), conv_mat, bias_row)
        return out.reshape(N, Cout, OH, OW)


class Linear:
    def __init__(self, weight, bias):
        self.weight = jnp.asarray(weight, jnp.float32)   # (out, in)
        self.bias = jnp.asarray(bias, jnp.float32)

    def forward(self, x):
        return pallas_matmul(x, self.weight.T, self.bias.reshape(1, -1))


class Flatten:
    def forward(self, x):
        return x.reshape(x.shape[0], -1)


class ReLU:
    pass


class Net:
    def __init__(self, layers):
        self.layers = layers


# --------------------------- ZonotopeTransformer ----------------------------

class ZonotopeTransformer:
    def __init__(self, slopes_list, name):
        self.slopes = [jnp.asarray(s, jnp.float32) for s in slopes_list]
        self.count_relu = len(slopes_list)
        self.name = name

    @staticmethod
    def _flush(M, col_scale, diag_vec):
        # Materialize pending column scale / diagonal rows (rare fallback path).
        if col_scale is not None:
            M = M * col_scale[None, :]
        if diag_vec is not None:
            M = jnp.concatenate([M, jnp.diag(diag_vec)], axis=0)
        return M

    def iterate_network(self, net, magnitude_matrix, center_tensor):
        curr_relu = 0
        M = magnitude_matrix.astype(jnp.float32)
        # Lazy state (true magnitude matrix == concat([M * col_scale, diag(diag_vec)])):
        col_scale = None   # pending per-column scale, folded into the next affine weight
        diag_vec = None    # pending implicit new-error-term rows (one per neuron)

        for layer in net.layers:
            if isinstance(layer, Normalization):
                center_tensor = layer.forward(center_tensor)
                # Error terms only scale by 1/sigma (no mean shift) — this is correct
                # for the zonotope generators; do not "fix" with a mean subtraction.
                s = jnp.full((M.shape[1],), 1.0 / layer.sigma, jnp.float32)
                col_scale = s if col_scale is None else col_scale * s

            elif isinstance(layer, Linear):
                W = layer.weight                                    # (out, in)
                W_eff = W if col_scale is None else W * col_scale[None, :]
                new_M = pallas_matmul(M, W_eff.T)                   # no-bias error-row matmul
                if diag_vec is not None:
                    # diag(d) @ W.T == d[:, None] * W.T  — no MXU work, no diag block.
                    new_M = jnp.concatenate([new_M, diag_vec[:, None] * W.T], axis=0)
                M = new_M
                col_scale, diag_vec = None, None
                center_tensor = layer.forward(center_tensor)

            elif isinstance(layer, Flatten):
                center_tensor = layer.forward(center_tensor)

            elif isinstance(layer, ReLU):
                if diag_vec is not None:
                    # TODO(synk): two consecutive ReLUs with no affine layer in between —
                    # fall back to materializing the pending rows.
                    M = self._flush(M, col_scale, diag_vec)
                    col_scale, diag_vec = None, None

                center_size = center_tensor.shape
                num_col = M.shape[1]
                c = center_tensor.reshape(1, num_col)

                abs_vals = pallas_abs_colsum(M)                     # (1, num_col)
                if col_scale is not None:
                    abs_vals = abs_vals * jnp.abs(col_scale)[None, :]

                lx = (c - abs_vals)[0]
                ux = (c + abs_vals)[0]
                s = self.slopes[curr_relu]

                is_zero = ux <= 0.0
                is_cross = jnp.logical_and(ux > 0.0, lx <= 0.0)
                denom = jnp.where(is_cross, ux - lx, 1.0)
                basic_slopes = ux / denom
                is_left = jnp.logical_and(
                    is_cross, jnp.logical_and(s >= 0.0, s <= basic_slopes))
                is_right = jnp.logical_and(is_cross, jnp.logical_not(is_left))

                new_mag = jnp.where(is_left, (1.0 - s) * ux * 0.5,
                          jnp.where(is_right, -s * lx * 0.5, 0.0))
                col_mult = jnp.where(is_zero, 0.0, jnp.where(is_cross, s, 1.0))

                # Fold the column rescale into the next affine weight instead of
                # touching the R-row magnitude matrix; keep new error rows implicit.
                col_scale = col_mult if col_scale is None else col_scale * col_mult
                # TODO(synk): PyTorch appends one new error-term row per *crossing*
                # neuron (data-dependent row count). JAX needs static shapes, so we
                # append one row per neuron (zero magnitude for non-crossing);
                # the represented zonotope is mathematically identical.
                diag_vec = new_mag.astype(jnp.float32)

                c0 = c[0]
                c_new = jnp.where(is_zero, 0.0,
                        jnp.where(is_cross, s * c0 + new_mag, c0))
                center_tensor = c_new.reshape(center_size)
                curr_relu += 1

            elif isinstance(layer, Conv2d):
                _, C, H, W = center_tensor.shape
                conv_mat, bias_row, (Cout, OH, OW) = layer.conv_matrix((C, H, W))
                cm_eff = conv_mat if col_scale is None else col_scale[:, None] * conv_mat
                new_M = pallas_matmul(M, cm_eff)                    # lane-dense conv-as-matmul
                if diag_vec is not None:
                    new_M = jnp.concatenate(
                        [new_M, diag_vec[:, None] * conv_mat], axis=0)
                M = new_M
                col_scale, diag_vec = None, None
                c_flat = center_tensor.reshape(1, C * H * W)
                center_tensor = pallas_matmul(c_flat, conv_mat, bias_row).reshape(
                    1, Cout, OH, OW)

        M = self._flush(M, col_scale, diag_vec)
        return M, center_tensor

    def forward(self, net, magnitude_matrix, center_tensor):
        return self.iterate_network(net, magnitude_matrix, center_tensor)


# ---------------------------------- main -------------------------------------

if __name__ == "__main__":
    key = jax.random.PRNGKey(0)
    k1, k2, k3, k4, k5, k6, k7, k8, k9 = jax.random.split(key, 9)

    Cin, H, W = 1, 16, 16
    Cout = 4
    OH = OW = 8                      # conv k=3, stride=2, pad=1 on 16x16
    n_feat1 = Cout * OH * OW         # 256
    hidden = 32
    out_dim = 10

    conv_w = 0.3 * jax.random.normal(k1, (Cout, Cin, 3, 3), jnp.float32)
    conv_b = 0.1 * jax.random.normal(k2, (Cout,), jnp.float32)
    lin1_w = jax.random.normal(k3, (hidden, n_feat1), jnp.float32) / jnp.sqrt(n_feat1)
    lin1_b = 0.1 * jax.random.normal(k4, (hidden,), jnp.float32)
    lin2_w = jax.random.normal(k5, (out_dim, hidden), jnp.float32) / jnp.sqrt(hidden)
    lin2_b = 0.1 * jax.random.normal(k6, (out_dim,), jnp.float32)

    slopes_list = [
        jax.random.uniform(k7, (n_feat1,), jnp.float32),
        jax.random.uniform(k8, (hidden,), jnp.float32),
    ]

    net = Net([
        Normalization(0.1307, 0.3081),
        Conv2d(conv_w, conv_b, stride=2, padding=1),
        ReLU(),
        Flatten(),
        Linear(lin1_w, lin1_b),
        ReLU(),
        Linear(lin2_w, lin2_b),
    ])

    center_tensor = jax.random.uniform(k9, (1, Cin, H, W), jnp.float32)
    eps = 0.05
    n_pix = Cin * H * W
    magnitude_matrix = eps * jnp.eye(n_pix, dtype=jnp.float32)

    transformer = ZonotopeTransformer(slopes_list, "conv_small")

    @jax.jit
    def run(mag, cen):
        return transformer.forward(net, mag, cen)

    M_out, c_out = run(magnitude_matrix, center_tensor)
    jax.block_until_ready((M_out, c_out))

    assert M_out.shape == (n_pix + n_feat1 + hidden, out_dim)
    assert c_out.shape == (1, out_dim)
    print("KERNEL_OK")
</pallas_src>

<mosaic_0001>
module attributes {stable_mosaic.version = 11 : i64} {
  func.func @_mm_bias_kernel(%arg0: i32, %arg1: i32, %arg2: i32, %arg3: memref<8x256xf32, #tpu.memory_space<vmem>>, %arg4: memref<256x256xf32, #tpu.memory_space<vmem>>, %arg5: memref<1x256xf32, #tpu.memory_space<vmem>>, %arg6: memref<8x256xf32, #tpu.memory_space<vmem>>, %arg7: memref<8x256xf32, #tpu.memory_space<vmem>>) attributes {dimension_semantics = [#tpu.dimension_semantics<parallel>, #tpu.dimension_semantics<parallel>, #tpu.dimension_semantics<arbitrary>], iteration_bounds = array<i64: 1, 1, 1>, scalar_prefetch = 0 : i64, scratch_operands = 1 : i64, tpu.core_type = #tpu.core_type<tc>, window_params = [{transform_indices = @transform_0, window_bounds = array<i64: 8, 256>}, {transform_indices = @transform_1, window_bounds = array<i64: 256, 256>}, {transform_indices = @transform_2, window_bounds = array<i64: 1, 256>}, {transform_indices = @transform_3, window_bounds = array<i64: 8, 256>}]} {
    %c0_i32 = arith.constant 0 : i32
    %0 = arith.cmpi eq, %arg2, %c0_i32 : i32
    %1 = arith.extui %0 : i1 to i32
    %c0_i32_0 = arith.constant 0 : i32
    %2 = arith.cmpi ne, %1, %c0_i32_0 : i32
    scf.if %2 {
      %cst_10 = arith.constant 0.000000e+00 : f32
      %12 = vector.broadcast %cst_10 : f32 to vector<8x256xf32>
      %c0_11 = arith.constant 0 : index
      %c0_12 = arith.constant 0 : index
      %13 = vector.load %arg7[%c0_11, %c0_12] : memref<8x256xf32, #tpu.memory_space<vmem>>, vector<8x256xf32>
      tpu.vector_store %arg7[%c0_11, %c0_12], %12 {strides = array<i32>} : memref<8x256xf32, #tpu.memory_space<vmem>>, vector<8x256xf32>,
    } else {
    }
    %c0 = arith.constant 0 : index
    %c0_1 = arith.constant 0 : index
    %3 = vector.load %arg7[%c0, %c0_1] : memref<8x256xf32, #tpu.memory_space<vmem>>, vector<8x256xf32>
    %c0_2 = arith.constant 0 : index
    %c0_3 = arith.constant 0 : index
    %4 = vector.load %arg3[%c0_2, %c0_3] : memref<8x256xf32, #tpu.memory_space<vmem>>, vector<8x256xf32>
    %c0_4 = arith.constant 0 : index
    %c0_5 = arith.constant 0 : index
    %5 = vector.load %arg4[%c0_4, %c0_5] : memref<256x256xf32, #tpu.memory_space<vmem>>, vector<256x256xf32>
    %cst = arith.constant dense<0.000000e+00> : vector<8x256xf32>
    %6 = tpu.matmul %4, %5, %cst {dimension_numbers = #tpu.dot_dimension_numbers<[1], [0], [0], [1], [0, 0, 1, 1], [], []>} : vector<8x256xf32>, vector<256x256xf32>, vector<8x256xf32> -> vector<8x256xf32>
    %7 = arith.addf %3, %6 : vector<8x256xf32>
    %c0_6 = arith.constant 0 : index
    %c0_7 = arith.constant 0 : index
    %8 = vector.load %arg7[%c0_6, %c0_7] : memref<8x256xf32, #tpu.memory_space<vmem>>, vector<8x256xf32>
    tpu.vector_store %arg7[%c0_6, %c0_7], %7 {strides = array<i32>} : memref<8x256xf32, #tpu.memory_space<vmem>>, vector<8x256xf32>,
    %c0_i32_8 = arith.constant 0 : i32
    %9 = arith.cmpi eq, %arg2, %c0_i32_8 : i32
    %10 = arith.extui %9 : i1 to i32
    %c0_i32_9 = arith.constant 0 : i32
    %11 = arith.cmpi ne, %10, %c0_i32_9 : i32
    scf.if %11 {
      %c0_10 = arith.constant 0 : index
      %c0_11 = arith.constant 0 : index
      %12 = vector.load %arg7[%c0_10, %c0_11] : memref<8x256xf32, #tpu.memory_space<vmem>>, vector<8x256xf32>
      %c0_12 = arith.constant 0 : index
      %c0_13 = arith.constant 0 : index
      %13 = vector.load %arg5[%c0_12, %c0_13] : memref<1x256xf32, #tpu.memory_space<vmem>>, vector<1x256xf32>
      %14 = vector.broadcast %13 : vector<1x256xf32> to vector<8x256xf32>
      %15 = arith.addf %12, %14 : vector<8x256xf32>
      %c0_14 = arith.constant 0 : index
      %c0_15 = arith.constant 0 : index
      %16 = vector.load %arg6[%c0_14, %c0_15] : memref<8x256xf32, #tpu.memory_space<vmem>>, vector<8x256xf32>
      tpu.vector_store %arg6[%c0_14, %c0_15], %15 {strides = array<i32>} : memref<8x256xf32, #tpu.memory_space<vmem>>, vector<8x256xf32>,
    } else {
    }
    return
  }
  func.func @transform_0(%arg0: i32, %arg1: i32, %arg2: i32) -> (i32, i32) {
    %c0_i32 = arith.constant 0 : i32
    return %arg0, %arg2 : i32, i32
  }
  func.func @transform_1(%arg0: i32, %arg1: i32, %arg2: i32) -> (i32, i32) {
    %c0_i32 = arith.constant 0 : i32
    return %arg2, %arg1 : i32, i32
  }
  func.func @transform_2(%arg0: i32, %arg1: i32, %arg2: i32) -> (i32, i32) {
    %c0_i32 = arith.constant 0 : i32
    %c0_i32_0 = arith.constant 0 : i32
    return %c0_i32, %arg1 : i32, i32
  }
  func.func @transform_3(%arg0: i32, %arg1: i32, %arg2: i32) -> (i32, i32) {
    %c0_i32 = arith.constant 0 : i32
    return %arg0, %arg1 : i32, i32
  }
}

module attributes {stable_mosaic.version = 11 : i64} {
  func.func @_mm_kernel(%arg0: i32, %arg1: i32, %arg2: i32, %arg3: memref<256x256xf32, #tpu.memory_space<vmem>>, %arg4: memref<256x256xf32, #tpu.memory_space<vmem>>, %arg5: memref<256x256xf32, #tpu.memory_space<vmem>>, %arg6: memref<256x256xf32, #tpu.memory_space<vmem>>) attributes {dimension_semantics = [#tpu.dimension_semantics<parallel>, #tpu.dimension_semantics<parallel>, #tpu.dimension_semantics<arbitrary>], iteration_bounds = array<i64: 1, 1, 1>, scalar_prefetch = 0 : i64, scratch_operands = 1 : i64, tpu.core_type = #tpu.core_type<tc>, window_params = [{transform_indices = @transform_0, window_bounds = array<i64: 256, 256>}, {transform_indices = @transform_1, window_bounds = array<i64: 256, 256>}, {transform_indices = @transform_2, window_bounds = array<i64: 256, 256>}]} {
    %c0_i32 = arith.constant 0 : i32
    %0 = arith.cmpi eq, %arg2, %c0_i32 : i32
    %1 = arith.extui %0 : i1 to i32
    %c0_i32_0 = arith.constant 0 : i32
    %2 = arith.cmpi ne, %1, %c0_i32_0 : i32
    scf.if %2 {
      %cst_10 = arith.constant 0.000000e+00 : f32
      %12 = vector.broadcast %cst_10 : f32 to vector<256x256xf32>
      %c0_11 = arith.constant 0 : index
      %c0_12 = arith.constant 0 : index
      %13 = vector.load %arg6[%c0_11, %c0_12] : memref<256x256xf32, #tpu.memory_space<vmem>>, vector<256x256xf32>
      tpu.vector_store %arg6[%c0_11, %c0_12], %12 {strides = array<i32>} : memref<256x256xf32, #tpu.memory_space<vmem>>, vector<256x256xf32>,
    } else {
    }
    %c0 = arith.constant 0 : index
    %c0_1 = arith.constant 0 : index
    %3 = vector.load %arg6[%c0, %c0_1] : memref<256x256xf32, #tpu.memory_space<vmem>>, vector<256x256xf32>
    %c0_2 = arith.constant 0 : index
    %c0_3 = arith.constant 0 : index
    %4 = vector.load %arg3[%c0_2, %c0_3] : memref<256x256xf32, #tpu.memory_space<vmem>>, vector<256x256xf32>
    %c0_4 = arith.constant 0 : index
    %c0_5 = arith.constant 0 : index
    %5 = vector.load %arg4[%c0_4, %c0_5] : memref<256x256xf32, #tpu.memory_space<vmem>>, vector<256x256xf32>
    %cst = arith.constant dense<0.000000e+00> : vector<256x256xf32>
    %6 = tpu.matmul %4, %5, %cst {dimension_numbers = #tpu.dot_dimension_numbers<[1], [0], [0], [1], [0, 0, 1, 1], [], []>} : vector<256x256xf32>, vector<256x256xf32>, vector<256x256xf32> -> vector<256x256xf32>
    %7 = arith.addf %3, %6 : vector<256x256xf32>
    %c0_6 = arith.constant 0 : index
    %c0_7 = arith.constant 0 : index
    %8 = vector.load %arg6[%c0_6, %c0_7] : memref<256x256xf32, #tpu.memory_space<vmem>>, vector<256x256xf32>
    tpu.vector_store %arg6[%c0_6, %c0_7], %7 {strides = array<i32>} : memref<256x256xf32, #tpu.memory_space<vmem>>, vector<256x256xf32>,
    %c0_i32_8 = arith.constant 0 : i32
    %9 = arith.cmpi eq, %arg2, %c0_i32_8 : i32
    %10 = arith.extui %9 : i1 to i32
    %c0_i32_9 = arith.constant 0 : i32
    %11 = arith.cmpi ne, %10, %c0_i32_9 : i32
    scf.if %11 {
      %c0_10 = arith.constant 0 : index
      %c0_11 = arith.constant 0 : index
      %12 = vector.load %arg6[%c0_10, %c0_11] : memref<256x256xf32, #tpu.memory_space<vmem>>, vector<256x256xf32>
      %c0_12 = arith.constant 0 : index
      %c0_13 = arith.constant 0 : index
      %13 = vector.load %arg5[%c0_12, %c0_13] : memref<256x256xf32, #tpu.memory_space<vmem>>, vector<256x256xf32>
      tpu.vector_store %arg5[%c0_12, %c0_13], %12 {strides = array<i32>} : memref<256x256xf32, #tpu.memory_space<vmem>>, vector<256x256xf32>,
    } else {
    }
    return
  }
  func.func @transform_0(%arg0: i32, %arg1: i32, %arg2: i32) -> (i32, i32) {
    %c0_i32 = arith.constant 0 : i32
    return %arg0, %arg2 : i32, i32
  }
  func.func @transform_1(%arg0: i32, %arg1: i32, %arg2: i32) -> (i32, i32) {
    %c0_i32 = arith.constant 0 : i32
    return %arg2, %arg1 : i32, i32
  }
  func.func @transform_2(%arg0: i32, %arg1: i32, %arg2: i32) -> (i32, i32) {
    %c0_i32 = arith.constant 0 : i32
    return %arg0, %arg1 : i32, i32
  }
}

module attributes {stable_mosaic.version = 11 : i64} {
  func.func @_abs_colsum_kernel(%arg0: i32, %arg1: memref<256x256xf32, #tpu.memory_space<vmem>>, %arg2: memref<1x256xf32, #tpu.memory_space<vmem>>) attributes {dimension_semantics = [#tpu.dimension_semantics<arbitrary>], iteration_bounds = array<i64: 1>, scalar_prefetch = 0 : i64, scratch_operands = 0 : i64, tpu.core_type = #tpu.core_type<tc>, window_params = [{transform_indices = @transform_0, window_bounds = array<i64: 256, 256>}, {pipeline_mode = #tpu.pipeline_mode<synchronous>, transform_indices = @transform_1, window_bounds = array<i64: 1, 256>}]} {
    %c0_i32 = arith.constant 0 : i32
    %0 = arith.cmpi eq, %arg0, %c0_i32 : i32
    %1 = arith.extui %0 : i1 to i32
    %c0_i32_0 = arith.constant 0 : i32
    %2 = arith.cmpi ne, %1, %c0_i32_0 : i32
    scf.if %2 {
      %cst_6 = arith.constant 0.000000e+00 : f32
      %10 = vector.broadcast %cst_6 : f32 to vector<1x256xf32>
      %c0_7 = arith.constant 0 : index
      %c0_8 = arith.constant 0 : index
      %11 = vector.load %arg2[%c0_7, %c0_8] : memref<1x256xf32, #tpu.memory_space<vmem>>, vector<1x256xf32>
      tpu.vector_store %arg2[%c0_7, %c0_8], %10 {strides = array<i32>} : memref<1x256xf32, #tpu.memory_space<vmem>>, vector<1x256xf32>,
    } else {
    }
    %c0 = arith.constant 0 : index
    %c0_1 = arith.constant 0 : index
    %3 = vector.load %arg2[%c0, %c0_1] : memref<1x256xf32, #tpu.memory_space<vmem>>, vector<1x256xf32>
    %c0_2 = arith.constant 0 : index
    %c0_3 = arith.constant 0 : index
    %4 = vector.load %arg1[%c0_2, %c0_3] : memref<256x256xf32, #tpu.memory_space<vmem>>, vector<256x256xf32>
    %5 = math.absf %4 : vector<256x256xf32>
    %cst = arith.constant dense<0.000000e+00> : vector<256xf32>
    %6 = vector.multi_reduction <add>, %5, %cst [0] : vector<256x256xf32> to vector<256xf32>
    %7 = vector.shape_cast %6 : vector<256xf32> to vector<1x256xf32>
    %8 = arith.addf %3, %7 : vector<1x256xf32>
    %c0_4 = arith.constant 0 : index
    %c0_5 = arith.constant 0 : index
    %9 = vector.load %arg2[%c0_4, %c0_5] : memref<1x256xf32, #tpu.memory_space<vmem>>, vector<1x256xf32>
    tpu.vector_store %arg2[%c0_4, %c0_5], %8 {strides = array<i32>} : memref<1x256xf32, #tpu.memory_space<vmem>>, vector<1x256xf32>,
    return
  }
  func.func @transform_0(%arg0: i32) -> (i32, i32) {
    %c0_i32 = arith.constant 0 : i32
    %c0_i32_0 = arith.constant 0 : i32
    return %arg0, %c0_i32 : i32, i32
  }
  func.func @transform_1(%arg0: i32) -> (i32, i32) {
    %c0_i32 = arith.constant 0 : i32
    %c0_i32_0 = arith.constant 0 : i32
    %c0_i32_1 = arith.constant 0 : i32
    return %c0_i32, %c0_i32_0 : i32, i32
  }
}

module attributes {stable_mosaic.version = 11 : i64} {
  func.func @_mm_bias_kernel(%arg0: i32, %arg1: i32, %arg2: i32, %arg3: memref<8x256xf32, #tpu.memory_space<vmem>>, %arg4: memref<256x128xf32, #tpu.memory_space<vmem>>, %arg5: memref<1x128xf32, #tpu.memory_space<vmem>>, %arg6: memref<8x128xf32, #tpu.memory_space<vmem>>, %arg7: memref<8x128xf32, #tpu.memory_space<vmem>>) attributes {dimension_semantics = [#tpu.dimension_semantics<parallel>, #tpu.dimension_semantics<parallel>, #tpu.dimension_semantics<arbitrary>], iteration_bounds = array<i64: 1, 1, 1>, scalar_prefetch = 0 : i64, scratch_operands = 1 : i64, tpu.core_type = #tpu.core_type<tc>, window_params = [{transform_indices = @transform_0, window_bounds = array<i64: 8, 256>}, {transform_indices = @transform_1, window_bounds = array<i64: 256, 128>}, {transform_indices = @transform_2, window_bounds = array<i64: 1, 128>}, {transform_indices = @transform_3, window_bounds = array<i64: 8, 128>}]} {
    %c0_i32 = arith.constant 0 : i32
    %0 = arith.cmpi eq, %arg2, %c0_i32 : i32
    %1 = arith.extui %0 : i1 to i32
    %c0_i32_0 = arith.constant 0 : i32
    %2 = arith.cmpi ne, %1, %c0_i32_0 : i32
    scf.if %2 {
      %cst_10 = arith.constant 0.000000e+00 : f32
      %12 = vector.broadcast %cst_10 : f32 to vector<8x128xf32>
      %c0_11 = arith.constant 0 : index
      %c0_12 = arith.constant 0 : index
      %13 = vector.load %arg7[%c0_11, %c0_12] : memref<8x128xf32, #tpu.memory_space<vmem>>, vector<8x128xf32>
      tpu.vector_store %arg7[%c0_11, %c0_12], %12 {strides = array<i32>} : memref<8x128xf32, #tpu.memory_space<vmem>>, vector<8x128xf32>,
    } else {
    }
    %c0 = arith.constant 0 : index
    %c0_1 = arith.constant 0 : index
    %3 = vector.load %arg7[%c0, %c0_1] : memref<8x128xf32, #tpu.memory_space<vmem>>, vector<8x128xf32>
    %c0_2 = arith.constant 0 : index
    %c0_3 = arith.constant 0 : index
    %4 = vector.load %arg3[%c0_2, %c0_3] : memref<8x256xf32, #tpu.memory_space<vmem>>, vector<8x256xf32>
    %c0_4 = arith.constant 0 : index
    %c0_5 = arith.constant 0 : index
    %5 = vector.load %arg4[%c0_4, %c0_5] : memref<256x128xf32, #tpu.memory_space<vmem>>, vector<256x128xf32>
    %cst = arith.constant dense<0.000000e+00> : vector<8x128xf32>
    %6 = tpu.matmul %4, %5, %cst {dimension_numbers = #tpu.dot_dimension_numbers<[1], [0], [0], [1], [0, 0, 1, 1], [], []>} : vector<8x256xf32>, vector<256x128xf32>, vector<8x128xf32> -> vector<8x128xf32>
    %7 = arith.addf %3, %6 : vector<8x128xf32>
    %c0_6 = arith.constant 0 : index
    %c0_7 = arith.constant 0 : index
    %8 = vector.load %arg7[%c0_6, %c0_7] : memref<8x128xf32, #tpu.memory_space<vmem>>, vector<8x128xf32>
    tpu.vector_store %arg7[%c0_6, %c0_7], %7 {strides = array<i32>} : memref<8x128xf32, #tpu.memory_space<vmem>>, vector<8x128xf32>,
    %c0_i32_8 = arith.constant 0 : i32
    %9 = arith.cmpi eq, %arg2, %c0_i32_8 : i32
    %10 = arith.extui %9 : i1 to i32
    %c0_i32_9 = arith.constant 0 : i32
    %11 = arith.cmpi ne, %10, %c0_i32_9 : i32
    scf.if %11 {
      %c0_10 = arith.constant 0 : index
      %c0_11 = arith.constant 0 : index
      %12 = vector.load %arg7[%c0_10, %c0_11] : memref<8x128xf32, #tpu.memory_space<vmem>>, vector<8x128xf32>
      %c0_12 = arith.constant 0 : index
      %c0_13 = arith.constant 0 : index
      %13 = vector.load %arg5[%c0_12, %c0_13] : memref<1x128xf32, #tpu.memory_space<vmem>>, vector<1x128xf32>
      %14 = vector.broadcast %13 : vector<1x128xf32> to vector<8x128xf32>
      %15 = arith.addf %12, %14 : vector<8x128xf32>
      %c0_14 = arith.constant 0 : index
      %c0_15 = arith.constant 0 : index
      %16 = vector.load %arg6[%c0_14, %c0_15] : memref<8x128xf32, #tpu.memory_space<vmem>>, vector<8x128xf32>
      tpu.vector_store %arg6[%c0_14, %c0_15], %15 {strides = array<i32>} : memref<8x128xf32, #tpu.memory_space<vmem>>, vector<8x128xf32>,
    } else {
    }
    return
  }
  func.func @transform_0(%arg0: i32, %arg1: i32, %arg2: i32) -> (i32, i32) {
    %c0_i32 = arith.constant 0 : i32
    return %arg0, %arg2 : i32, i32
  }
  func.func @transform_1(%arg0: i32, %arg1: i32, %arg2: i32) -> (i32, i32) {
    %c0_i32 = arith.constant 0 : i32
    return %arg2, %arg1 : i32, i32
  }
  func.func @transform_2(%arg0: i32, %arg1: i32, %arg2: i32) -> (i32, i32) {
    %c0_i32 = arith.constant 0 : i32
    %c0_i32_0 = arith.constant 0 : i32
    return %c0_i32, %arg1 : i32, i32
  }
  func.func @transform_3(%arg0: i32, %arg1: i32, %arg2: i32) -> (i32, i32) {
    %c0_i32 = arith.constant 0 : i32
    return %arg0, %arg1 : i32, i32
  }
}

module attributes {stable_mosaic.version = 11 : i64} {
  func.func @_mm_kernel(%arg0: i32, %arg1: i32, %arg2: i32, %arg3: memref<256x256xf32, #tpu.memory_space<vmem>>, %arg4: memref<256x128xf32, #tpu.memory_space<vmem>>, %arg5: memref<256x128xf32, #tpu.memory_space<vmem>>, %arg6: memref<256x128xf32, #tpu.memory_space<vmem>>) attributes {dimension_semantics = [#tpu.dimension_semantics<parallel>, #tpu.dimension_semantics<parallel>, #tpu.dimension_semantics<arbitrary>], iteration_bounds = array<i64: 1, 1, 1>, scalar_prefetch = 0 : i64, scratch_operands = 1 : i64, tpu.core_type = #tpu.core_type<tc>, window_params = [{transform_indices = @transform_0, window_bounds = array<i64: 256, 256>}, {transform_indices = @transform_1, window_bounds = array<i64: 256, 128>}, {transform_indices = @transform_2, window_bounds = array<i64: 256, 128>}]} {
    %c0_i32 = arith.constant 0 : i32
    %0 = arith.cmpi eq, %arg2, %c0_i32 : i32
    %1 = arith.extui %0 : i1 to i32
    %c0_i32_0 = arith.constant 0 : i32
    %2 = arith.cmpi ne, %1, %c0_i32_0 : i32
    scf.if %2 {
      %cst_10 = arith.constant 0.000000e+00 : f32
      %12 = vector.broadcast %cst_10 : f32 to vector<256x128xf32>
      %c0_11 = arith.constant 0 : index
      %c0_12 = arith.constant 0 : index
      %13 = vector.load %arg6[%c0_11, %c0_12] : memref<256x128xf32, #tpu.memory_space<vmem>>, vector<256x128xf32>
      tpu.vector_store %arg6[%c0_11, %c0_12], %12 {strides = array<i32>} : memref<256x128xf32, #tpu.memory_space<vmem>>, vector<256x128xf32>,
    } else {
    }
    %c0 = arith.constant 0 : index
    %c0_1 = arith.constant 0 : index
    %3 = vector.load %arg6[%c0, %c0_1] : memref<256x128xf32, #tpu.memory_space<vmem>>, vector<256x128xf32>
    %c0_2 = arith.constant 0 : index
    %c0_3 = arith.constant 0 : index
    %4 = vector.load %arg3[%c0_2, %c0_3] : memref<256x256xf32, #tpu.memory_space<vmem>>, vector<256x256xf32>
    %c0_4 = arith.constant 0 : index
    %c0_5 = arith.constant 0 : index
    %5 = vector.load %arg4[%c0_4, %c0_5] : memref<256x128xf32, #tpu.memory_space<vmem>>, vector<256x128xf32>
    %cst = arith.constant dense<0.000000e+00> : vector<256x128xf32>
    %6 = tpu.matmul %4, %5, %cst {dimension_numbers = #tpu.dot_dimension_numbers<[1], [0], [0], [1], [0, 0, 1, 1], [], []>} : vector<256x256xf32>, vector<256x128xf32>, vector<256x128xf32> -> vector<256x128xf32>
    %7 = arith.addf %3, %6 : vector<256x128xf32>
    %c0_6 = arith.constant 0 : index
    %c0_7 = arith.constant 0 : index
    %8 = vector.load %arg6[%c0_6, %c0_7] : memref<256x128xf32, #tpu.memory_space<vmem>>, vector<256x128xf32>
    tpu.vector_store %arg6[%c0_6, %c0_7], %7 {strides = array<i32>} : memref<256x128xf32, #tpu.memory_space<vmem>>, vector<256x128xf32>,
    %c0_i32_8 = arith.constant 0 : i32
    %9 = arith.cmpi eq, %arg2, %c0_i32_8 : i32
    %10 = arith.extui %9 : i1 to i32
    %c0_i32_9 = arith.constant 0 : i32
    %11 = arith.cmpi ne, %10, %c0_i32_9 : i32
    scf.if %11 {
      %c0_10 = arith.constant 0 : index
      %c0_11 = arith.constant 0 : index
      %12 = vector.load %arg6[%c0_10, %c0_11] : memref<256x128xf32, #tpu.memory_space<vmem>>, vector<256x128xf32>
      %c0_12 = arith.constant 0 : index
      %c0_13 = arith.constant 0 : index
      %13 = vector.load %arg5[%c0_12, %c0_13] : memref<256x128xf32, #tpu.memory_space<vmem>>, vector<256x128xf32>
      tpu.vector_store %arg5[%c0_12, %c0_13], %12 {strides = array<i32>} : memref<256x128xf32, #tpu.memory_space<vmem>>, vector<256x128xf32>,
    } else {
    }
    return
  }
  func.func @transform_0(%arg0: i32, %arg1: i32, %arg2: i32) -> (i32, i32) {
    %c0_i32 = arith.constant 0 : i32
    return %arg0, %arg2 : i32, i32
  }
  func.func @transform_1(%arg0: i32, %arg1: i32, %arg2: i32) -> (i32, i32) {
    %c0_i32 = arith.constant 0 : i32
    return %arg2, %arg1 : i32, i32
  }
  func.func @transform_2(%arg0: i32, %arg1: i32, %arg2: i32) -> (i32, i32) {
    %c0_i32 = arith.constant 0 : i32
    return %arg0, %arg1 : i32, i32
  }
}

module attributes {stable_mosaic.version = 11 : i64} {
  func.func @_abs_colsum_kernel(%arg0: i32, %arg1: memref<512x128xf32, #tpu.memory_space<vmem>>, %arg2: memref<1x128xf32, #tpu.memory_space<vmem>>) attributes {dimension_semantics = [#tpu.dimension_semantics<arbitrary>], iteration_bounds = array<i64: 1>, scalar_prefetch = 0 : i64, scratch_operands = 0 : i64, tpu.core_type = #tpu.core_type<tc>, window_params = [{transform_indices = @transform_0, window_bounds = array<i64: 512, 128>}, {pipeline_mode = #tpu.pipeline_mode<synchronous>, transform_indices = @transform_1, window_bounds = array<i64: 1, 128>}]} {
    %c0_i32 = arith.constant 0 : i32
    %0 = arith.cmpi eq, %arg0, %c0_i32 : i32
    %1 = arith.extui %0 : i1 to i32
    %c0_i32_0 = arith.constant 0 : i32
    %2 = arith.cmpi ne, %1, %c0_i32_0 : i32
    scf.if %2 {
      %cst_6 = arith.constant 0.000000e+00 : f32
      %10 = vector.broadcast %cst_6 : f32 to vector<1x128xf32>
      %c0_7 = arith.constant 0 : index
      %c0_8 = arith.constant 0 : index
      %11 = vector.load %arg2[%c0_7, %c0_8] : memref<1x128xf32, #tpu.memory_space<vmem>>, vector<1x128xf32>
      tpu.vector_store %arg2[%c0_7, %c0_8], %10 {strides = array<i32>} : memref<1x128xf32, #tpu.memory_space<vmem>>, vector<1x128xf32>,
    } else {
    }
    %c0 = arith.constant 0 : index
    %c0_1 = arith.constant 0 : index
    %3 = vector.load %arg2[%c0, %c0_1] : memref<1x128xf32, #tpu.memory_space<vmem>>, vector<1x128xf32>
    %c0_2 = arith.constant 0 : index
    %c0_3 = arith.constant 0 : index
    %4 = vector.load %arg1[%c0_2, %c0_3] : memref<512x128xf32, #tpu.memory_space<vmem>>, vector<512x128xf32>
    %5 = math.absf %4 : vector<512x128xf32>
    %cst = arith.constant dense<0.000000e+00> : vector<128xf32>
    %6 = vector.multi_reduction <add>, %5, %cst [0] : vector<512x128xf32> to vector<128xf32>
    %7 = vector.shape_cast %6 : vector<128xf32> to vector<1x128xf32>
    %8 = arith.addf %3, %7 : vector<1x128xf32>
    %c0_4 = arith.constant 0 : index
    %c0_5 = arith.constant 0 : index
    %9 = vector.load %arg2[%c0_4, %c0_5] : memref<1x128xf32, #tpu.memory_space<vmem>>, vector<1x128xf32>
    tpu.vector_store %arg2[%c0_4, %c0_5], %8 {strides = array<i32>} : memref<1x128xf32, #tpu.memory_space<vmem>>, vector<1x128xf32>,
    return
  }
  func.func @transform_0(%arg0: i32) -> (i32, i32) {
    %c0_i32 = arith.constant 0 : i32
    %c0_i32_0 = arith.constant 0 : i32
    return %arg0, %c0_i32 : i32, i32
  }
  func.func @transform_1(%arg0: i32) -> (i32, i32) {
    %c0_i32 = arith.constant 0 : i32
    %c0_i32_0 = arith.constant 0 : i32
    %c0_i32_1 = arith.constant 0 : i32
    return %c0_i32, %c0_i32_0 : i32, i32
  }
}

module attributes {stable_mosaic.version = 11 : i64} {
  func.func @_mm_bias_kernel(%arg0: i32, %arg1: i32, %arg2: i32, %arg3: memref<8x128xf32, #tpu.memory_space<vmem>>, %arg4: memref<128x128xf32, #tpu.memory_space<vmem>>, %arg5: memref<1x128xf32, #tpu.memory_space<vmem>>, %arg6: memref<8x128xf32, #tpu.memory_space<vmem>>, %arg7: memref<8x128xf32, #tpu.memory_space<vmem>>) attributes {dimension_semantics = [#tpu.dimension_semantics<parallel>, #tpu.dimension_semantics<parallel>, #tpu.dimension_semantics<arbitrary>], iteration_bounds = array<i64: 1, 1, 1>, scalar_prefetch = 0 : i64, scratch_operands = 1 : i64, tpu.core_type = #tpu.core_type<tc>, window_params = [{transform_indices = @transform_0, window_bounds = array<i64: 8, 128>}, {transform_indices = @transform_1, window_bounds = array<i64: 128, 128>}, {transform_indices = @transform_2, window_bounds = array<i64: 1, 128>}, {transform_indices = @transform_3, window_bounds = array<i64: 8, 128>}]} {
    %c0_i32 = arith.constant 0 : i32
    %0 = arith.cmpi eq, %arg2, %c0_i32 : i32
    %1 = arith.extui %0 : i1 to i32
    %c0_i32_0 = arith.constant 0 : i32
    %2 = arith.cmpi ne, %1, %c0_i32_0 : i32
    scf.if %2 {
      %cst_10 = arith.constant 0.000000e+00 : f32
      %12 = vector.broadcast %cst_10 : f32 to vector<8x128xf32>
      %c0_11 = arith.constant 0 : index
      %c0_12 = arith.constant 0 : index
      %13 = vector.load %arg7[%c0_11, %c0_12] : memref<8x128xf32, #tpu.memory_space<vmem>>, vector<8x128xf32>
      tpu.vector_store %arg7[%c0_11, %c0_12], %12 {strides = array<i32>} : memref<8x128xf32, #tpu.memory_space<vmem>>, vector<8x128xf32>,
    } else {
    }
    %c0 = arith.constant 0 : index
    %c0_1 = arith.constant 0 : index
    %3 = vector.load %arg7[%c0, %c0_1] : memref<8x128xf32, #tpu.memory_space<vmem>>, vector<8x128xf32>
    %c0_2 = arith.constant 0 : index
    %c0_3 = arith.constant 0 : index
    %4 = vector.load %arg3[%c0_2, %c0_3] : memref<8x128xf32, #tpu.memory_space<vmem>>, vector<8x128xf32>
    %c0_4 = arith.constant 0 : index
    %c0_5 = arith.constant 0 : index
    %5 = vector.load %arg4[%c0_4, %c0_5] : memref<128x128xf32, #tpu.memory_space<vmem>>, vector<128x128xf32>
    %cst = arith.constant dense<0.000000e+00> : vector<8x128xf32>
    %6 = tpu.matmul %4, %5, %cst {dimension_numbers = #tpu.dot_dimension_numbers<[1], [0], [0], [1], [0, 0, 1, 1], [], []>} : vector<8x128xf32>, vector<128x128xf32>, vector<8x128xf32> -> vector<8x128xf32>
    %7 = arith.addf %3, %6 : vector<8x128xf32>
    %c0_6 = arith.constant 0 : index
    %c0_7 = arith.constant 0 : index
    %8 = vector.load %arg7[%c0_6, %c0_7] : memref<8x128xf32, #tpu.memory_space<vmem>>, vector<8x128xf32>
    tpu.vector_store %arg7[%c0_6, %c0_7], %7 {strides = array<i32>} : memref<8x128xf32, #tpu.memory_space<vmem>>, vector<8x128xf32>,
    %c0_i32_8 = arith.constant 0 : i32
    %9 = arith.cmpi eq, %arg2, %c0_i32_8 : i32
    %10 = arith.extui %9 : i1 to i32
    %c0_i32_9 = arith.constant 0 : i32
    %11 = arith.cmpi ne, %10, %c0_i32_9 : i32
    scf.if %11 {
      %c0_10 = arith.constant 0 : index
      %c0_11 = arith.constant 0 : index
      %12 = vector.load %arg7[%c0_10, %c0_11] : memref<8x128xf32, #tpu.memory_space<vmem>>, vector<8x128xf32>
      %c0_12 = arith.constant 0 : index
      %c0_13 = arith.constant 0 : index
      %13 = vector.load %arg5[%c0_12, %c0_13] : memref<1x128xf32, #tpu.memory_space<vmem>>, vector<1x128xf32>
      %14 = vector.broadcast %13 : vector<1x128xf32> to vector<8x128xf32>
      %15 = arith.addf %12, %14 : vector<8x128xf32>
      %c0_14 = arith.constant 0 : index
      %c0_15 = arith.constant 0 : index
      %16 = vector.load %arg6[%c0_14, %c0_15] : memref<8x128xf32, #tpu.memory_space<vmem>>, vector<8x128xf32>
      tpu.vector_store %arg6[%c0_14, %c0_15], %15 {strides = array<i32>} : memref<8x128xf32, #tpu.memory_space<vmem>>, vector<8x128xf32>,
    } else {
    }
    return
  }
  func.func @transform_0(%arg0: i32, %arg1: i32, %arg2: i32) -> (i32, i32) {
    %c0_i32 = arith.constant 0 : i32
    return %arg0, %arg2 : i32, i32
  }
  func.func @transform_1(%arg0: i32, %arg1: i32, %arg2: i32) -> (i32, i32) {
    %c0_i32 = arith.constant 0 : i32
    return %arg2, %arg1 : i32, i32
  }
  func.func @transform_2(%arg0: i32, %arg1: i32, %arg2: i32) -> (i32, i32) {
    %c0_i32 = arith.constant 0 : i32
    %c0_i32_0 = arith.constant 0 : i32
    return %c0_i32, %arg1 : i32, i32
  }
  func.func @transform_3(%arg0: i32, %arg1: i32, %arg2: i32) -> (i32, i32) {
    %c0_i32 = arith.constant 0 : i32
    return %arg0, %arg1 : i32, i32
  }
}

module attributes {stable_mosaic.version = 11 : i64} {
  func.func @_mm_kernel(%arg0: i32, %arg1: i32, %arg2: i32, %arg3: memref<256x128xf32, #tpu.memory_space<vmem>>, %arg4: memref<128x128xf32, #tpu.memory_space<vmem>>, %arg5: memref<256x128xf32, #tpu.memory_space<vmem>>, %arg6: memref<256x128xf32, #tpu.memory_space<vmem>>) attributes {dimension_semantics = [#tpu.dimension_semantics<parallel>, #tpu.dimension_semantics<parallel>, #tpu.dimension_semantics<arbitrary>], iteration_bounds = array<i64: 2, 1, 1>, scalar_prefetch = 0 : i64, scratch_operands = 1 : i64, tpu.core_type = #tpu.core_type<tc>, window_params = [{transform_indices = @transform_0, window_bounds = array<i64: 256, 128>}, {transform_indices = @transform_1, window_bounds = array<i64: 128, 128>}, {transform_indices = @transform_2, window_bounds = array<i64: 256, 128>}]} {
    %c0_i32 = arith.constant 0 : i32
    %0 = arith.cmpi eq, %arg2, %c0_i32 : i32
    %1 = arith.extui %0 : i1 to i32
    %c0_i32_0 = arith.constant 0 : i32
    %2 = arith.cmpi ne, %1, %c0_i32_0 : i32
    scf.if %2 {
      %cst_10 = arith.constant 0.000000e+00 : f32
      %12 = vector.broadcast %cst_10 : f32 to vector<256x128xf32>
      %c0_11 = arith.constant 0 : index
      %c0_12 = arith.constant 0 : index
      %13 = vector.load %arg6[%c0_11, %c0_12] : memref<256x128xf32, #tpu.memory_space<vmem>>, vector<256x128xf32>
      tpu.vector_store %arg6[%c0_11, %c0_12], %12 {strides = array<i32>} : memref<256x128xf32, #tpu.memory_space<vmem>>, vector<256x128xf32>,
    } else {
    }
    %c0 = arith.constant 0 : index
    %c0_1 = arith.constant 0 : index
    %3 = vector.load %arg6[%c0, %c0_1] : memref<256x128xf32, #tpu.memory_space<vmem>>, vector<256x128xf32>
    %c0_2 = arith.constant 0 : index
    %c0_3 = arith.constant 0 : index
    %4 = vector.load %arg3[%c0_2, %c0_3] : memref<256x128xf32, #tpu.memory_space<vmem>>, vector<256x128xf32>
    %c0_4 = arith.constant 0 : index
    %c0_5 = arith.constant 0 : index
    %5 = vector.load %arg4[%c0_4, %c0_5] : memref<128x128xf32, #tpu.memory_space<vmem>>, vector<128x128xf32>
    %cst = arith.constant dense<0.000000e+00> : vector<256x128xf32>
    %6 = tpu.matmul %4, %5, %cst {dimension_numbers = #tpu.dot_dimension_numbers<[1], [0], [0], [1], [0, 0, 1, 1], [], []>} : vector<256x128xf32>, vector<128x128xf32>, vector<256x128xf32> -> vector<256x128xf32>
    %7 = arith.addf %3, %6 : vector<256x128xf32>
    %c0_6 = arith.constant 0 : index
    %c0_7 = arith.constant 0 : index
    %8 = vector.load %arg6[%c0_6, %c0_7] : memref<256x128xf32, #tpu.memory_space<vmem>>, vector<256x128xf32>
    tpu.vector_store %arg6[%c0_6, %c0_7], %7 {strides = array<i32>} : memref<256x128xf32, #tpu.memory_space<vmem>>, vector<256x128xf32>,
    %c0_i32_8 = arith.constant 0 : i32
    %9 = arith.cmpi eq, %arg2, %c0_i32_8 : i32
    %10 = arith.extui %9 : i1 to i32
    %c0_i32_9 = arith.constant 0 : i32
    %11 = arith.cmpi ne, %10, %c0_i32_9 : i32
    scf.if %11 {
      %c0_10 = arith.constant 0 : index
      %c0_11 = arith.constant 0 : index
      %12 = vector.load %arg6[%c0_10, %c0_11] : memref<256x128xf32, #tpu.memory_space<vmem>>, vector<256x128xf32>
      %c0_12 = arith.constant 0 : index
      %c0_13 = arith.constant 0 : index
      %13 = vector.load %arg5[%c0_12, %c0_13] : memref<256x128xf32, #tpu.memory_space<vmem>>, vector<256x128xf32>
      tpu.vector_store %arg5[%c0_12, %c0_13], %12 {strides = array<i32>} : memref<256x128xf32, #tpu.memory_space<vmem>>, vector<256x128xf32>,
    } else {
    }
    return
  }
  func.func @transform_0(%arg0: i32, %arg1: i32, %arg2: i32) -> (i32, i32) {
    %c0_i32 = arith.constant 0 : i32
    return %arg0, %arg2 : i32, i32
  }
  func.func @transform_1(%arg0: i32, %arg1: i32, %arg2: i32) -> (i32, i32) {
    %c0_i32 = arith.constant 0 : i32
    return %arg2, %arg1 : i32, i32
  }
  func.func @transform_2(%arg0: i32, %arg1: i32, %arg2: i32) -> (i32, i32) {
    %c0_i32 = arith.constant 0 : i32
    return %arg0, %arg1 : i32, i32
  }
}

</mosaic_0001>

<llo_original>
// kernel: run.9
$region0: #{run.9}
  #allocation0 [shape = 'u32[]', space=smem, size = 0x4, offset = 0x4, fixed_abs, tag = 'smem constant byte address 0x4 - core index']
  #allocation1 [shape = 'u32[144,128]{1,0:T(1,128)}', space=vmem, size = 0x12000, scoped, tag = 'internal scratch']
  #allocation2 [shape = 'f32[8,256]{1,0:T(8,128)}', space=vmem, size = 0x2000, scoped, tag = 'scratch operand']
  %s0 = inlined_call_operand.vmem [shape: f32[8,256], index: 0, kind: input, shape index: {}]
  %s1 = inlined_call_operand.vmem [shape: f32[256,256], index: 1, kind: input, shape index: {}]
  %s2 = inlined_call_operand.vmem [shape: f32[1,256], index: 2, kind: input, shape index: {}]
  %s3 = inlined_call_operand.vmem [shape: f32[8,256], index: 3, kind: output, shape index: {}]
  %s4 = sld [smem:[#allocation0]]
  $region30: #{run.9} parent=0
    _
  %s6 = ssub.s32 1, %s4
  %s7 = scalar_select 0, %s6, %s4
  // Predicated region
  $region2: #{run.9} parent=0 // pred_check
    _
  $region3: #{run.9} parent=0 // pred_check_branch
    %9 = sbr.rel (0) target = $region5
  $region4: #{run.9} parent=0 // pred_region
    _
  $region5: #{run.9} parent=0 // pred_fallthru
    _
  // Predicated region
  $region6: #{run.9} parent=0 // pred_check
    _
  $region7: #{run.9} parent=0 // pred_check_branch
    %11 = sbr.rel (0) target = $region9
  $region8: #{run.9} parent=0 // pred_region
    _
  $region9: #{run.9} parent=0 // pred_fallthru
    _
  // Predicated region
  $region10: #{run.9} parent=0 // pred_check
    _
  $region11: #{run.9} parent=0 // pred_check_branch
    %13 = sbr.rel (0) target = $region13
  $region12: #{run.9} parent=0 // pred_region
    _
  $region13: #{run.9} parent=0 // pred_fallthru
    _
  %p14 = scmp.eq.s32.totalorder 0, 0
  // Predicated region
  $region14: #{run.9} parent=0 // pred_check
    %p15 = pneg %p14
  $region15: #{run.9} parent=0 // pred_check_branch
    %17 = sbr.rel (%p15) target = $region17
  $region16: #{run.9} parent=0 // pred_region
    %18 = vst [vmem:[#allocation2] sm:$0xff] 0.0
    %19 = vst [vmem:[#allocation2 + $0x8] sm:$0xff] 0.0
  $region17: #{run.9} parent=0 // pred_fallthru
    _
  %v20 = vld [vmem:[#allocation2] sm:$0xff]
  %v21 = vld [vmem:[#allocation2 + $0x8] sm:$0xff]
  %v22 = vld [vmem:[%s0] sm:$0xff]
  %v23 = vld [vmem:[%s0 + $0x8] sm:$0xff]
  %v24 = vld [vmem:[%s1] sm:$0xff]
  %v25 = vld [vmem:[%s1 + $0x8] sm:$0xff]
  %v26 = vld [vmem:[%s1 + $0x10] sm:$0xff]
  %v27 = vld [vmem:[%s1 + $0x18] sm:$0xff]
  %v28 = vld [vmem:[%s1 + $0x20] sm:$0xff]
  %v29 = vld [vmem:[%s1 + $0x28] sm:$0xff]
  %v30 = vld [vmem:[%s1 + $0x30] sm:$0xff]
  %v31 = vld [vmem:[%s1 + $0x38] sm:$0xff]
  %v32 = vld [vmem:[%s1 + $0x40] sm:$0xff]
  %v33 = vld [vmem:[%s1 + $0x48] sm:$0xff]
  %v34 = vld [vmem:[%s1 + $0x50] sm:$0xff]
  %v35 = vld [vmem:[%s1 + $0x58] sm:$0xff]
  %v36 = vld [vmem:[%s1 + $0x60] sm:$0xff]
  %v37 = vld [vmem:[%s1 + $0x68] sm:$0xff]
  %v38 = vld [vmem:[%s1 + $0x70] sm:$0xff]
  %v39 = vld [vmem:[%s1 + $0x78] sm:$0xff]
  %v40 = vld [vmem:[%s1 + $0x80] sm:$0xff]
  %v41 = vld [vmem:[%s1 + $0x88] sm:$0xff]
  %v42 = vld [vmem:[%s1 + $0x90] sm:$0xff]
  %v43 = vld [vmem:[%s1 + $0x98] sm:$0xff]
  %v44 = vld [vmem:[%s1 + $0xa0] sm:$0xff]
  %v45 = vld [vmem:[%s1 + $0xa8] sm:$0xff]
  %v46 = vld [vmem:[%s1 + $0xb0] sm:$0xff]
  %v47 = vld [vmem:[%s1 + $0xb8] sm:$0xff]
  %v48 = vld [vmem:[%s1 + $0xc0] sm:$0xff]
  %v49 = vld [vmem:[%s1 + $0xc8] sm:$0xff]
  %v50 = vld [vmem:[%s1 + $0xd0] sm:$0xff]
  %v51 = vld [vmem:[%s1 + $0xd8] sm:$0xff]
  %v52 = vld [vmem:[%s1 + $0xe0] sm:$0xff]
  %v53 = vld [vmem:[%s1 + $0xe8] sm:$0xff]
  %v54 = vld [vmem:[%s1 + $0xf0] sm:$0xff]
  %v55 = vld [vmem:[%s1 + $0xf8] sm:$0xff]
  %v56 = vld [vmem:[%s1 + $0x100] sm:$0xff]
  %v57 = vld [vmem:[%s1 + $0x108] sm:$0xff]
  %v58 = vld [vmem:[%s1 + $0x110] sm:$0xff]
  %v59 = vld [vmem:[%s1 + $0x118] sm:$0xff]
  %v60 = vld [vmem:[%s1 + $0x120] sm:$0xff]
  %v61 = vld [vmem:[%s1 + $0x128] sm:$0xff]
  %v62 = vld [vmem:[%s1 + $0x130] sm:$0xff]
  %v63 = vld [vmem:[%s1 + $0x138] sm:$0xff]
  %v64 = vld [vmem:[%s1 + $0x140] sm:$0xff]
  %v65 = vld [vmem:[%s1 + $0x148] sm:$0xff]
  %v66 = vld [vmem:[%s1 + $0x150] sm:$0xff]
  %v67 = vld [vmem:[%s1 + $0x158] sm:$0xff]
  %v68 = vld [vmem:[%s1 + $0x160] sm:$0xff]
  %v69 = vld [vmem:[%s1 + $0x168] sm:$0xff]
  %v70 = vld [vmem:[%s1 + $0x170] sm:$0xff]
  %v71 = vld [vmem:[%s1 + $0x178] sm:$0xff]
  %v72 = vld [vmem:[%s1 + $0x180] sm:$0xff]
  %v73 = vld [vmem:[%s1 + $0x188] sm:$0xff]
  %v74 = vld [vmem:[%s1 + $0x190] sm:$0xff]
  %v75 = vld [vmem:[%s1 + $0x198] sm:$0xff]
  %v76 = vld [vmem:[%s1 + $0x1a0] sm:$0xff]
  %v77 = vld [vmem:[%s1 + $0x1a8] sm:$0xff]
  %v78 = vld [vmem:[%s1 + $0x1b0] sm:$0xff]
  %v79 = vld [vmem:[%s1 + $0x1b8] sm:$0xff]
  %v80 = vld [vmem:[%s1 + $0x1c0] sm:$0xff]
  %v81 = vld [vmem:[%s1 + $0x1c8] sm:$0xff]
  %v82 = vld [vmem:[%s1 + $0x1d0] sm:$0xff]
  %v83 = vld [vmem:[%s1 + $0x1d8] sm:$0xff]
  %v84 = vld [vmem:[%s1 + $0x1e0] sm:$0xff]
  %v85 = vld [vmem:[%s1 + $0x1e8] sm:$0xff]
  %v86 = vld [vmem:[%s1 + $0x1f0] sm:$0xff]
  %v87 = vld [vmem:[%s1 + $0x1f8] sm:$0xff]
  %88 = vmatprep.subr.mxu0 %v55
  %89 = vmatpush1.msra.mxu0 %v54
  %90 = vmatprep.subr.mxu0 %v53
  %91 = vmatpush1.msra.mxu0 %v52
  %92 = vmatprep.subr.mxu0 %v51
  %93 = vmatpush1.msra.mxu0 %v50
  %94 = vmatprep.subr.mxu0 %v49
  %95 = vmatpush1.msra.mxu0 %v48
  %96 = vmatprep.subr.mxu0 %v47
  %97 = vmatpush1.msra.mxu0 %v46
  %98 = vmatprep.subr.mxu0 %v45
  %99 = vmatpush1.msra.mxu0 %v44
  %100 = vmatprep.subr.mxu0 %v43
  %101 = vmatpush1.msra.mxu0 %v42
  %102 = vmatprep.subr.mxu0 %v41
  %103 = vmatpush1.msra.mxu0 %v40
  %104 = vmatprep.subr.mxu0 %v39
  %105 = vmatpush1.msra.mxu0 %v38
  %106 = vmatprep.subr.mxu0 %v37
  %107 = vmatpush1.msra.mxu0 %v36
  %108 = vmatprep.subr.mxu0 %v35
  %109 = vmatpush1.msra.mxu0 %v34
  %110 = vmatprep.subr.mxu0 %v33
  %111 = vmatpush1.msra.mxu0 %v32
  %112 = vmatprep.subr.mxu0 %v31
  %113 = vmatpush1.msra.mxu0 %v30
  %114 = vmatprep.subr.mxu0 %v29
  %115 = vmatpush1.msra.mxu0 %v28
  %116 = vmatprep.subr.mxu0 %v27
  %117 = vmatpush1.msra.mxu0 %v26
  %118 = vmatprep.subr.mxu0 %v25
  %119 = vmatpush1.msra.mxu0 %v24
  %120 = vmatprep.subr.mxu0 %v87
  %121 = vmatpush2.msra.mxu0 %v86
  %122 = vmatprep.subr.mxu0 %v85
  %123 = vmatpush2.msra.mxu0 %v84
  %124 = vmatprep.subr.mxu0 %v83
  %125 = vmatpush2.msra.mxu0 %v82
  %126 = vmatprep.subr.mxu0 %v81
  %127 = vmatpush2.msra.mxu0 %v80
  %128 = vmatprep.subr.mxu0 %v79
  %129 = vmatpush2.msra.mxu0 %v78
  %130 = vmatprep.subr.mxu0 %v77
  %131 = vmatpush2.msra.mxu0 %v76
  %132 = vmatprep.subr.mxu0 %v75
  %133 = vmatpush2.msra.mxu0 %v74
  %134 = vmatprep.subr.mxu0 %v73
  %135 = vmatpush2.msra.mxu0 %v72
  %136 = vmatprep.subr.mxu0 %v71
  %137 = vmatpush2.msra.mxu0 %v70
  %138 = vmatprep.subr.mxu0 %v69
  %139 = vmatpush2.msra.mxu0 %v68
  %140 = vmatprep.subr.mxu0 %v67
  %141 = vmatpush2.msra.mxu0 %v66
  %142 = vmatprep.subr.mxu0 %v65
  %143 = vmatpush2.msra.mxu0 %v64
  %144 = vmatprep.subr.mxu0 %v63
  %145 = vmatpush2.msra.mxu0 %v62
  %146 = vmatprep.subr.mxu0 %v61
  %147 = vmatpush2.msra.mxu0 %v60
  %148 = vmatprep.subr.mxu0 %v59
  %149 = vmatpush2.msra.mxu0 %v58
  %150 = vmatprep.subr.mxu0 %v57
  %151 = vmatpush2.msra.mxu0 %v56
  %152 = vmatprep.mubr.f32.mxu0 %v23
  %153 = vmatmul.mubr.f32.gmra.mxu0 %v22
  %v154 = vpop.f32.mrf.mxu0
  %v155 = vadd.f32 0.0, %v154
  %v156 = vpop.f32.mrf.mxu0
  %v157 = vadd.f32 0.0, %v156
  %158 = vdwg.mxu0
  %v159 = vadd.f32 %v20, %v155
  %v160 = vadd.f32 %v21, %v157
  %161 = vst [vmem:[#allocation2] sm:$0xff] %v159
  %162 = vst [vmem:[#allocation2 + $0x8] sm:$0xff] %v160
  // Predicated region
  $region18: #{run.9} parent=0 // pred_check
    %p163 = pneg %p14
  $region19: #{run.9} parent=0 // pred_check_branch
    %165 = sbr.rel (%p163) target = $region21
  $region20: #{run.9} parent=0 // pred_region
    %v166 = vld [vmem:[#allocation2] sm:$0xff]
    %v167 = vld [vmem:[#allocation2 + $0x8] sm:$0xff]
    %v168 = vld [vmem:[%s2] sm:$0x3]
    %v170 = vlaneseq
    %v171 = vshrl.u32 %v170, 7
    %v172 = vsub.s32 0, %v171
    %v173 = vrot.slane %v168, %v172
    %v174 = vlaneseq
    %v175 = vshrl.u32 %v174, 7
    %v176 = vsub.s32 1, %v175
    %v177 = vrot.slane %v168, %v176
    %v180 = vadd.f32 %v166, %v173
    %v181 = vadd.f32 %v167, %v177
    %182 = vst [vmem:[%s3] sm:$0xff] %v180
    %183 = vst [vmem:[%s3 + $0x8] sm:$0xff] %v181
  $region21: #{run.9} parent=0 // pred_fallthru
    _
  // Predicated region
  $region22: #{run.9} parent=0 // pred_check
    _
  $region23: #{run.9} parent=0 // pred_check_branch
    %185 = sbr.rel (0) target = $region25
  $region24: #{run.9} parent=0 // pred_region
    _
  $region25: #{run.9} parent=0 // pred_fallthru
    _
  // Predicated region
  $region26: #{run.9} parent=0 // pred_check
    _
  $region27: #{run.9} parent=0 // pred_check_branch
    %187 = sbr.rel (0) target = $region29
  $region28: #{run.9} parent=0 // pred_region
    _
  $region29: #{run.9} parent=0 // pred_fallthru
    _

// kernel: run.10
$region0: #{run.10}
  #allocation0 [shape = 'u32[]', space=smem, size = 0x4, offset = 0x4, fixed_abs, tag = 'smem constant byte address 0x4 - core index']
  #allocation1 [shape = 'u32[144,128]{1,0:T(1,128)}', space=vmem, size = 0x12000, scoped, tag = 'internal scratch']
  %s0 = inlined_call_operand.vmem [shape: f32[256,256], index: 0, kind: input, shape index: {}]
  %s1 = inlined_call_operand.vmem [shape: f32[1,256], index: 1, kind: output, shape index: {}]
  %s2 = sld [smem:[#allocation0]]
  $region18: #{run.10} parent=0
    _
  %s4 = ssub.s32 1, %s2
  %s5 = scalar_select 0, %s4, %s2
  // Predicated region
  $region2: #{run.10} parent=0 // pred_check
    _
  $region3: #{run.10} parent=0 // pred_check_branch
    %7 = sbr.rel (0) target = $region5
  $region4: #{run.10} parent=0 // pred_region
    _
  $region5: #{run.10} parent=0 // pred_fallthru
    _
  %p8 = scmp.eq.s32.totalorder 0, 0
  // Predicated region
  $region6: #{run.10} parent=0 // pred_check
    %p9 = pneg %p8
  $region7: #{run.10} parent=0 // pred_check_branch
    %11 = sbr.rel (%p9) target = $region9
  $region8: #{run.10} parent=0 // pred_region
    %v12 = vlaneseq
    %vm13 = vcmp.ge.s32.totalorder %v12, 0
    %vm14 = vcmp.lt.s32.totalorder %v12, 256
    %vm15 = vmand %vm13, %vm14
    %16 = vst.msk [vmem:[%s1] sm:$0x3] %vm15, 0.0
  $region9: #{run.10} parent=0 // pred_fallthru
    _
  %v17 = vld [vmem:[%s1] sm:$0x3]
  %v18 = vld [vmem:[%s0] sm:$0xff]
  %v19 = vld [vmem:[%s0 + $0x8] sm:$0xff]
  %v20 = vld [vmem:[%s0 + $0x10] sm:$0xff]
  %v21 = vld [vmem:[%s0 + $0x18] sm:$0xff]
  %v22 = vld [vmem:[%s0 + $0x20] sm:$0xff]
  %v23 = vld [vmem:[%s0 + $0x28] sm:$0xff]
  %v24 = vld [vmem:[%s0 + $0x30] sm:$0xff]
  %v25 = vld [vmem:[%s0 + $0x38] sm:$0xff]
  %v26 = vld [vmem:[%s0 + $0x40] sm:$0xff]
  %v27 = vld [vmem:[%s0 + $0x48] sm:$0xff]
  %v28 = vld [vmem:[%s0 + $0x50] sm:$0xff]
  %v29 = vld [vmem:[%s0 + $0x58] sm:$0xff]
  %v30 = vld [vmem:[%s0 + $0x60] sm:$0xff]
  %v31 = vld [vmem:[%s0 + $0x68] sm:$0xff]
  %v32 = vld [vmem:[%s0 + $0x70] sm:$0xff]
  %v33 = vld [vmem:[%s0 + $0x78] sm:$0xff]
  %v34 = vld [vmem:[%s0 + $0x80] sm:$0xff]
  %v35 = vld [vmem:[%s0 + $0x88] sm:$0xff]
  %v36 = vld [vmem:[%s0 + $0x90] sm:$0xff]
  %v37 = vld [vmem:[%s0 + $0x98] sm:$0xff]
  %v38 = vld [vmem:[%s0 + $0xa0] sm:$0xff]
  %v39 = vld [vmem:[%s0 + $0xa8] sm:$0xff]
  %v40 = vld [vmem:[%s0 + $0xb0] sm:$0xff]
  %v41 = vld [vmem:[%s0 + $0xb8] sm:$0xff]
  %v42 = vld [vmem:[%s0 + $0xc0] sm:$0xff]
  %v43 = vld [vmem:[%s0 + $0xc8] sm:$0xff]
  %v44 = vld [vmem:[%s0 + $0xd0] sm:$0xff]
  %v45 = vld [vmem:[%s0 + $0xd8] sm:$0xff]
  %v46 = vld [vmem:[%s0 + $0xe0] sm:$0xff]
  %v47 = vld [vmem:[%s0 + $0xe8] sm:$0xff]
  %v48 = vld [vmem:[%s0 + $0xf0] sm:$0xff]
  %v49 = vld [vmem:[%s0 + $0xf8] sm:$0xff]
  %v50 = vld [vmem:[%s0 + $0x100] sm:$0xff]
  %v51 = vld [vmem:[%s0 + $0x108] sm:$0xff]
  %v52 = vld [vmem:[%s0 + $0x110] sm:$0xff]
  %v53 = vld [vmem:[%s0 + $0x118] sm:$0xff]
  %v54 = vld [vmem:[%s0 + $0x120] sm:$0xff]
  %v55 = vld [vmem:[%s0 + $0x128] sm:$0xff]
  %v56 = vld [vmem:[%s0 + $0x130] sm:$0xff]
  %v57 = vld [vmem:[%s0 + $0x138] sm:$0xff]
  %v58 = vld [vmem:[%s0 + $0x140] sm:$0xff]
  %v59 = vld [vmem:[%s0 + $0x148] sm:$0xff]
  %v60 = vld [vmem:[%s0 + $0x150] sm:$0xff]
  %v61 = vld [vmem:[%s0 + $0x158] sm:$0xff]
  %v62 = vld [vmem:[%s0 + $0x160] sm:$0xff]
  %v63 = vld [vmem:[%s0 + $0x168] sm:$0xff]
  %v64 = vld [vmem:[%s0 + $0x170] sm:$0xff]
  %v65 = vld [vmem:[%s0 + $0x178] sm:$0xff]
  %v66 = vld [vmem:[%s0 + $0x180] sm:$0xff]
  %v67 = vld [vmem:[%s0 + $0x188] sm:$0xff]
  %v68 = vld [vmem:[%s0 + $0x190] sm:$0xff]
  %v69 = vld [vmem:[%s0 + $0x198] sm:$0xff]
  %v70 = vld [vmem:[%s0 + $0x1a0] sm:$0xff]
  %v71 = vld [vmem:[%s0 + $0x1a8] sm:$0xff]
  %v72 = vld [vmem:[%s0 + $0x1b0] sm:$0xff]
  %v73 = vld [vmem:[%s0 + $0x1b8] sm:$0xff]
  %v74 = vld [vmem:[%s0 + $0x1c0] sm:$0xff]
  %v75 = vld [vmem:[%s0 + $0x1c8] sm:$0xff]
  %v76 = vld [vmem:[%s0 + $0x1d0] sm:$0xff]
  %v77 = vld [vmem:[%s0 + $0x1d8] sm:$0xff]
  %v78 = vld [vmem:[%s0 + $0x1e0] sm:$0xff]
  %v79 = vld [vmem:[%s0 + $0x1e8] sm:$0xff]
  %v80 = vld [vmem:[%s0 + $0x1f0] sm:$0xff]
  %v81 = vld [vmem:[%s0 + $0x1f8] sm:$0xff]
  %v82 = vand.u32 2147483647, %v18
  %v83 = vand.u32 2147483647, %v19
  %v84 = vand.u32 2147483647, %v20
  %v85 = vand.u32 2147483647, %v21
  %v86 = vand.u32 2147483647, %v22
  %v87 = vand.u32 2147483647, %v23
  %v88 = vand.u32 2147483647, %v24
  %v89 = vand.u32 2147483647, %v25
  %v90 = vand.u32 2147483647, %v26
  %v91 = vand.u32 2147483647, %v27
  %v92 = vand.u32 2147483647, %v28
  %v93 = vand.u32 2147483647, %v29
  %v94 = vand.u32 2147483647, %v30
  %v95 = vand.u32 2147483647, %v31
  %v96 = vand.u32 2147483647, %v32
  %v97 = vand.u32 2147483647, %v33
  %v98 = vand.u32 2147483647, %v34
  %v99 = vand.u32 2147483647, %v35
  %v100 = vand.u32 2147483647, %v36
  %v101 = vand.u32 2147483647, %v37
  %v102 = vand.u32 2147483647, %v38
  %v103 = vand.u32 2147483647, %v39
  %v104 = vand.u32 2147483647, %v40
  %v105 = vand.u32 2147483647, %v41
  %v106 = vand.u32 2147483647, %v42
  %v107 = vand.u32 2147483647, %v43
  %v108 = vand.u32 2147483647, %v44
  %v109 = vand.u32 2147483647, %v45
  %v110 = vand.u32 2147483647, %v46
  %v111 = vand.u32 2147483647, %v47
  %v112 = vand.u32 2147483647, %v48
  %v113 = vand.u32 2147483647, %v49
  %v114 = vand.u32 2147483647, %v50
  %v115 = vand.u32 2147483647, %v51
  %v116 = vand.u32 2147483647, %v52
  %v117 = vand.u32 2147483647, %v53
  %v118 = vand.u32 2147483647, %v54
  %v119 = vand.u32 2147483647, %v55
  %v120 = vand.u32 2147483647, %v56
  %v121 = vand.u32 2147483647, %v57
  %v122 = vand.u32 2147483647, %v58
  %v123 = vand.u32 2147483647, %v59
  %v124 = vand.u32 2147483647, %v60
  %v125 = vand.u32 2147483647, %v61
  %v126 = vand.u32 2147483647, %v62
  %v127 = vand.u32 2147483647, %v63
  %v128 = vand.u32 2147483647, %v64
  %v129 = vand.u32 2147483647, %v65
  %v130 = vand.u32 2147483647, %v66
  %v131 = vand.u32 2147483647, %v67
  %v132 = vand.u32 2147483647, %v68
  %v133 = vand.u32 2147483647, %v69
  %v134 = vand.u32 2147483647, %v70
  %v135 = vand.u32 2147483647, %v71
  %v136 = vand.u32 2147483647, %v72
  %v137 = vand.u32 2147483647, %v73
  %v138 = vand.u32 2147483647, %v74
  %v139 = vand.u32 2147483647, %v75
  %v140 = vand.u32 2147483647, %v76
  %v141 = vand.u32 2147483647, %v77
  %v142 = vand.u32 2147483647, %v78
  %v143 = vand.u32 2147483647, %v79
  %v144 = vand.u32 2147483647, %v80
  %v145 = vand.u32 2147483647, %v81
  %v146 = vadd.f32 %v82, %v84
  %v147 = vadd.f32 %v146, %v86
  %v148 = vadd.f32 %v147, %v88
  %v149 = vadd.f32 %v148, %v90
  %v150 = vadd.f32 %v149, %v92
  %v151 = vadd.f32 %v150, %v94
  %v152 = vadd.f32 %v151, %v96
  %v153 = vadd.f32 %v152, %v98
  %v154 = vadd.f32 %v153, %v100
  %v155 = vadd.f32 %v154, %v102
  %v156 = vadd.f32 %v155, %v104
  %v157 = vadd.f32 %v156, %v106
  %v158 = vadd.f32 %v157, %v108
  %v159 = vadd.f32 %v158, %v110
  %v160 = vadd.f32 %v159, %v112
  %v161 = vadd.f32 %v160, %v114
  %v162 = vadd.f32 %v161, %v116
  %v163 = vadd.f32 %v162, %v118
  %v164 = vadd.f32 %v163, %v120
  %v165 = vadd.f32 %v164, %v122
  %v166 = vadd.f32 %v165, %v124
  %v167 = vadd.f32 %v166, %v126
  %v168 = vadd.f32 %v167, %v128
  %v169 = vadd.f32 %v168, %v130
  %v170 = vadd.f32 %v169, %v132
  %v171 = vadd.f32 %v170, %v134
  %v172 = vadd.f32 %v171, %v136
  %v173 = vadd.f32 %v172, %v138
  %v174 = vadd.f32 %v173, %v140
  %v175 = vadd.f32 %v174, %v142
  %v176 = vadd.f32 %v175, %v144
  %v177 = vrot.slane %v176, 4
  %v178 = vadd.f32 %v176, %v177
  %v179 = vrot.slane %v178, 2
  %v180 = vadd.f32 %v178, %v179
  %v181 = vrot.slane %v180, 1
  %v182 = vadd.f32 %v180, %v181
  %v183 = vadd.f32 %v83, %v85
  %v184 = vadd.f32 %v183, %v87
  %v185 = vadd.f32 %v184, %v89
  %v186 = vadd.f32 %v185, %v91
  %v187 = vadd.f32 %v186, %v93
  %v188 = vadd.f32 %v187, %v95
  %v189 = vadd.f32 %v188, %v97
  %v190 = vadd.f32 %v189, %v99
  %v191 = vadd.f32 %v190, %v101
  %v192 = vadd.f32 %v191, %v103
  %v193 = vadd.f32 %v192, %v105
  %v194 = vadd.f32 %v193, %v107
  %v195 = vadd.f32 %v194, %v109
  %v196 = vadd.f32 %v195, %v111
  %v197 = vadd.f32 %v196, %v113
  %v198 = vadd.f32 %v197, %v115
  %v199 = vadd.f32 %v198, %v117
  %v200 = vadd.f32 %v199, %v119
  %v201 = vadd.f32 %v200, %v121
  %v202 = vadd.f32 %v201, %v123
  %v203 = vadd.f32 %v202, %v125
  %v204 = vadd.f32 %v203, %v127
  %v205 = vadd.f32 %v204, %v129
  %v206 = vadd.f32 %v205, %v131
  %v207 = vadd.f32 %v206, %v133
  %v208 = vadd.f32 %v207, %v135
  %v209 = vadd.f32 %v208, %v137
  %v210 = vadd.f32 %v209, %v139
  %v211 = vadd.f32 %v210, %v141
  %v212 = vadd.f32 %v211, %v143
  %v213 = vadd.f32 %v212, %v145
  %v214 = vrot.slane %v213, 4
  %v215 = vadd.f32 %v213, %v214
  %v216 = vrot.slane %v215, 2
  %v217 = vadd.f32 %v215, %v216
  %v218 = vrot.slane %v217, 1
  %v219 = vadd.f32 %v217, %v218
  %v222 = vcombine.low %v182, %v219
  %v224 = vunpack.c.l.s4 1966171168
  %v225 = vunpack.c.0.s8 %v224
  %v226 = vlaneseq
  %v227 = vshrl.u32 %v226, 7
  %v228 = vsub.s32 %v225, %v227
  %v229 = vrot.slane %v222, %v228
  %v231 = vunpack.c.l.s4 1966171168
  %v232 = vunpack.c.0.s8 %v231
  %v233 = vlaneseq
  %v234 = vshrl.u32 %v233, 7
  %v235 = vsub.s32 %v232, %v234
  %v236 = vrot.slane %v229, %v235
  %v238 = vadd.f32 %v17, %v236
  %v239 = vlaneseq
  %vm240 = vcmp.ge.s32.totalorder %v239, 0
  %vm241 = vcmp.lt.s32.totalorder %v239, 256
  %vm242 = vmand %vm240, %vm241
  %243 = vst.msk [vmem:[%s1] sm:$0x3] %vm242, %v238
  // Predicated region
  $region10: #{run.10} parent=0 // pred_check
    _
  $region11: #{run.10} parent=0 // pred_check_branch
    %245 = sbr.rel (0) target = $region13
  $region12: #{run.10} parent=0 // pred_region
    _
  $region13: #{run.10} parent=0 // pred_fallthru
    _
  // Predicated region
  $region14: #{run.10} parent=0 // pred_check
    _
  $region15: #{run.10} parent=0 // pred_check_branch
    %247 = sbr.rel (0) target = $region17
  $region16: #{run.10} parent=0 // pred_region
    _
  $region17: #{run.10} parent=0 // pred_fallthru
    _

// kernel: run.8
$region0: #{run.8}
  #allocation0 [shape = 'u32[]', space=smem, size = 0x4, offset = 0x4, fixed_abs, tag = 'smem constant byte address 0x4 - core index']
  #allocation1 [shape = 'u32[144,128]{1,0:T(1,128)}', space=vmem, size = 0x12000, scoped, tag = 'internal scratch']
  #allocation2 [shape = 'f32[256,256]{1,0:T(8,128)}', space=vmem, size = 0x40000, scoped, tag = 'scratch operand']
  %s0 = inlined_call_operand.vmem [shape: f32[256,256], index: 0, kind: input, shape index: {}]
  %s1 = inlined_call_operand.vmem [shape: f32[256,256], index: 1, kind: input, shape index: {}]
  %s2 = inlined_call_operand.vmem [shape: f32[256,256], index: 2, kind: output, shape index: {}]
  %s3 = sld [smem:[#allocation0]]
  $region26: #{run.8} parent=0
    _
  %s5 = ssub.s32 1, %s3
  %s6 = scalar_select 0, %s5, %s3
  // Predicated region
  $region2: #{run.8} parent=0 // pred_check
    _
  $region3: #{run.8} parent=0 // pred_check_branch
    %8 = sbr.rel (0) target = $region5
  $region4: #{run.8} parent=0 // pred_region
    _
  $region5: #{run.8} parent=0 // pred_fallthru
    _
  // Predicated region
  $region6: #{run.8} parent=0 // pred_check
    _
  $region7: #{run.8} parent=0 // pred_check_branch
    %10 = sbr.rel (0) target = $region9
  $region8: #{run.8} parent=0 // pred_region
    _
  $region9: #{run.8} parent=0 // pred_fallthru
    _
  %p11 = scmp.eq.s32.totalorder 0, 0
  // Predicated region
  $region10: #{run.8} parent=0 // pred_check
    %p12 = pneg %p11
  $region11: #{run.8} parent=0 // pred_check_branch
    %14 = sbr.rel (%p12) target = $region13
  $region12: #{run.8} parent=0 // pred_region
    %15 = vst [vmem:[#allocation2] sm:$0xff] 0.0
    %16 = vst [vmem:[#allocation2 + $0x8] sm:$0xff] 0.0
    %17 = vst [vmem:[#allocation2 + $0x10] sm:$0xff] 0.0
    %18 = vst [vmem:[#allocation2 + $0x18] sm:$0xff] 0.0
    %19 = vst [vmem:[#allocation2 + $0x20] sm:$0xff] 0.0
    %20 = vst [vmem:[#allocation2 + $0x28] sm:$0xff] 0.0
    %21 = vst [vmem:[#allocation2 + $0x30] sm:$0xff] 0.0
    %22 = vst [vmem:[#allocation2 + $0x38] sm:$0xff] 0.0
    %23 = vst [vmem:[#allocation2 + $0x40] sm:$0xff] 0.0
    %24 = vst [vmem:[#allocation2 + $0x48] sm:$0xff] 0.0
    %25 = vst [vmem:[#allocation2 + $0x50] sm:$0xff] 0.0
    %26 = vst [vmem:[#allocation2 + $0x58] sm:$0xff] 0.0
    %27 = vst [vmem:[#allocation2 + $0x60] sm:$0xff] 0.0
    %28 = vst [vmem:[#allocation2 + $0x68] sm:$0xff] 0.0
    %29 = vst [vmem:[#allocation2 + $0x70] sm:$0xff] 0.0
    %30 = vst [vmem:[#allocation2 + $0x78] sm:$0xff] 0.0
    %31 = vst [vmem:[#allocation2 + $0x80] sm:$0xff] 0.0
    %32 = vst [vmem:[#allocation2 + $0x88] sm:$0xff] 0.0
    %33 = vst [vmem:[#allocation2 + $0x90] sm:$0xff] 0.0
    %34 = vst [vmem:[#allocation2 + $0x98] sm:$0xff] 0.0
    %35 = vst [vmem:[#allocation2 + $0xa0] sm:$0xff] 0.0
    %36 = vst [vmem:[#allocation2 + $0xa8] sm:$0xff] 0.0
    %37 = vst [vmem:[#allocation2 + $0xb0] sm:$0xff] 0.0
    %38 = vst [vmem:[#allocation2 + $0xb8] sm:$0xff] 0.0
    %39 = vst [vmem:[#allocation2 + $0xc0] sm:$0xff] 0.0
    %40 = vst [vmem:[#allocation2 + $0xc8] sm:$0xff] 0.0
    %41 = vst [vmem:[#allocation2 + $0xd0] sm:$0xff] 0.0
    %42 = vst [vmem:[#allocation2 + $0xd8] sm:$0xff] 0.0
    %43 = vst [vmem:[#allocation2 + $0xe0] sm:$0xff] 0.0
    %44 = vst [vmem:[#allocation2 + $0xe8] sm:$0xff] 0.0
    %45 = vst [vmem:[#allocation2 + $0xf0] sm:$0xff] 0.0
    %46 = vst [vmem:[#allocation2 + $0xf8] sm:$0xff] 0.0
    %47 = vst [vmem:[#allocation2 + $0x100] sm:$0xff] 0.0
    %48 = vst [vmem:[#allocation2 + $0x108] sm:$0xff] 0.0
    %49 = vst [vmem:[#allocation2 + $0x110] sm:$0xff] 0.0
    %50 = vst [vmem:[#allocation2 + $0x118] sm:$0xff] 0.0
    %51 = vst [vmem:[#allocation2 + $0x120] sm:$0xff] 0.0
    %52 = vst [vmem:[#allocation2 + $0x128] sm:$0xff] 0.0
    %53 = vst [vmem:[#allocation2 + $0x130] sm:$0xff] 0.0
    %54 = vst [vmem:[#allocation2 + $0x138] sm:$0xff] 0.0
    %55 = vst [vmem:[#allocation2 + $0x140] sm:$0xff] 0.0
    %56 = vst [vmem:[#allocation2 + $0x148] sm:$0xff] 0.0
    %57 = vst [vmem:[#allocation2 + $0x150] sm:$0xff] 0.0
    %58 = vst [vmem:[#allocation2 + $0x158] sm:$0xff] 0.0
    %59 = vst [vmem:[#allocation2 + $0x160] sm:$0xff] 0.0
    %60 = vst [vmem:[#allocation2 + $0x168] sm:$0xff] 0.0
    %61 = vst [vmem:[#allocation2 + $0x170] sm:$0xff] 0.0
    %62 = vst [vmem:[#allocation2 + $0x178] sm:$0xff] 0.0
    %63 = vst [vmem:[#allocation2 + $0x180] sm:$0xff] 0.0
    %64 = vst [vmem:[#allocation2 + $0x188] sm:$0xff] 0.0
    %65 = vst [vmem:[#allocation2 + $0x190] sm:$0xff] 0.0
    %66 = vst [vmem:[#allocation2 + $0x198] sm:$0xff] 0.0
    %67 = vst [vmem:[#allocation2 + $0x1a0] sm:$0xff] 0.0
    %68 = vst [vmem:[#allocation2 + $0x1a8] sm:$0xff] 0.0
    %69 = vst [vmem:[#allocation2 + $0x1b0] sm:$0xff] 0.0
    %70 = vst [vmem:[#allocation2 + $0x1b8] sm:$0xff] 0.0
    %71 = vst [vmem:[#allocation2 + $0x1c0] sm:$0xff] 0.0
    %72 = vst [vmem:[#allocation2 + $0x1c8] sm:$0xff] 0.0
    %73 = vst [vmem:[#allocation2 + $0x1d0] sm:$0xff] 0.0
    %74 = vst [vmem:[#allocation2 + $0x1d8] sm:$0xff] 0.0
    %75 = vst [vmem:[#allocation2 + $0x1e0] sm:$0xff] 0.0
    %76 = vst [vmem:[#allocation2 + $0x1e8] sm:$0xff] 0.0
    %77 = vst [vmem:[#allocation2 + $0x1f0] sm:$0xff] 0.0
    %78 = vst [vmem:[#allocation2 + $0x1f8] sm:$0xff] 0.0
  $region13: #{run.8} parent=0 // pred_fallthru
    _
  %v79 = vld [vmem:[#allocation2] sm:$0xff]
  %v80 = vld [vmem:[#allocation2 + $0x8] sm:$0xff]
  %v81 = vld [vmem:[#allocation2 + $0x10] sm:$0xff]
  %v82 = vld [vmem:[#allocation2 + $0x18] sm:$0xff]
  %v83 = vld [vmem:[#allocation2 + $0x20] sm:$0xff]
  %v84 = vld [vmem:[#allocation2 + $0x28] sm:$0xff]
  %v85 = vld [vmem:[#allocation2 + $0x30] sm:$0xff]
  %v86 = vld [vmem:[#allocation2 + $0x38] sm:$0xff]
  %v87 = vld [vmem:[#allocation2 + $0x40] sm:$0xff]
  %v88 = vld [vmem:[#allocation2 + $0x48] sm:$0xff]
  %v89 = vld [vmem:[#allocation2 + $0x50] sm:$0xff]
  %v90 = vld [vmem:[#allocation2 + $0x58] sm:$0xff]
  %v91 = vld [vmem:[#allocation2 + $0x60] sm:$0xff]
  %v92 = vld [vmem:[#allocation2 + $0x68] sm:$0xff]
  %v93 = vld [vmem:[#allocation2 + $0x70] sm:$0xff]
  %v94 = vld [vmem:[#allocation2 + $0x78] sm:$0xff]
  %v95 = vld [vmem:[#allocation2 + $0x80] sm:$0xff]
  %v96 = vld [vmem:[#allocation2 + $0x88] sm:$0xff]
  %v97 = vld [vmem:[#allocation2 + $0x90] sm:$0xff]
  %v98 = vld [vmem:[#allocation2 + $0x98] sm:$0xff]
  %v99 = vld [vmem:[#allocation2 + $0xa0] sm:$0xff]
  %v100 = vld [vmem:[#allocation2 + $0xa8] sm:$0xff]
  %v101 = vld [vmem:[#allocation2 + $0xb0] sm:$0xff]
  %v102 = vld [vmem:[#allocation2 + $0xb8] sm:$0xff]
  %v103 = vld [vmem:[#allocation2 + $0xc0] sm:$0xff]
  %v104 = vld [vmem:[#allocation2 + $0xc8] sm:$0xff]
  %v105 = vld [vmem:[#allocation2 + $0xd0] sm:$0xff]
  %v106 = vld [vmem:[#allocation2 + $0xd8] sm:$0xff]
  %v107 = vld [vmem:[#allocation2 + $0xe0] sm:$0xff]
  %v108 = vld [vmem:[#allocation2 + $0xe8] sm:$0xff]
  %v109 = vld [vmem:[#allocation2 + $0xf0] sm:$0xff]
  %v110 = vld [vmem:[#allocation2 + $0xf8] sm:$0xff]
  %v111 = vld [vmem:[#allocation2 + $0x100] sm:$0xff]
  %v112 = vld [vmem:[#allocation2 + $0x108] sm:$0xff]
  %v113 = vld [vmem:[#allocation2 + $0x110] sm:$0xff]
  %v114 = vld [vmem:[#allocation2 + $0x118] sm:$0xff]
  %v115 = vld [vmem:[#allocation2 + $0x120] sm:$0xff]
  %v116 = vld [vmem:[#allocation2 + $0x128] sm:$0xff]
  %v117 = vld [vmem:[#allocation2 + $0x130] sm:$0xff]
  %v118 = vld [vmem:[#allocation2 + $0x138] sm:$0xff]
  %v119 = vld [vmem:[#allocation2 + $0x140] sm:$0xff]
  %v120 = vld [vmem:[#allocation2 + $0x148] sm:$0xff]
  %v121 = vld [vmem:[#allocation2 + $0x150] sm:$0xff]
  %v122 = vld [vmem:[#allocation2 + $0x158] sm:$0xff]
  %v123 = vld [vmem:[#allocation2 + $0x160] sm:$0xff]
  %v124 = vld [vmem:[#allocation2 + $0x168] sm:$0xff]
  %v125 = vld [vmem:[#allocation2 + $0x170] sm:$0xff]
  %v126 = vld [vmem:[#allocation2 + $0x178] sm:$0xff]
  %v127 = vld [vmem:[#allocation2 + $0x180] sm:$0xff]
  %v128 = vld [vmem:[#allocation2 + $0x188] sm:$0xff]
  %v129 = vld [vmem:[#allocation2 + $0x190] sm:$0xff]
  %v130 = vld [vmem:[#allocation2 + $0x198] sm:$0xff]
  %v131 = vld [vmem:[#allocation2 + $0x1a0] sm:$0xff]
  %v132 = vld [vmem:[#allocation2 + $0x1a8] sm:$0xff]
  %v133 = vld [vmem:[#allocation2 + $0x1b0] sm:$0xff]
  %v134 = vld [vmem:[#allocation2 + $0x1b8] sm:$0xff]
  %v135 = vld [vmem:[#allocation2 + $0x1c0] sm:$0xff]
  %v136 = vld [vmem:[#allocation2 + $0x1c8] sm:$0xff]
  %v137 = vld [vmem:[#allocation2 + $0x1d0] sm:$0xff]
  %v138 = vld [vmem:[#allocation2 + $0x1d8] sm:$0xff]
  %v139 = vld [vmem:[#allocation2 + $0x1e0] sm:$0xff]
  %v140 = vld [vmem:[#allocation2 + $0x1e8] sm:$0xff]
  %v141 = vld [vmem:[#allocation2 + $0x1f0] sm:$0xff]
  %v142 = vld [vmem:[#allocation2 + $0x1f8] sm:$0xff]
  %v143 = vld [vmem:[%s0] sm:$0xff]
  %v144 = vld [vmem:[%s0 + $0x8] sm:$0xff]
  %v145 = vld [vmem:[%s0 + $0x10] sm:$0xff]
  %v146 = vld [vmem:[%s0 + $0x18] sm:$0xff]
  %v147 = vld [vmem:[%s0 + $0x20] sm:$0xff]
  %v148 = vld [vmem:[%s0 + $0x28] sm:$0xff]
  %v149 = vld [vmem:[%s0 + $0x30] sm:$0xff]
  %v150 = vld [vmem:[%s0 + $0x38] sm:$0xff]
  %v151 = vld [vmem:[%s0 + $0x40] sm:$0xff]
  %v152 = vld [vmem:[%s0 + $0x48] sm:$0xff]
  %v153 = vld [vmem:[%s0 + $0x50] sm:$0xff]
  %v154 = vld [vmem:[%s0 + $0x58] sm:$0xff]
  %v155 = vld [vmem:[%s0 + $0x60] sm:$0xff]
  %v156 = vld [vmem:[%s0 + $0x68] sm:$0xff]
  %v157 = vld [vmem:[%s0 + $0x70] sm:$0xff]
  %v158 = vld [vmem:[%s0 + $0x78] sm:$0xff]
  %v159 = vld [vmem:[%s0 + $0x80] sm:$0xff]
  %v160 = vld [vmem:[%s0 + $0x88] sm:$0xff]
  %v161 = vld [vmem:[%s0 + $0x90] sm:$0xff]
  %v162 = vld [vmem:[%s0 + $0x98] sm:$0xff]
  %v163 = vld [vmem:[%s0 + $0xa0] sm:$0xff]
  %v164 = vld [vmem:[%s0 + $0xa8] sm:$0xff]
  %v165 = vld [vmem:[%s0 + $0xb0] sm:$0xff]
  %v166 = vld [vmem:[%s0 + $0xb8] sm:$0xff]
  %v167 = vld [vmem:[%s0 + $0xc0] sm:$0xff]
  %v168 = vld [vmem:[%s0 + $0xc8] sm:$0xff]
  %v169 = vld [vmem:[%s0 + $0xd0] sm:$0xff]
  %v170 = vld [vmem:[%s0 + $0xd8] sm:$0xff]
  %v171 = vld [vmem:[%s0 + $0xe0] sm:$0xff]
  %v172 = vld [vmem:[%s0 + $0xe8] sm:$0xff]
  %v173 = vld [vmem:[%s0 + $0xf0] sm:$0xff]
  %v174 = vld [vmem:[%s0 + $0xf8] sm:$0xff]
  %v175 = vld [vmem:[%s0 + $0x100] sm:$0xff]
  %v176 = vld [vmem:[%s0 + $0x108] sm:$0xff]
  %v177 = vld [vmem:[%s0 + $0x110] sm:$0xff]
  %v178 = vld [vmem:[%s0 + $0x118] sm:$0xff]
  %v179 = vld [vmem:[%s0 + $0x120] sm:$0xff]
  %v180 = vld [vmem:[%s0 + $0x128] sm:$0xff]
  %v181 = vld [vmem:[%s0 + $0x130] sm:$0xff]
  %v182 = vld [vmem:[%s0 + $0x138] sm:$0xff]
  %v183 = vld [vmem:[%s0 + $0x140] sm:$0xff]
  %v184 = vld [vmem:[%s0 + $0x148] sm:$0xff]
  %v185 = vld [vmem:[%s0 + $0x150] sm:$0xff]
  %v186 = vld [vmem:[%s0 + $0x158] sm:$0xff]
  %v187 = vld [vmem:[%s0 + $0x160] sm:$0xff]
  %v188 = vld [vmem:[%s0 + $0x168] sm:$0xff]
  %v189 = vld [vmem:[%s0 + $0x170] sm:$0xff]
  %v190 = vld [vmem:[%s0 + $0x178] sm:$0xff]
  %v191 = vld [vmem:[%s0 + $0x180] sm:$0xff]
  %v192 = vld [vmem:[%s0 + $0x188] sm:$0xff]
  %v193 = vld [vmem:[%s0 + $0x190] sm:$0xff]
  %v194 = vld [vmem:[%s0 + $0x198] sm:$0xff]
  %v195 = vld [vmem:[%s0 + $0x1a0] sm:$0xff]
  %v196 = vld [vmem:[%s0 + $0x1a8] sm:$0xff]
  %v197 = vld [vmem:[%s0 + $0x1b0] sm:$0xff]
  %v198 = vld [vmem:[%s0 + $0x1b8] sm:$0xff]
  %v199 = vld [vmem:[%s0 + $0x1c0] sm:$0xff]
  %v200 = vld [vmem:[%s0 + $0x1c8] sm:$0xff]
  %v201 = vld [vmem:[%s0 + $0x1d0] sm:$0xff]
  %v202 = vld [vmem:[%s0 + $0x1d8] sm:$0xff]
  %v203 = vld [vmem:[%s0 + $0x1e0] sm:$0xff]
  %v204 = vld [vmem:[%s0 + $0x1e8] sm:$0xff]
  %v205 = vld [vmem:[%s0 + $0x1f0] sm:$0xff]
  %v206 = vld [vmem:[%s0 + $0x1f8] sm:$0xff]
  %v207 = vld [vmem:[%s1] sm:$0xff]
  %v208 = vld [vmem:[%s1 + $0x8] sm:$0xff]
  %v209 = vld [vmem:[%s1 + $0x10] sm:$0xff]
  %v210 = vld [vmem:[%s1 + $0x18] sm:$0xff]
  %v211 = vld [vmem:[%s1 + $0x20] sm:$0xff]
  %v212 = vld [vmem:[%s1 + $0x28] sm:$0xff]
  %v213 = vld [vmem:[%s1 + $0x30] sm:$0xff]
  %v214 = vld [vmem:[%s1 + $0x38] sm:$0xff]
  %v215 = vld [vmem:[%s1 + $0x40] sm:$0xff]
  %v216 = vld [vmem:[%s1 + $0x48] sm:$0xff]
  %v217 = vld [vmem:[%s1 + $0x50] sm:$0xff]
  %v218 = vld [vmem:[%s1 + $0x58] sm:$0xff]
  %v219 = vld [vmem:[%s1 + $0x60] sm:$0xff]
  %v220 = vld [vmem:[%s1 + $0x68] sm:$0xff]
  %v221 = vld [vmem:[%s1 + $0x70] sm:$0xff]
  %v222 = vld [vmem:[%s1 + $0x78] sm:$0xff]
  %v223 = vld [vmem:[%s1 + $0x80] sm:$0xff]
  %v224 = vld [vmem:[%s1 + $0x88] sm:$0xff]
  %v225 = vld [vmem:[%s1 + $0x90] sm:$0xff]
  %v226 = vld [vmem:[%s1 + $0x98] sm:$0xff]
  %v227 = vld [vmem:[%s1 + $0xa0] sm:$0xff]
  %v228 = vld [vmem:[%s1 + $0xa8] sm:$0xff]
  %v229 = vld [vmem:[%s1 + $0xb0] sm:$0xff]
  %v230 = vld [vmem:[%s1 + $0xb8] sm:$0xff]
  %v231 = vld [vmem:[%s1 + $0xc0] sm:$0xff]
  %v232 = vld [vmem:[%s1 + $0xc8] sm:$0xff]
  %v233 = vld [vmem:[%s1 + $0xd0] sm:$0xff]
  %v234 = vld [vmem:[%s1 + $0xd8] sm:$0xff]
  %v235 = vld [vmem:[%s1 + $0xe0] sm:$0xff]
  %v236 = vld [vmem:[%s1 + $0xe8] sm:$0xff]
  %v237 = vld [vmem:[%s1 + $0xf0] sm:$0xff]
  %v238 = vld [vmem:[%s1 + $0xf8] sm:$0xff]
  %v239 = vld [vmem:[%s1 + $0x100] sm:$0xff]
  %v240 = vld [vmem:[%s1 + $0x108] sm:$0xff]
  %v241 = vld [vmem:[%s1 + $0x110] sm:$0xff]
  %v242 = vld [vmem:[%s1 + $0x118] sm:$0xff]
  %v243 = vld [vmem:[%s1 + $0x120] sm:$0xff]
  %v244 = vld [vmem:[%s1 + $0x128] sm:$0xff]
  %v245 = vld [vmem:[%s1 + $0x130] sm:$0xff]
  %v246 = vld [vmem:[%s1 + $0x138] sm:$0xff]
  %v247 = vld [vmem:[%s1 + $0x140] sm:$0xff]
  %v248 = vld [vmem:[%s1 + $0x148] sm:$0xff]
  %v249 = vld [vmem:[%s1 + $0x150] sm:$0xff]
  %v250 = vld [vmem:[%s1 + $0x158] sm:$0xff]
  %v251 = vld [vmem:[%s1 + $0x160] sm:$0xff]
  %v252 = vld [vmem:[%s1 + $0x168] sm:$0xff]
  %v253 = vld [vmem:[%s1 + $0x170] sm:$0xff]
  %v254 = vld [vmem:[%s1 + $0x178] sm:$0xff]
  %v255 = vld [vmem:[%s1 + $0x180] sm:$0xff]
  %v256 = vld [vmem:[%s1 + $0x188] sm:$0xff]
  %v257 = vld [vmem:[%s1 + $0x190] sm:$0xff]
  %v258 = vld [vmem:[%s1 + $0x198] sm:$0xff]
  %v259 = vld [vmem:[%s1 + $0x1a0] sm:$0xff]
  %v260 = vld [vmem:[%s1 + $0x1a8] sm:$0xff]
  %v261 = vld [vmem:[%s1 + $0x1b0] sm:$0xff]
  %v262 = vld [vmem:[%s1 + $0x1b8] sm:$0xff]
  %v263 = vld [vmem:[%s1 + $0x1c0] sm:$0xff]
  %v264 = vld [vmem:[%s1 + $0x1c8] sm:$0xff]
  %v265 = vld [vmem:[%s1 + $0x1d0] sm:$0xff]
  %v266 = vld [vmem:[%s1 + $0x1d8] sm:$0xff]
  %v267 = vld [vmem:[%s1 + $0x1e0] sm:$0xff]
  %v268 = vld [vmem:[%s1 + $0x1e8] sm:$0xff]
  %v269 = vld [vmem:[%s1 + $0x1f0] sm:$0xff]
  %v270 = vld [vmem:[%s1 + $0x1f8] sm:$0xff]
  %271 = vmatprep.subr.mxu0 %v238
  %272 = vmatpush1.msra.mxu0 %v237
  %273 = vmatprep.subr.mxu0 %v236
  %274 = vmatpush1.msra.mxu0 %v235
  %275 = vmatprep.subr.mxu0 %v234
  %276 = vmatpush1.msra.mxu0 %v233
  %277 = vmatprep.subr.mxu0 %v232
  %278 = vmatpush1.msra.mxu0 %v231
  %279 = vmatprep.subr.mxu0 %v230
  %280 = vmatpush1.msra.mxu0 %v229
  %281 = vmatprep.subr.mxu0 %v228
  %282 = vmatpush1.msra.mxu0 %v227
  %283 = vmatprep.subr.mxu0 %v226
  %284 = vmatpush1.msra.mxu0 %v225
  %285 = vmatprep.subr.mxu0 %v224
  %286 = vmatpush1.msra.mxu0 %v223
  %287 = vmatprep.subr.mxu0 %v222
  %288 = vmatpush1.msra.mxu0 %v221
  %289 = vmatprep.subr.mxu0 %v220
  %290 = vmatpush1.msra.mxu0 %v219
  %291 = vmatprep.subr.mxu0 %v218
  %292 = vmatpush1.msra.mxu0 %v217
  %293 = vmatprep.subr.mxu0 %v216
  %294 = vmatpush1.msra.mxu0 %v215
  %295 = vmatprep.subr.mxu0 %v214
  %296 = vmatpush1.msra.mxu0 %v213
  %297 = vmatprep.subr.mxu0 %v212
  %298 = vmatpush1.msra.mxu0 %v211
  %299 = vmatprep.subr.mxu0 %v210
  %300 = vmatpush1.msra.mxu0 %v209
  %301 = vmatprep.subr.mxu0 %v208
  %302 = vmatpush1.msra.mxu0 %v207
  %303 = vmatprep.subr.mxu0 %v270
  %304 = vmatpush2.msra.mxu0 %v269
  %305 = vmatprep.subr.mxu0 %v268
  %306 = vmatpush2.msra.mxu0 %v267
  %307 = vmatprep.subr.mxu0 %v266
  %308 = vmatpush2.msra.mxu0 %v265
  %309 = vmatprep.subr.mxu0 %v264
  %310 = vmatpush2.msra.mxu0 %v263
  %311 = vmatprep.subr.mxu0 %v262
  %312 = vmatpush2.msra.mxu0 %v261
  %313 = vmatprep.subr.mxu0 %v260
  %314 = vmatpush2.msra.mxu0 %v259
  %315 = vmatprep.subr.mxu0 %v258
  %316 = vmatpush2.msra.mxu0 %v257
  %317 = vmatprep.subr.mxu0 %v256
  %318 = vmatpush2.msra.mxu0 %v255
  %319 = vmatprep.subr.mxu0 %v254
  %320 = vmatpush2.msra.mxu0 %v253
  %321 = vmatprep.subr.mxu0 %v252
  %322 = vmatpush2.msra.mxu0 %v251
  %323 = vmatprep.subr.mxu0 %v250
  %324 = vmatpush2.msra.mxu0 %v249
  %325 = vmatprep.subr.mxu0 %v248
  %326 = vmatpush2.msra.mxu0 %v247
  %327 = vmatprep.subr.mxu0 %v246
  %328 = vmatpush2.msra.mxu0 %v245
  %329 = vmatprep.subr.mxu0 %v244
  %330 = vmatpush2.msra.mxu0 %v243
  %331 = vmatprep.subr.mxu0 %v242
  %332 = vmatpush2.msra.mxu0 %v241
  %333 = vmatprep.subr.mxu0 %v240
  %334 = vmatpush2.msra.mxu0 %v239
  %335 = vmatprep.mubr.f32.mxu0 %v144
  %336 = vmatmul.mubr.f32.gmra.mxu0 %v143
  %v337 = vpop.f32.mrf.mxu0
  %v338 = vadd.f32 0.0, %v337
  %v339 = vpop.f32.mrf.mxu0
  %v340 = vadd.f32 0.0, %v339
  %341 = vmatprep.mubr.f32.mxu0 %v146
  %342 = vmatmul.mubr.f32.gmra.mxu0 %v145
  %v343 = vpop.f32.mrf.mxu0
  %v344 = vadd.f32 0.0, %v343
  %v345 = vpop.f32.mrf.mxu0
  %v346 = vadd.f32 0.0, %v345
  %347 = vmatprep.mubr.f32.mxu0 %v148
  %348 = vmatmul.mubr.f32.gmra.mxu0 %v147
  %v349 = vpop.f32.mrf.mxu0
  %v350 = vadd.f32 0.0, %v349
  %v351 = vpop.f32.mrf.mxu0
  %v352 = vadd.f32 0.0, %v351
  %353 = vmatprep.mubr.f32.mxu0 %v150
  %354 = vmatmul.mubr.f32.gmra.mxu0 %v149
  %v355 = vpop.f32.mrf.mxu0
  %v356 = vadd.f32 0.0, %v355
  %v357 = vpop.f32.mrf.mxu0
  %v358 = vadd.f32 0.0, %v357
  %359 = vmatprep.mubr.f32.mxu0 %v152
  %360 = vmatmul.mubr.f32.gmra.mxu0 %v151
  %v361 = vpop.f32.mrf.mxu0
  %v362 = vadd.f32 0.0, %v361
  %v363 = vpop.f32.mrf.mxu0
  %v364 = vadd.f32 0.0, %v363
  %365 = vmatprep.mubr.f32.mxu0 %v154
  %366 = vmatmul.mubr.f32.gmra.mxu0 %v153
  %v367 = vpop.f32.mrf.mxu0
  %v368 = vadd.f32 0.0, %v367
  %v369 = vpop.f32.mrf.mxu0
  %v370 = vadd.f32 0.0, %v369
  %371 = vmatprep.mubr.f32.mxu0 %v156
  %372 = vmatmul.mubr.f32.gmra.mxu0 %v155
  %v373 = vpop.f32.mrf.mxu0
  %v374 = vadd.f32 0.0, %v373
  %v375 = vpop.f32.mrf.mxu0
  %v376 = vadd.f32 0.0, %v375
  %377 = vmatprep.mubr.f32.mxu0 %v158
  %378 = vmatmul.mubr.f32.gmra.mxu0 %v157
  %v379 = vpop.f32.mrf.mxu0
  %v380 = vadd.f32 0.0, %v379
  %v381 = vpop.f32.mrf.mxu0
  %v382 = vadd.f32 0.0, %v381
  %383 = vmatprep.mubr.f32.mxu0 %v160
  %384 = vmatmul.mubr.f32.gmra.mxu0 %v159
  %v385 = vpop.f32.mrf.mxu0
  %v386 = vadd.f32 0.0, %v385
  %v387 = vpop.f32.mrf.mxu0
  %v388 = vadd.f32 0.0, %v387
  %389 = vmatprep.mubr.f32.mxu0 %v162
  %390 = vmatmul.mubr.f32.gmra.mxu0 %v161
  %v391 = vpop.f32.mrf.mxu0
  %v392 = vadd.f32 0.0, %v391
  %v393 = vpop.f32.mrf.mxu0
  %v394 = vadd.f32 0.0, %v393
  %395 = vmatprep.mubr.f32.mxu0 %v164
  %396 = vmatmul.mubr.f32.gmra.mxu0 %v163
  %v397 = vpop.f32.mrf.mxu0
  %v398 = vadd.f32 0.0, %v397
  %v399 = vpop.f32.mrf.mxu0
  %v400 = vadd.f32 0.0, %v399
  %401 = vmatprep.mubr.f32.mxu0 %v166
  %402 = vmatmul.mubr.f32.gmra.mxu0 %v165
  %v403 = vpop.f32.mrf.mxu0
  %v404 = vadd.f32 0.0, %v403
  %v405 = vpop.f32.mrf.mxu0
  %v406 = vadd.f32 0.0, %v405
  %407 = vmatprep.mubr.f32.mxu0 %v168
  %408 = vmatmul.mubr.f32.gmra.mxu0 %v167
  %v409 = vpop.f32.mrf.mxu0
  %v410 = vadd.f32 0.0, %v409
  %v411 = vpop.f32.mrf.mxu0
  %v412 = vadd.f32 0.0, %v411
  %413 = vmatprep.mubr.f32.mxu0 %v170
  %414 = vmatmul.mubr.f32.gmra.mxu0 %v169
  %v415 = vpop.f32.mrf.mxu0
  %v416 = vadd.f32 0.0, %v415
  %v417 = vpop.f32.mrf.mxu0
  %v418 = vadd.f32 0.0, %v417
  %419 = vmatprep.mubr.f32.mxu0 %v172
  %420 = vmatmul.mubr.f32.gmra.mxu0 %v171
  %v421 = vpop.f32.mrf.mxu0
  %v422 = vadd.f32 0.0, %v421
  %v423 = vpop.f32.mrf.mxu0
  %v424 = vadd.f32 0.0, %v423
  %425 = vmatprep.mubr.f32.mxu0 %v174
  %426 = vmatmul.mubr.f32.gmra.mxu0 %v173
  %v427 = vpop.f32.mrf.mxu0
  %v428 = vadd.f32 0.0, %v427
  %v429 = vpop.f32.mrf.mxu0
  %v430 = vadd.f32 0.0, %v429
  %431 = vmatprep.mubr.f32.mxu0 %v176
  %432 = vmatmul.mubr.f32.gmra.mxu0 %v175
  %v433 = vpop.f32.mrf.mxu0
  %v434 = vadd.f32 0.0, %v433
  %v435 = vpop.f32.mrf.mxu0
  %v436 = vadd.f32 0.0, %v435
  %437 = vmatprep.mubr.f32.mxu0 %v178
  %438 = vmatmul.mubr.f32.gmra.mxu0 %v177
  %v439 = vpop.f32.mrf.mxu0
  %v440 = vadd.f32 0.0, %v439
  %v441 = vpop.f32.mrf.mxu0
  %v442 = vadd.f32 0.0, %v441
  %443 = vmatprep.mubr.f32.mxu0 %v180
  %444 = vmatmul.mubr.f32.gmra.mxu0 %v179
  %v445 = vpop.f32.mrf.mxu0
  %v446 = vadd.f32 0.0, %v445
  %v447 = vpop.f32.mrf.mxu0
  %v448 = vadd.f32 0.0, %v447
  %449 = vmatprep.mubr.f32.mxu0 %v182
  %450 = vmatmul.mubr.f32.gmra.mxu0 %v181
  %v451 = vpop.f32.mrf.mxu0
  %v452 = vadd.f32 0.0, %v451
  %v453 = vpop.f32.mrf.mxu0
  %v454 = vadd.f32 0.0, %v453
  %455 = vmatprep.mubr.f32.mxu0 %v184
  %456 = vmatmul.mubr.f32.gmra.mxu0 %v183
  %v457 = vpop.f32.mrf.mxu0
  %v458 = vadd.f32 0.0, %v457
  %v459 = vpop.f32.mrf.mxu0
  %v460 = vadd.f32 0.0, %v459
  %461 = vmatprep.mubr.f32.mxu0 %v186
  %462 = vmatmul.mubr.f32.gmra.mxu0 %v185
  %v463 = vpop.f32.mrf.mxu0
  %v464 = vadd.f32 0.0, %v463
  %v465 = vpop.f32.mrf.mxu0
  %v466 = vadd.f32 0.0, %v465
  %467 = vmatprep.mubr.f32.mxu0 %v188
  %468 = vmatmul.mubr.f32.gmra.mxu0 %v187
  %v469 = vpop.f32.mrf.mxu0
  %v470 = vadd.f32 0.0, %v469
  %v471 = vpop.f32.mrf.mxu0
  %v472 = vadd.f32 0.0, %v471
  %473 = vmatprep.mubr.f32.mxu0 %v190
  %474 = vmatmul.mubr.f32.gmra.mxu0 %v189
  %v475 = vpop.f32.mrf.mxu0
  %v476 = vadd.f32 0.0, %v475
  %v477 = vpop.f32.mrf.mxu0
  %v478 = vadd.f32 0.0, %v477
  %479 = vmatprep.mubr.f32.mxu0 %v192
  %480 = vmatmul.mubr.f32.gmra.mxu0 %v191
  %v481 = vpop.f32.mrf.mxu0
  %v482 = vadd.f32 0.0, %v481
  %v483 = vpop.f32.mrf.mxu0
  %v484 = vadd.f32 0.0, %v483
  %485 = vmatprep.mubr.f32.mxu0 %v194
  %486 = vmatmul.mubr.f32.gmra.mxu0 %v193
  %v487 = vpop.f32.mrf.mxu0
  %v488 = vadd.f32 0.0, %v487
  %v489 = vpop.f32.mrf.mxu0
  %v490 = vadd.f32 0.0, %v489
  %491 = vmatprep.mubr.f32.mxu0 %v196
  %492 = vmatmul.mubr.f32.gmra.mxu0 %v195
  %v493 = vpop.f32.mrf.mxu0
  %v494 = vadd.f32 0.0, %v493
  %v495 = vpop.f32.mrf.mxu0
  %v496 = vadd.f32 0.0, %v495
  %497 = vmatprep.mubr.f32.mxu0 %v198
  %498 = vmatmul.mubr.f32.gmra.mxu0 %v197
  %v499 = vpop.f32.mrf.mxu0
  %v500 = vadd.f32 0.0, %v499
  %v501 = vpop.f32.mrf.mxu0
  %v502 = vadd.f32 0.0, %v501
  %503 = vmatprep.mubr.f32.mxu0 %v200
  %504 = vmatmul.mubr.f32.gmra.mxu0 %v199
  %v505 = vpop.f32.mrf.mxu0
  %v506 = vadd.f32 0.0, %v505
  %v507 = vpop.f32.mrf.mxu0
  %v508 = vadd.f32 0.0, %v507
  %509 = vmatprep.mubr.f32.mxu0 %v202
  %510 = vmatmul.mubr.f32.gmra.mxu0 %v201
  %v511 = vpop.f32.mrf.mxu0
  %v512 = vadd.f32 0.0, %v511
  %v513 = vpop.f32.mrf.mxu0
  %v514 = vadd.f32 0.0, %v513
  %515 = vmatprep.mubr.f32.mxu0 %v204
  %516 = vmatmul.mubr.f32.gmra.mxu0 %v203
  %v517 = vpop.f32.mrf.mxu0
  %v518 = vadd.f32 0.0, %v517
  %v519 = vpop.f32.mrf.mxu0
  %v520 = vadd.f32 0.0, %v519
  %521 = vmatprep.mubr.f32.mxu0 %v206
  %522 = vmatmul.mubr.f32.gmra.mxu0 %v205
  %v523 = vpop.f32.mrf.mxu0
  %v524 = vadd.f32 0.0, %v523
  %v525 = vpop.f32.mrf.mxu0
  %v526 = vadd.f32 0.0, %v525
  %527 = vdwg.mxu0
  %v528 = vadd.f32 %v79, %v338
  %v529 = vadd.f32 %v80, %v340
  %v530 = vadd.f32 %v81, %v344
  %v531 = vadd.f32 %v82, %v346
  %v532 = vadd.f32 %v83, %v350
  %v533 = vadd.f32 %v84, %v352
  %v534 = vadd.f32 %v85, %v356
  %v535 = vadd.f32 %v86, %v358
  %v536 = vadd.f32 %v87, %v362
  %v537 = vadd.f32 %v88, %v364
  %v538 = vadd.f32 %v89, %v368
  %v539 = vadd.f32 %v90, %v370
  %v540 = vadd.f32 %v91, %v374
  %v541 = vadd.f32 %v92, %v376
  %v542 = vadd.f32 %v93, %v380
  %v543 = vadd.f32 %v94, %v382
  %v544 = vadd.f32 %v95, %v386
  %v545 = vadd.f32 %v96, %v388
  %v546 = vadd.f32 %v97, %v392
  %v547 = vadd.f32 %v98, %v394
  %v548 = vadd.f32 %v99, %v398
  %v549 = vadd.f32 %v100, %v400
  %v550 = vadd.f32 %v101, %v404
  %v551 = vadd.f32 %v102, %v406
  %v552 = vadd.f32 %v103, %v410
  %v553 = vadd.f32 %v104, %v412
  %v554 = vadd.f32 %v105, %v416
  %v555 = vadd.f32 %v106, %v418
  %v556 = vadd.f32 %v107, %v422
  %v557 = vadd.f32 %v108, %v424
  %v558 = vadd.f32 %v109, %v428
  %v559 = vadd.f32 %v110, %v430
  %v560 = vadd.f32 %v111, %v434
  %v561 = vadd.f32 %v112, %v436
  %v562 = vadd.f32 %v113, %v440
  %v563 = vadd.f32 %v114, %v442
  %v564 = vadd.f32 %v115, %v446
  %v565 = vadd.f32 %v116, %v448
  %v566 = vadd.f32 %v117, %v452
  %v567 = vadd.f32 %v118, %v454
  %v568 = vadd.f32 %v119, %v458
  %v569 = vadd.f32 %v120, %v460
  %v570 = vadd.f32 %v121, %v464
  %v571 = vadd.f32 %v122, %v466
  %v572 = vadd.f32 %v123, %v470
  %v573 = vadd.f32 %v124, %v472
  %v574 = vadd.f32 %v125, %v476
  %v575 = vadd.f32 %v126, %v478
  %v576 = vadd.f32 %v127, %v482
  %v577 = vadd.f32 %v128, %v484
  %v578 = vadd.f32 %v129, %v488
  %v579 = vadd.f32 %v130, %v490
  %v580 = vadd.f32 %v131, %v494
  %v581 = vadd.f32 %v132, %v496
  %v582 = vadd.f32 %v133, %v500
  %v583 = vadd.f32 %v134, %v502
  %v584 = vadd.f32 %v135, %v506
  %v585 = vadd.f32 %v136, %v508
  %v586 = vadd.f32 %v137, %v512
  %v587 = vadd.f32 %v138, %v514
  %v588 = vadd.f32 %v139, %v518
  %v589 = vadd.f32 %v140, %v520
  %v590 = vadd.f32 %v141, %v524
  %v591 = vadd.f32 %v142, %v526
  %592 = vst [vmem:[#allocation2] sm:$0xff] %v528
  %593 = vst [vmem:[#allocation2 + $0x8] sm:$0xff] %v529
  %594 = vst [vmem:[#allocation2 + $0x10] sm:$0xff] %v530
  %595 = vst [vmem:[#allocation2 + $0x18] sm:$0xff] %v531
  %596 = vst [vmem:[#allocation2 + $0x20] sm:$0xff] %v532
  %597 = vst [vmem:[#allocation2 + $0x28] sm:$0xff] %v533
  %598 = vst [vmem:[#allocation2 + $0x30] sm:$0xff] %v534
  %599 = vst [vmem:[#allocation2 + $0x38] sm:$0xff] %v535
  %600 = vst [vmem:[#allocation2 + $0x40] sm:$0xff] %v536
  %601 = vst [vmem:[#allocation2 + $0x48] sm:$0xff] %v537
  %602 = vst [vmem:[#allocation2 + $0x50] sm:$0xff] %v538
  %603 = vst [vmem:[#allocation2 + $0x58] sm:$0xff] %v539
  %604 = vst [vmem:[#allocation2 + $0x60] sm:$0xff] %v540
  %605 = vst [vmem:[#allocation2 + $0x68] sm:$0xff] %v541
  %606 = vst [vmem:[#allocation2 + $0x70] sm:$0xff] %v542
  %607 = vst [vmem:[#allocation2 + $0x78] sm:$0xff] %v543
  %608 = vst [vmem:[#allocation2 + $0x80] sm:$0xff] %v544
  %609 = vst [vmem:[#allocation2 + $0x88] sm:$0xff] %v545
  %610 = vst [vmem:[#allocation2 + $0x90] sm:$0xff] %v546
  %611 = vst [vmem:[#allocation2 + $0x98] sm:$0xff] %v547
  %612 = vst [vmem:[#allocation2 + $0xa0] sm:$0xff] %v548
  %613 = vst [vmem:[#allocation2 + $0xa8] sm:$0xff] %v549
  %614 = vst [vmem:[#allocation2 + $0xb0] sm:$0xff] %v550
  %615 = vst [vmem:[#allocation2 + $0xb8] sm:$0xff] %v551
  %616 = vst [vmem:[#allocation2 + $0xc0] sm:$0xff] %v552
  %617 = vst [vmem:[#allocation2 + $0xc8] sm:$0xff] %v553
  %618 = vst [vmem:[#allocation2 + $0xd0] sm:$0xff] %v554
  %619 = vst [vmem:[#allocation2 + $0xd8] sm:$0xff] %v555
  %620 = vst [vmem:[#allocation2 + $0xe0] sm:$0xff] %v556
  %621 = vst [vmem:[#allocation2 + $0xe8] sm:$0xff] %v557
  %622 = vst [vmem:[#allocation2 + $0xf0] sm:$0xff] %v558
  %623 = vst [vmem:[#allocation2 + $0xf8] sm:$0xff] %v559
  %624 = vst [vmem:[#allocation2 + $0x100] sm:$0xff] %v560
  %625 = vst [vmem:[#allocation2 + $0x108] sm:$0xff] %v561
  %626 = vst [vmem:[#allocation2 + $0x110] sm:$0xff] %v562
  %627 = vst [vmem:[#allocation2 + $0x118] sm:$0xff] %v563
  %628 = vst [vmem:[#allocation2 + $0x120] sm:$0xff] %v564
  %629 = vst [vmem:[#allocation2 + $0x128] sm:$0xff] %v565
  %630 = vst [vmem:[#allocation2 + $0x130] sm:$0xff] %v566
  %631 = vst [vmem:[#allocation2 + $0x138] sm:$0xff] %v567
  %632 = vst [vmem:[#allocation2 + $0x140] sm:$0xff] %v568
  %633 = vst [vmem:[#allocation2 + $0x148] sm:$0xff] %v569
  %634 = vst [vmem:[#allocation2 + $0x150] sm:$0xff] %v570
  %635 = vst [vmem:[#allocation2 + $0x158] sm:$0xff] %v571
  %636 = vst [vmem:[#allocation2 + $0x160] sm:$0xff] %v572
  %637 = vst [vmem:[#allocation2 + $0x168] sm:$0xff] %v573
  %638 = vst [vmem:[#allocation2 + $0x170] sm:$0xff] %v574
  %639 = vst [vmem:[#allocation2 + $0x178] sm:$0xff] %v575
  %640 = vst [vmem:[#allocation2 + $0x180] sm:$0xff] %v576
  %641 = vst [vmem:[#allocation2 + $0x188] sm:$0xff] %v577
  %642 = vst [vmem:[#allocation2 + $0x190] sm:$0xff] %v578
  %643 = vst [vmem:[#allocation2 + $0x198] sm:$0xff] %v579
  %644 = vst [vmem:[#allocation2 + $0x1a0] sm:$0xff] %v580
  %645 = vst [vmem:[#allocation2 + $0x1a8] sm:$0xff] %v581
  %646 = vst [vmem:[#allocation2 + $0x1b0] sm:$0xff] %v582
  %647 = vst [vmem:[#allocation2 + $0x1b8] sm:$0xff] %v583
  %648 = vst [vmem:[#allocation2 + $0x1c0] sm:$0xff] %v584
  %649 = vst [vmem:[#allocation2 + $0x1c8] sm:$0xff] %v585
  %650 = vst [vmem:[#allocation2 + $0x1d0] sm:$0xff] %v586
  %651 = vst [vmem:[#allocation2 + $0x1d8] sm:$0xff] %v587
  %652 = vst [vmem:[#allocation2 + $0x1e0] sm:$0xff] %v588
  %653 = vst [vmem:[#allocation2 + $0x1e8] sm:$0xff] %v589
  %654 = vst [vmem:[#allocation2 + $0x1f0] sm:$0xff] %v590
  %655 = vst [vmem:[#allocation2 + $0x1f8] sm:$0xff] %v591
  // Predicated region
  $region14: #{run.8} parent=0 // pred_check
    %p656 = pneg %p11
  $region15: #{run.8} parent=0 // pred_check_branch
    %658 = sbr.rel (%p656) target = $region17
  $region16: #{run.8} parent=0 // pred_region
    %v659 = vld [vmem:[#allocation2] sm:$0xff]
    %v660 = vld [vmem:[#allocation2 + $0x8] sm:$0xff]
    %v661 = vld [vmem:[#allocation2 + $0x10] sm:$0xff]
    %v662 = vld [vmem:[#allocation2 + $0x18] sm:$0xff]
    %v663 = vld [vmem:[#allocation2 + $0x20] sm:$0xff]
    %v664 = vld [vmem:[#allocation2 + $0x28] sm:$0xff]
    %v665 = vld [vmem:[#allocation2 + $0x30] sm:$0xff]
    %v666 = vld [vmem:[#allocation2 + $0x38] sm:$0xff]
    %v667 = vld [vmem:[#allocation2 + $0x40] sm:$0xff]
    %v668 = vld [vmem:[#allocation2 + $0x48] sm:$0xff]
    %v669 = vld [vmem:[#allocation2 + $0x50] sm:$0xff]
    %v670 = vld [vmem:[#allocation2 + $0x58] sm:$0xff]
    %v671 = vld [vmem:[#allocation2 + $0x60] sm:$0xff]
    %v672 = vld [vmem:[#allocation2 + $0x68] sm:$0xff]
    %v673 = vld [vmem:[#allocation2 + $0x70] sm:$0xff]
    %v674 = vld [vmem:[#allocation2 + $0x78] sm:$0xff]
    %v675 = vld [vmem:[#allocation2 + $0x80] sm:$0xff]
    %v676 = vld [vmem:[#allocation2 + $0x88] sm:$0xff]
    %v677 = vld [vmem:[#allocation2 + $0x90] sm:$0xff]
    %v678 = vld [vmem:[#allocation2 + $0x98] sm:$0xff]
    %v679 = vld [vmem:[#allocation2 + $0xa0] sm:$0xff]
    %v680 = vld [vmem:[#allocation2 + $0xa8] sm:$0xff]
    %v681 = vld [vmem:[#allocation2 + $0xb0] sm:$0xff]
    %v682 = vld [vmem:[#allocation2 + $0xb8] sm:$0xff]
    %v683 = vld [vmem:[#allocation2 + $0xc0] sm:$0xff]
    %v684 = vld [vmem:[#allocation2 + $0xc8] sm:$0xff]
    %v685 = vld [vmem:[#allocation2 + $0xd0] sm:$0xff]
    %v686 = vld [vmem:[#allocation2 + $0xd8] sm:$0xff]
    %v687 = vld [vmem:[#allocation2 + $0xe0] sm:$0xff]
    %v688 = vld [vmem:[#allocation2 + $0xe8] sm:$0xff]
    %v689 = vld [vmem:[#allocation2 + $0xf0] sm:$0xff]
    %v690 = vld [vmem:[#allocation2 + $0xf8] sm:$0xff]
    %v691 = vld [vmem:[#allocation2 + $0x100] sm:$0xff]
    %v692 = vld [vmem:[#allocation2 + $0x108] sm:$0xff]
    %v693 = vld [vmem:[#allocation2 + $0x110] sm:$0xff]
    %v694 = vld [vmem:[#allocation2 + $0x118] sm:$0xff]
    %v695 = vld [vmem:[#allocation2 + $0x120] sm:$0xff]
    %v696 = vld [vmem:[#allocation2 + $0x128] sm:$0xff]
    %v697 = vld [vmem:[#allocation2 + $0x130] sm:$0xff]
    %v698 = vld [vmem:[#allocation2 + $0x138] sm:$0xff]
    %v699 = vld [vmem:[#allocation2 + $0x140] sm:$0xff]
    %v700 = vld [vmem:[#allocation2 + $0x148] sm:$0xff]
    %v701 = vld [vmem:[#allocation2 + $0x150] sm:$0xff]
    %v702 = vld [vmem:[#allocation2 + $0x158] sm:$0xff]
    %v703 = vld [vmem:[#allocation2 + $0x160] sm:$0xff]
    %v704 = vld [vmem:[#allocation2 + $0x168] sm:$0xff]
    %v705 = vld [vmem:[#allocation2 + $0x170] sm:$0xff]
    %v706 = vld [vmem:[#allocation2 + $0x178] sm:$0xff]
    %v707 = vld [vmem:[#allocation2 + $0x180] sm:$0xff]
    %v708 = vld [vmem:[#allocation2 + $0x188] sm:$0xff]
    %v709 = vld [vmem:[#allocation2 + $0x190] sm:$0xff]
    %v710 = vld [vmem:[#allocation2 + $0x198] sm:$0xff]
    %v711 = vld [vmem:[#allocation2 + $0x1a0] sm:$0xff]
    %v712 = vld [vmem:[#allocation2 + $0x1a8] sm:$0xff]
    %v713 = vld [vmem:[#allocation2 + $0x1b0] sm:$0xff]
    %v714 = vld [vmem:[#allocation2 + $0x1b8] sm:$0xff]
    %v715 = vld [vmem:[#allocation2 + $0x1c0] sm:$0xff]
    %v716 = vld [vmem:[#allocation2 + $0x1c8] sm:$0xff]
    %v717 = vld [vmem:[#allocation2 + $0x1d0] sm:$0xff]
    %v718 = vld [vmem:[#allocation2 + $0x1d8] sm:$0xff]
    %v719 = vld [vmem:[#allocation2 + $0x1e0] sm:$0xff]
    %v720 = vld [vmem:[#allocation2 + $0x1e8] sm:$0xff]
    %v721 = vld [vmem:[#allocation2 + $0x1f0] sm:$0xff]
    %v722 = vld [vmem:[#allocation2 + $0x1f8] sm:$0xff]
    %723 = vst [vmem:[%s2] sm:$0xff] %v659
    %724 = vst [vmem:[%s2 + $0x8] sm:$0xff] %v660
    %725 = vst [vmem:[%s2 + $0x10] sm:$0xff] %v661
    %726 = vst [vmem:[%s2 + $0x18] sm:$0xff] %v662
    %727 = vst [vmem:[%s2 + $0x20] sm:$0xff] %v663
    %728 = vst [vmem:[%s2 + $0x28] sm:$0xff] %v664
    %729 = vst [vmem:[%s2 + $0x30] sm:$0xff] %v665
    %730 = vst [vmem:[%s2 + $0x38] sm:$0xff] %v666
    %731 = vst [vmem:[%s2 + $0x40] sm:$0xff] %v667
    %732 = vst [vmem:[%s2 + $0x48] sm:$0xff] %v668
    %733 = vst [vmem:[%s2 + $0x50] sm:$0xff] %v669
    %734 = vst [vmem:[%s2 + $0x58] sm:$0xff] %v670
    %735 = vst [vmem:[%s2 + $0x60] sm:$0xff] %v671
    %736 = vst [vmem:[%s2 + $0x68] sm:$0xff] %v672
    %737 = vst [vmem:[%s2 + $0x70] sm:$0xff] %v673
    %738 = vst [vmem:[%s2 + $0x78] sm:$0xff] %v674
    %739 = vst [vmem:[%s2 + $0x80] sm:$0xff] %v675
    %740 = vst [vmem:[%s2 + $0x88] sm:$0xff] %v676
    %741 = vst [vmem:[%s2 + $0x90] sm:$0xff] %v677
    %742 = vst [vmem:[%s2 + $0x98] sm:$0xff] %v678
    %743 = vst [vmem:[%s2 + $0xa0] sm:$0xff] %v679
    %744 = vst [vmem:[%s2 + $0xa8] sm:$0xff] %v680
    %745 = vst [vmem:[%s2 + $0xb0] sm:$0xff] %v681
    %746 = vst [vmem:[%s2 + $0xb8] sm:$0xff] %v682
    %747 = vst [vmem:[%s2 + $0xc0] sm:$0xff] %v683
    %748 = vst [vmem:[%s2 + $0xc8] sm:$0xff] %v684
    %749 = vst [vmem:[%s2 + $0xd0] sm:$0xff] %v685
    %750 = vst [vmem:[%s2 + $0xd8] sm:$0xff] %v686
    %751 = vst [vmem:[%s2 + $0xe0] sm:$0xff] %v687
    %752 = vst [vmem:[%s2 + $0xe8] sm:$0xff] %v688
    %753 = vst [vmem:[%s2 + $0xf0] sm:$0xff] %v689
    %754 = vst [vmem:[%s2 + $0xf8] sm:$0xff] %v690
    %755 = vst [vmem:[%s2 + $0x100] sm:$0xff] %v691
    %756 = vst [vmem:[%s2 + $0x108] sm:$0xff] %v692
    %757 = vst [vmem:[%s2 + $0x110] sm:$0xff] %v693
    %758 = vst [vmem:[%s2 + $0x118] sm:$0xff] %v694
    %759 = vst [vmem:[%s2 + $0x120] sm:$0xff] %v695
    %760 = vst [vmem:[%s2 + $0x128] sm:$0xff] %v696
    %761 = vst [vmem:[%s2 + $0x130] sm:$0xff] %v697
    %762 = vst [vmem:[%s2 + $0x138] sm:$0xff] %v698
    %763 = vst [vmem:[%s2 + $0x140] sm:$0xff] %v699
    %764 = vst [vmem:[%s2 + $0x148] sm:$0xff] %v700
    %765 = vst [vmem:[%s2 + $0x150] sm:$0xff] %v701
    %766 = vst [vmem:[%s2 + $0x158] sm:$0xff] %v702
    %767 = vst [vmem:[%s2 + $0x160] sm:$0xff] %v703
    %768 = vst [vmem:[%s2 + $0x168] sm:$0xff] %v704
    %769 = vst [vmem:[%s2 + $0x170] sm:$0xff] %v705
    %770 = vst [vmem:[%s2 + $0x178] sm:$0xff] %v706
    %771 = vst [vmem:[%s2 + $0x180] sm:$0xff] %v707
    %772 = vst [vmem:[%s2 + $0x188] sm:$0xff] %v708
    %773 = vst [vmem:[%s2 + $0x190] sm:$0xff] %v709
    %774 = vst [vmem:[%s2 + $0x198] sm:$0xff] %v710
    %775 = vst [vmem:[%s2 + $0x1a0] sm:$0xff] %v711
    %776 = vst [vmem:[%s2 + $0x1a8] sm:$0xff] %v712
    %777 = vst [vmem:[%s2 + $0x1b0] sm:$0xff] %v713
    %778 = vst [vmem:[%s2 + $0x1b8] sm:$0xff] %v714
    %779 = vst [vmem:[%s2 + $0x1c0] sm:$0xff] %v715
    %780 = vst [vmem:[%s2 + $0x1c8] sm:$0xff] %v716
    %781 = vst [vmem:[%s2 + $0x1d0] sm:$0xff] %v717
    %782 = vst [vmem:[%s2 + $0x1d8] sm:$0xff] %v718
    %783 = vst [vmem:[%s2 + $0x1e0] sm:$0xff] %v719
    %784 = vst [vmem:[%s2 + $0x1e8] sm:$0xff] %v720
    %785 = vst [vmem:[%s2 + $0x1f0] sm:$0xff] %v721
    %786 = vst [vmem:[%s2 + $0x1f8] sm:$0xff] %v722
  $region17: #{run.8} parent=0 // pred_fallthru
    _
  // Predicated region
  $region18: #{run.8} parent=0 // pred_check
    _
  $region19: #{run.8} parent=0 // pred_check_branch
    %788 = sbr.rel (0) target = $region21
  $region20: #{run.8} parent=0 // pred_region
    _
  $region21: #{run.8} parent=0 // pred_fallthru
    _
  // Predicated region
  $region22: #{run.8} parent=0 // pred_check
    _
  $region23: #{run.8} parent=0 // pred_check_branch
    %790 = sbr.rel (0) target = $region25
  $region24: #{run.8} parent=0 // pred_region
    _
  $region25: #{run.8} parent=0 // pred_fallthru
    _

// kernel: run.12
$region0: #{run.12}
  #allocation0 [shape = 'u32[]', space=smem, size = 0x4, offset = 0x4, fixed_abs, tag = 'smem constant byte address 0x4 - core index']
  #allocation1 [shape = 'u32[144,128]{1,0:T(1,128)}', space=vmem, size = 0x12000, scoped, tag = 'internal scratch']
  #allocation2 [shape = 'f32[8,128]{1,0:T(8,128)}', space=vmem, size = 0x1000, scoped, tag = 'scratch operand']
  %s0 = inlined_call_operand.vmem [shape: f32[8,256], index: 0, kind: input, shape index: {}]
  %s1 = inlined_call_operand.vmem [shape: f32[256,128], index: 1, kind: input, shape index: {}]
  %s2 = inlined_call_operand.vmem [shape: f32[1,128], index: 2, kind: input, shape index: {}]
  %s3 = inlined_call_operand.vmem [shape: f32[8,128], index: 3, kind: output, shape index: {}]
  %s4 = sld [smem:[#allocation0]]
  $region30: #{run.12} parent=0
    _
  %s6 = ssub.s32 1, %s4
  %s7 = scalar_select 0, %s6, %s4
  // Predicated region
  $region2: #{run.12} parent=0 // pred_check
    _
  $region3: #{run.12} parent=0 // pred_check_branch
    %9 = sbr.rel (0) target = $region5
  $region4: #{run.12} parent=0 // pred_region
    _
  $region5: #{run.12} parent=0 // pred_fallthru
    _
  // Predicated region
  $region6: #{run.12} parent=0 // pred_check
    _
  $region7: #{run.12} parent=0 // pred_check_branch
    %11 = sbr.rel (0) target = $region9
  $region8: #{run.12} parent=0 // pred_region
    _
  $region9: #{run.12} parent=0 // pred_fallthru
    _
  // Predicated region
  $region10: #{run.12} parent=0 // pred_check
    _
  $region11: #{run.12} parent=0 // pred_check_branch
    %13 = sbr.rel (0) target = $region13
  $region12: #{run.12} parent=0 // pred_region
    _
  $region13: #{run.12} parent=0 // pred_fallthru
    _
  %p14 = scmp.eq.s32.totalorder 0, 0
  // Predicated region
  $region14: #{run.12} parent=0 // pred_check
    %p15 = pneg %p14
  $region15: #{run.12} parent=0 // pred_check_branch
    %17 = sbr.rel (%p15) target = $region17
  $region16: #{run.12} parent=0 // pred_region
    %18 = vst [vmem:[#allocation2] sm:$0xff] 0.0
  $region17: #{run.12} parent=0 // pred_fallthru
    _
  %v19 = vld [vmem:[#allocation2] sm:$0xff]
  %v20 = vld [vmem:[%s0] sm:$0xff]
  %v21 = vld [vmem:[%s0 + $0x8] sm:$0xff]
  %v22 = vld [vmem:[%s1] sm:$0xff]
  %v23 = vld [vmem:[%s1 + $0x8] sm:$0xff]
  %v24 = vld [vmem:[%s1 + $0x10] sm:$0xff]
  %v25 = vld [vmem:[%s1 + $0x18] sm:$0xff]
  %v26 = vld [vmem:[%s1 + $0x20] sm:$0xff]
  %v27 = vld [vmem:[%s1 + $0x28] sm:$0xff]
  %v28 = vld [vmem:[%s1 + $0x30] sm:$0xff]
  %v29 = vld [vmem:[%s1 + $0x38] sm:$0xff]
  %v30 = vld [vmem:[%s1 + $0x40] sm:$0xff]
  %v31 = vld [vmem:[%s1 + $0x48] sm:$0xff]
  %v32 = vld [vmem:[%s1 + $0x50] sm:$0xff]
  %v33 = vld [vmem:[%s1 + $0x58] sm:$0xff]
  %v34 = vld [vmem:[%s1 + $0x60] sm:$0xff]
  %v35 = vld [vmem:[%s1 + $0x68] sm:$0xff]
  %v36 = vld [vmem:[%s1 + $0x70] sm:$0xff]
  %v37 = vld [vmem:[%s1 + $0x78] sm:$0xff]
  %v38 = vld [vmem:[%s1 + $0x80] sm:$0xff]
  %v39 = vld [vmem:[%s1 + $0x88] sm:$0xff]
  %v40 = vld [vmem:[%s1 + $0x90] sm:$0xff]
  %v41 = vld [vmem:[%s1 + $0x98] sm:$0xff]
  %v42 = vld [vmem:[%s1 + $0xa0] sm:$0xff]
  %v43 = vld [vmem:[%s1 + $0xa8] sm:$0xff]
  %v44 = vld [vmem:[%s1 + $0xb0] sm:$0xff]
  %v45 = vld [vmem:[%s1 + $0xb8] sm:$0xff]
  %v46 = vld [vmem:[%s1 + $0xc0] sm:$0xff]
  %v47 = vld [vmem:[%s1 + $0xc8] sm:$0xff]
  %v48 = vld [vmem:[%s1 + $0xd0] sm:$0xff]
  %v49 = vld [vmem:[%s1 + $0xd8] sm:$0xff]
  %v50 = vld [vmem:[%s1 + $0xe0] sm:$0xff]
  %v51 = vld [vmem:[%s1 + $0xe8] sm:$0xff]
  %v52 = vld [vmem:[%s1 + $0xf0] sm:$0xff]
  %v53 = vld [vmem:[%s1 + $0xf8] sm:$0xff]
  %54 = vmatprep.subr.mxu0 0.0
  %55 = vmatpush1.msra.mxu0 %v37
  %56 = vmatprep.subr.mxu0 0.0
  %57 = vmatpush1.msra.mxu0 %v36
  %58 = vmatprep.subr.mxu0 0.0
  %59 = vmatpush1.msra.mxu0 %v35
  %60 = vmatprep.subr.mxu0 0.0
  %61 = vmatpush1.msra.mxu0 %v34
  %62 = vmatprep.subr.mxu0 0.0
  %63 = vmatpush1.msra.mxu0 %v33
  %64 = vmatprep.subr.mxu0 0.0
  %65 = vmatpush1.msra.mxu0 %v32
  %66 = vmatprep.subr.mxu0 0.0
  %67 = vmatpush1.msra.mxu0 %v31
  %68 = vmatprep.subr.mxu0 0.0
  %69 = vmatpush1.msra.mxu0 %v30
  %70 = vmatprep.subr.mxu0 0.0
  %71 = vmatpush1.msra.mxu0 %v29
  %72 = vmatprep.subr.mxu0 0.0
  %73 = vmatpush1.msra.mxu0 %v28
  %74 = vmatprep.subr.mxu0 0.0
  %75 = vmatpush1.msra.mxu0 %v27
  %76 = vmatprep.subr.mxu0 0.0
  %77 = vmatpush1.msra.mxu0 %v26
  %78 = vmatprep.subr.mxu0 0.0
  %79 = vmatpush1.msra.mxu0 %v25
  %80 = vmatprep.subr.mxu0 0.0
  %81 = vmatpush1.msra.mxu0 %v24
  %82 = vmatprep.subr.mxu0 0.0
  %83 = vmatpush1.msra.mxu0 %v23
  %84 = vmatprep.subr.mxu0 0.0
  %85 = vmatpush1.msra.mxu0 %v22
  %86 = vmatprep.subr.mxu0 0.0
  %87 = vmatpush2.msra.mxu0 %v53
  %88 = vmatprep.subr.mxu0 0.0
  %89 = vmatpush2.msra.mxu0 %v52
  %90 = vmatprep.subr.mxu0 0.0
  %91 = vmatpush2.msra.mxu0 %v51
  %92 = vmatprep.subr.mxu0 0.0
  %93 = vmatpush2.msra.mxu0 %v50
  %94 = vmatprep.subr.mxu0 0.0
  %95 = vmatpush2.msra.mxu0 %v49
  %96 = vmatprep.subr.mxu0 0.0
  %97 = vmatpush2.msra.mxu0 %v48
  %98 = vmatprep.subr.mxu0 0.0
  %99 = vmatpush2.msra.mxu0 %v47
  %100 = vmatprep.subr.mxu0 0.0
  %101 = vmatpush2.msra.mxu0 %v46
  %102 = vmatprep.subr.mxu0 0.0
  %103 = vmatpush2.msra.mxu0 %v45
  %104 = vmatprep.subr.mxu0 0.0
  %105 = vmatpush2.msra.mxu0 %v44
  %106 = vmatprep.subr.mxu0 0.0
  %107 = vmatpush2.msra.mxu0 %v43
  %108 = vmatprep.subr.mxu0 0.0
  %109 = vmatpush2.msra.mxu0 %v42
  %110 = vmatprep.subr.mxu0 0.0
  %111 = vmatpush2.msra.mxu0 %v41
  %112 = vmatprep.subr.mxu0 0.0
  %113 = vmatpush2.msra.mxu0 %v40
  %114 = vmatprep.subr.mxu0 0.0
  %115 = vmatpush2.msra.mxu0 %v39
  %116 = vmatprep.subr.mxu0 0.0
  %117 = vmatpush2.msra.mxu0 %v38
  %118 = vmatprep.mubr.f32.mxu0 %v21
  %119 = vmatmul.mubr.f32.gmra.mxu0 %v20
  %v120 = vpop.f32.mrf.mxu0
  %v121 = vadd.f32 0.0, %v120
  %v122 = vpop.f32.mrf.mxu0
  %123 = vdwg.mxu0
  %v124 = vadd.f32 %v19, %v121
  %125 = vst [vmem:[#allocation2] sm:$0xff] %v124
  // Predicated region
  $region18: #{run.12} parent=0 // pred_check
    %p126 = pneg %p14
  $region19: #{run.12} parent=0 // pred_check_branch
    %128 = sbr.rel (%p126) target = $region21
  $region20: #{run.12} parent=0 // pred_region
    %v129 = vld [vmem:[#allocation2] sm:$0xff]
    %v130 = vld [vmem:[%s2] sm:$0x1]
    %v132 = vlaneseq
    %v133 = vshrl.u32 %v132, 7
    %v134 = vsub.s32 0, %v133
    %v135 = vrot.slane %v130, %v134
    %v137 = vadd.f32 %v129, %v135
    %138 = vst [vmem:[%s3] sm:$0xff] %v137
  $region21: #{run.12} parent=0 // pred_fallthru
    _
  // Predicated region
  $region22: #{run.12} parent=0 // pred_check
    _
  $region23: #{run.12} parent=0 // pred_check_branch
    %140 = sbr.rel (0) target = $region25
  $region24: #{run.12} parent=0 // pred_region
    _
  $region25: #{run.12} parent=0 // pred_fallthru
    _
  // Predicated region
  $region26: #{run.12} parent=0 // pred_check
    _
  $region27: #{run.12} parent=0 // pred_check_branch
    %142 = sbr.rel (0) target = $region29
  $region28: #{run.12} parent=0 // pred_region
    _
  $region29: #{run.12} parent=0 // pred_fallthru
    _

// kernel: run.11
$region0: #{run.11}
  #allocation0 [shape = 'u32[]', space=smem, size = 0x4, offset = 0x4, fixed_abs, tag = 'smem constant byte address 0x4 - core index']
  #allocation1 [shape = 'u32[144,128]{1,0:T(1,128)}', space=vmem, size = 0x12000, scoped, tag = 'internal scratch']
  #allocation2 [shape = 'f32[256,128]{1,0:T(8,128)}', space=vmem, size = 0x20000, scoped, tag = 'scratch operand']
  %s0 = inlined_call_operand.vmem [shape: f32[256,256], index: 0, kind: input, shape index: {}]
  %s1 = inlined_call_operand.vmem [shape: f32[256,128], index: 1, kind: input, shape index: {}]
  %s2 = inlined_call_operand.vmem [shape: f32[256,128], index: 2, kind: output, shape index: {}]
  %s3 = sld [smem:[#allocation0]]
  $region26: #{run.11} parent=0
    _
  %s5 = ssub.s32 1, %s3
  %s6 = scalar_select 0, %s5, %s3
  // Predicated region
  $region2: #{run.11} parent=0 // pred_check
    _
  $region3: #{run.11} parent=0 // pred_check_branch
    %8 = sbr.rel (0) target = $region5
  $region4: #{run.11} parent=0 // pred_region
    _
  $region5: #{run.11} parent=0 // pred_fallthru
    _
  // Predicated region
  $region6: #{run.11} parent=0 // pred_check
    _
  $region7: #{run.11} parent=0 // pred_check_branch
    %10 = sbr.rel (0) target = $region9
  $region8: #{run.11} parent=0 // pred_region
    _
  $region9: #{run.11} parent=0 // pred_fallthru
    _
  %p11 = scmp.eq.s32.totalorder 0, 0
  // Predicated region
  $region10: #{run.11} parent=0 // pred_check
    %p12 = pneg %p11
  $region11: #{run.11} parent=0 // pred_check_branch
    %14 = sbr.rel (%p12) target = $region13
  $region12: #{run.11} parent=0 // pred_region
    %15 = vst [vmem:[#allocation2] sm:$0xff] 0.0
    %16 = vst [vmem:[#allocation2 + $0x8] sm:$0xff] 0.0
    %17 = vst [vmem:[#allocation2 + $0x10] sm:$0xff] 0.0
    %18 = vst [vmem:[#allocation2 + $0x18] sm:$0xff] 0.0
    %19 = vst [vmem:[#allocation2 + $0x20] sm:$0xff] 0.0
    %20 = vst [vmem:[#allocation2 + $0x28] sm:$0xff] 0.0
    %21 = vst [vmem:[#allocation2 + $0x30] sm:$0xff] 0.0
    %22 = vst [vmem:[#allocation2 + $0x38] sm:$0xff] 0.0
    %23 = vst [vmem:[#allocation2 + $0x40] sm:$0xff] 0.0
    %24 = vst [vmem:[#allocation2 + $0x48] sm:$0xff] 0.0
    %25 = vst [vmem:[#allocation2 + $0x50] sm:$0xff] 0.0
    %26 = vst [vmem:[#allocation2 + $0x58] sm:$0xff] 0.0
    %27 = vst [vmem:[#allocation2 + $0x60] sm:$0xff] 0.0
    %28 = vst [vmem:[#allocation2 + $0x68] sm:$0xff] 0.0
    %29 = vst [vmem:[#allocation2 + $0x70] sm:$0xff] 0.0
    %30 = vst [vmem:[#allocation2 + $0x78] sm:$0xff] 0.0
    %31 = vst [vmem:[#allocation2 + $0x80] sm:$0xff] 0.0
    %32 = vst [vmem:[#allocation2 + $0x88] sm:$0xff] 0.0
    %33 = vst [vmem:[#allocation2 + $0x90] sm:$0xff] 0.0
    %34 = vst [vmem:[#allocation2 + $0x98] sm:$0xff] 0.0
    %35 = vst [vmem:[#allocation2 + $0xa0] sm:$0xff] 0.0
    %36 = vst [vmem:[#allocation2 + $0xa8] sm:$0xff] 0.0
    %37 = vst [vmem:[#allocation2 + $0xb0] sm:$0xff] 0.0
    %38 = vst [vmem:[#allocation2 + $0xb8] sm:$0xff] 0.0
    %39 = vst [vmem:[#allocation2 + $0xc0] sm:$0xff] 0.0
    %40 = vst [vmem:[#allocation2 + $0xc8] sm:$0xff] 0.0
    %41 = vst [vmem:[#allocation2 + $0xd0] sm:$0xff] 0.0
    %42 = vst [vmem:[#allocation2 + $0xd8] sm:$0xff] 0.0
    %43 = vst [vmem:[#allocation2 + $0xe0] sm:$0xff] 0.0
    %44 = vst [vmem:[#allocation2 + $0xe8] sm:$0xff] 0.0
    %45 = vst [vmem:[#allocation2 + $0xf0] sm:$0xff] 0.0
    %46 = vst [vmem:[#allocation2 + $0xf8] sm:$0xff] 0.0
  $region13: #{run.11} parent=0 // pred_fallthru
    _
  %v47 = vld [vmem:[#allocation2] sm:$0xff]
  %v48 = vld [vmem:[#allocation2 + $0x8] sm:$0xff]
  %v49 = vld [vmem:[#allocation2 + $0x10] sm:$0xff]
  %v50 = vld [vmem:[#allocation2 + $0x18] sm:$0xff]
  %v51 = vld [vmem:[#allocation2 + $0x20] sm:$0xff]
  %v52 = vld [vmem:[#allocation2 + $0x28] sm:$0xff]
  %v53 = vld [vmem:[#allocation2 + $0x30] sm:$0xff]
  %v54 = vld [vmem:[#allocation2 + $0x38] sm:$0xff]
  %v55 = vld [vmem:[#allocation2 + $0x40] sm:$0xff]
  %v56 = vld [vmem:[#allocation2 + $0x48] sm:$0xff]
  %v57 = vld [vmem:[#allocation2 + $0x50] sm:$0xff]
  %v58 = vld [vmem:[#allocation2 + $0x58] sm:$0xff]
  %v59 = vld [vmem:[#allocation2 + $0x60] sm:$0xff]
  %v60 = vld [vmem:[#allocation2 + $0x68] sm:$0xff]
  %v61 = vld [vmem:[#allocation2 + $0x70] sm:$0xff]
  %v62 = vld [vmem:[#allocation2 + $0x78] sm:$0xff]
  %v63 = vld [vmem:[#allocation2 + $0x80] sm:$0xff]
  %v64 = vld [vmem:[#allocation2 + $0x88] sm:$0xff]
  %v65 = vld [vmem:[#allocation2 + $0x90] sm:$0xff]
  %v66 = vld [vmem:[#allocation2 + $0x98] sm:$0xff]
  %v67 = vld [vmem:[#allocation2 + $0xa0] sm:$0xff]
  %v68 = vld [vmem:[#allocation2 + $0xa8] sm:$0xff]
  %v69 = vld [vmem:[#allocation2 + $0xb0] sm:$0xff]
  %v70 = vld [vmem:[#allocation2 + $0xb8] sm:$0xff]
  %v71 = vld [vmem:[#allocation2 + $0xc0] sm:$0xff]
  %v72 = vld [vmem:[#allocation2 + $0xc8] sm:$0xff]
  %v73 = vld [vmem:[#allocation2 + $0xd0] sm:$0xff]
  %v74 = vld [vmem:[#allocation2 + $0xd8] sm:$0xff]
  %v75 = vld [vmem:[#allocation2 + $0xe0] sm:$0xff]
  %v76 = vld [vmem:[#allocation2 + $0xe8] sm:$0xff]
  %v77 = vld [vmem:[#allocation2 + $0xf0] sm:$0xff]
  %v78 = vld [vmem:[#allocation2 + $0xf8] sm:$0xff]
  %v79 = vld [vmem:[%s0] sm:$0xff]
  %v80 = vld [vmem:[%s0 + $0x8] sm:$0xff]
  %v81 = vld [vmem:[%s0 + $0x10] sm:$0xff]
  %v82 = vld [vmem:[%s0 + $0x18] sm:$0xff]
  %v83 = vld [vmem:[%s0 + $0x20] sm:$0xff]
  %v84 = vld [vmem:[%s0 + $0x28] sm:$0xff]
  %v85 = vld [vmem:[%s0 + $0x30] sm:$0xff]
  %v86 = vld [vmem:[%s0 + $0x38] sm:$0xff]
  %v87 = vld [vmem:[%s0 + $0x40] sm:$0xff]
  %v88 = vld [vmem:[%s0 + $0x48] sm:$0xff]
  %v89 = vld [vmem:[%s0 + $0x50] sm:$0xff]
  %v90 = vld [vmem:[%s0 + $0x58] sm:$0xff]
  %v91 = vld [vmem:[%s0 + $0x60] sm:$0xff]
  %v92 = vld [vmem:[%s0 + $0x68] sm:$0xff]
  %v93 = vld [vmem:[%s0 + $0x70] sm:$0xff]
  %v94 = vld [vmem:[%s0 + $0x78] sm:$0xff]
  %v95 = vld [vmem:[%s0 + $0x80] sm:$0xff]
  %v96 = vld [vmem:[%s0 + $0x88] sm:$0xff]
  %v97 = vld [vmem:[%s0 + $0x90] sm:$0xff]
  %v98 = vld [vmem:[%s0 + $0x98] sm:$0xff]
  %v99 = vld [vmem:[%s0 + $0xa0] sm:$0xff]
  %v100 = vld [vmem:[%s0 + $0xa8] sm:$0xff]
  %v101 = vld [vmem:[%s0 + $0xb0] sm:$0xff]
  %v102 = vld [vmem:[%s0 + $0xb8] sm:$0xff]
  %v103 = vld [vmem:[%s0 + $0xc0] sm:$0xff]
  %v104 = vld [vmem:[%s0 + $0xc8] sm:$0xff]
  %v105 = vld [vmem:[%s0 + $0xd0] sm:$0xff]
  %v106 = vld [vmem:[%s0 + $0xd8] sm:$0xff]
  %v107 = vld [vmem:[%s0 + $0xe0] sm:$0xff]
  %v108 = vld [vmem:[%s0 + $0xe8] sm:$0xff]
  %v109 = vld [vmem:[%s0 + $0xf0] sm:$0xff]
  %v110 = vld [vmem:[%s0 + $0xf8] sm:$0xff]
  %v111 = vld [vmem:[%s0 + $0x100] sm:$0xff]
  %v112 = vld [vmem:[%s0 + $0x108] sm:$0xff]
  %v113 = vld [vmem:[%s0 + $0x110] sm:$0xff]
  %v114 = vld [vmem:[%s0 + $0x118] sm:$0xff]
  %v115 = vld [vmem:[%s0 + $0x120] sm:$0xff]
  %v116 = vld [vmem:[%s0 + $0x128] sm:$0xff]
  %v117 = vld [vmem:[%s0 + $0x130] sm:$0xff]
  %v118 = vld [vmem:[%s0 + $0x138] sm:$0xff]
  %v119 = vld [vmem:[%s0 + $0x140] sm:$0xff]
  %v120 = vld [vmem:[%s0 + $0x148] sm:$0xff]
  %v121 = vld [vmem:[%s0 + $0x150] sm:$0xff]
  %v122 = vld [vmem:[%s0 + $0x158] sm:$0xff]
  %v123 = vld [vmem:[%s0 + $0x160] sm:$0xff]
  %v124 = vld [vmem:[%s0 + $0x168] sm:$0xff]
  %v125 = vld [vmem:[%s0 + $0x170] sm:$0xff]
  %v126 = vld [vmem:[%s0 + $0x178] sm:$0xff]
  %v127 = vld [vmem:[%s0 + $0x180] sm:$0xff]
  %v128 = vld [vmem:[%s0 + $0x188] sm:$0xff]
  %v129 = vld [vmem:[%s0 + $0x190] sm:$0xff]
  %v130 = vld [vmem:[%s0 + $0x198] sm:$0xff]
  %v131 = vld [vmem:[%s0 + $0x1a0] sm:$0xff]
  %v132 = vld [vmem:[%s0 + $0x1a8] sm:$0xff]
  %v133 = vld [vmem:[%s0 + $0x1b0] sm:$0xff]
  %v134 = vld [vmem:[%s0 + $0x1b8] sm:$0xff]
  %v135 = vld [vmem:[%s0 + $0x1c0] sm:$0xff]
  %v136 = vld [vmem:[%s0 + $0x1c8] sm:$0xff]
  %v137 = vld [vmem:[%s0 + $0x1d0] sm:$0xff]
  %v138 = vld [vmem:[%s0 + $0x1d8] sm:$0xff]
  %v139 = vld [vmem:[%s0 + $0x1e0] sm:$0xff]
  %v140 = vld [vmem:[%s0 + $0x1e8] sm:$0xff]
  %v141 = vld [vmem:[%s0 + $0x1f0] sm:$0xff]
  %v142 = vld [vmem:[%s0 + $0x1f8] sm:$0xff]
  %v143 = vld [vmem:[%s1] sm:$0xff]
  %v144 = vld [vmem:[%s1 + $0x8] sm:$0xff]
  %v145 = vld [vmem:[%s1 + $0x10] sm:$0xff]
  %v146 = vld [vmem:[%s1 + $0x18] sm:$0xff]
  %v147 = vld [vmem:[%s1 + $0x20] sm:$0xff]
  %v148 = vld [vmem:[%s1 + $0x28] sm:$0xff]
  %v149 = vld [vmem:[%s1 + $0x30] sm:$0xff]
  %v150 = vld [vmem:[%s1 + $0x38] sm:$0xff]
  %v151 = vld [vmem:[%s1 + $0x40] sm:$0xff]
  %v152 = vld [vmem:[%s1 + $0x48] sm:$0xff]
  %v153 = vld [vmem:[%s1 + $0x50] sm:$0xff]
  %v154 = vld [vmem:[%s1 + $0x58] sm:$0xff]
  %v155 = vld [vmem:[%s1 + $0x60] sm:$0xff]
  %v156 = vld [vmem:[%s1 + $0x68] sm:$0xff]
  %v157 = vld [vmem:[%s1 + $0x70] sm:$0xff]
  %v158 = vld [vmem:[%s1 + $0x78] sm:$0xff]
  %v159 = vld [vmem:[%s1 + $0x80] sm:$0xff]
  %v160 = vld [vmem:[%s1 + $0x88] sm:$0xff]
  %v161 = vld [vmem:[%s1 + $0x90] sm:$0xff]
  %v162 = vld [vmem:[%s1 + $0x98] sm:$0xff]
  %v163 = vld [vmem:[%s1 + $0xa0] sm:$0xff]
  %v164 = vld [vmem:[%s1 + $0xa8] sm:$0xff]
  %v165 = vld [vmem:[%s1 + $0xb0] sm:$0xff]
  %v166 = vld [vmem:[%s1 + $0xb8] sm:$0xff]
  %v167 = vld [vmem:[%s1 + $0xc0] sm:$0xff]
  %v168 = vld [vmem:[%s1 + $0xc8] sm:$0xff]
  %v169 = vld [vmem:[%s1 + $0xd0] sm:$0xff]
  %v170 = vld [vmem:[%s1 + $0xd8] sm:$0xff]
  %v171 = vld [vmem:[%s1 + $0xe0] sm:$0xff]
  %v172 = vld [vmem:[%s1 + $0xe8] sm:$0xff]
  %v173 = vld [vmem:[%s1 + $0xf0] sm:$0xff]
  %v174 = vld [vmem:[%s1 + $0xf8] sm:$0xff]
  %175 = vmatprep.subr.mxu0 0.0
  %176 = vmatpush1.msra.mxu0 %v158
  %177 = vmatprep.subr.mxu0 0.0
  %178 = vmatpush1.msra.mxu0 %v157
  %179 = vmatprep.subr.mxu0 0.0
  %180 = vmatpush1.msra.mxu0 %v156
  %181 = vmatprep.subr.mxu0 0.0
  %182 = vmatpush1.msra.mxu0 %v155
  %183 = vmatprep.subr.mxu0 0.0
  %184 = vmatpush1.msra.mxu0 %v154
  %185 = vmatprep.subr.mxu0 0.0
  %186 = vmatpush1.msra.mxu0 %v153
  %187 = vmatprep.subr.mxu0 0.0
  %188 = vmatpush1.msra.mxu0 %v152
  %189 = vmatprep.subr.mxu0 0.0
  %190 = vmatpush1.msra.mxu0 %v151
  %191 = vmatprep.subr.mxu0 0.0
  %192 = vmatpush1.msra.mxu0 %v150
  %193 = vmatprep.subr.mxu0 0.0
  %194 = vmatpush1.msra.mxu0 %v149
  %195 = vmatprep.subr.mxu0 0.0
  %196 = vmatpush1.msra.mxu0 %v148
  %197 = vmatprep.subr.mxu0 0.0
  %198 = vmatpush1.msra.mxu0 %v147
  %199 = vmatprep.subr.mxu0 0.0
  %200 = vmatpush1.msra.mxu0 %v146
  %201 = vmatprep.subr.mxu0 0.0
  %202 = vmatpush1.msra.mxu0 %v145
  %203 = vmatprep.subr.mxu0 0.0
  %204 = vmatpush1.msra.mxu0 %v144
  %205 = vmatprep.subr.mxu0 0.0
  %206 = vmatpush1.msra.mxu0 %v143
  %207 = vmatprep.subr.mxu0 0.0
  %208 = vmatpush2.msra.mxu0 %v174
  %209 = vmatprep.subr.mxu0 0.0
  %210 = vmatpush2.msra.mxu0 %v173
  %211 = vmatprep.subr.mxu0 0.0
  %212 = vmatpush2.msra.mxu0 %v172
  %213 = vmatprep.subr.mxu0 0.0
  %214 = vmatpush2.msra.mxu0 %v171
  %215 = vmatprep.subr.mxu0 0.0
  %216 = vmatpush2.msra.mxu0 %v170
  %217 = vmatprep.subr.mxu0 0.0
  %218 = vmatpush2.msra.mxu0 %v169
  %219 = vmatprep.subr.mxu0 0.0
  %220 = vmatpush2.msra.mxu0 %v168
  %221 = vmatprep.subr.mxu0 0.0
  %222 = vmatpush2.msra.mxu0 %v167
  %223 = vmatprep.subr.mxu0 0.0
  %224 = vmatpush2.msra.mxu0 %v166
  %225 = vmatprep.subr.mxu0 0.0
  %226 = vmatpush2.msra.mxu0 %v165
  %227 = vmatprep.subr.mxu0 0.0
  %228 = vmatpush2.msra.mxu0 %v164
  %229 = vmatprep.subr.mxu0 0.0
  %230 = vmatpush2.msra.mxu0 %v163
  %231 = vmatprep.subr.mxu0 0.0
  %232 = vmatpush2.msra.mxu0 %v162
  %233 = vmatprep.subr.mxu0 0.0
  %234 = vmatpush2.msra.mxu0 %v161
  %235 = vmatprep.subr.mxu0 0.0
  %236 = vmatpush2.msra.mxu0 %v160
  %237 = vmatprep.subr.mxu0 0.0
  %238 = vmatpush2.msra.mxu0 %v159
  %239 = vmatprep.mubr.f32.mxu0 %v80
  %240 = vmatmul.mubr.f32.gmra.mxu0 %v79
  %v241 = vpop.f32.mrf.mxu0
  %v242 = vadd.f32 0.0, %v241
  %v243 = vpop.f32.mrf.mxu0
  %244 = vmatprep.mubr.f32.mxu0 %v82
  %245 = vmatmul.mubr.f32.gmra.mxu0 %v81
  %v246 = vpop.f32.mrf.mxu0
  %v247 = vadd.f32 0.0, %v246
  %v248 = vpop.f32.mrf.mxu0
  %249 = vmatprep.mubr.f32.mxu0 %v84
  %250 = vmatmul.mubr.f32.gmra.mxu0 %v83
  %v251 = vpop.f32.mrf.mxu0
  %v252 = vadd.f32 0.0, %v251
  %v253 = vpop.f32.mrf.mxu0
  %254 = vmatprep.mubr.f32.mxu0 %v86
  %255 = vmatmul.mubr.f32.gmra.mxu0 %v85
  %v256 = vpop.f32.mrf.mxu0
  %v257 = vadd.f32 0.0, %v256
  %v258 = vpop.f32.mrf.mxu0
  %259 = vmatprep.mubr.f32.mxu0 %v88
  %260 = vmatmul.mubr.f32.gmra.mxu0 %v87
  %v261 = vpop.f32.mrf.mxu0
  %v262 = vadd.f32 0.0, %v261
  %v263 = vpop.f32.mrf.mxu0
  %264 = vmatprep.mubr.f32.mxu0 %v90
  %265 = vmatmul.mubr.f32.gmra.mxu0 %v89
  %v266 = vpop.f32.mrf.mxu0
  %v267 = vadd.f32 0.0, %v266
  %v268 = vpop.f32.mrf.mxu0
  %269 = vmatprep.mubr.f32.mxu0 %v92
  %270 = vmatmul.mubr.f32.gmra.mxu0 %v91
  %v271 = vpop.f32.mrf.mxu0
  %v272 = vadd.f32 0.0, %v271
  %v273 = vpop.f32.mrf.mxu0
  %274 = vmatprep.mubr.f32.mxu0 %v94
  %275 = vmatmul.mubr.f32.gmra.mxu0 %v93
  %v276 = vpop.f32.mrf.mxu0
  %v277 = vadd.f32 0.0, %v276
  %v278 = vpop.f32.mrf.mxu0
  %279 = vmatprep.mubr.f32.mxu0 %v96
  %280 = vmatmul.mubr.f32.gmra.mxu0 %v95
  %v281 = vpop.f32.mrf.mxu0
  %v282 = vadd.f32 0.0, %v281
  %v283 = vpop.f32.mrf.mxu0
  %284 = vmatprep.mubr.f32.mxu0 %v98
  %285 = vmatmul.mubr.f32.gmra.mxu0 %v97
  %v286 = vpop.f32.mrf.mxu0
  %v287 = vadd.f32 0.0, %v286
  %v288 = vpop.f32.mrf.mxu0
  %289 = vmatprep.mubr.f32.mxu0 %v100
  %290 = vmatmul.mubr.f32.gmra.mxu0 %v99
  %v291 = vpop.f32.mrf.mxu0
  %v292 = vadd.f32 0.0, %v291
  %v293 = vpop.f32.mrf.mxu0
  %294 = vmatprep.mubr.f32.mxu0 %v102
  %295 = vmatmul.mubr.f32.gmra.mxu0 %v101
  %v296 = vpop.f32.mrf.mxu0
  %v297 = vadd.f32 0.0, %v296
  %v298 = vpop.f32.mrf.mxu0
  %299 = vmatprep.mubr.f32.mxu0 %v104
  %300 = vmatmul.mubr.f32.gmra.mxu0 %v103
  %v301 = vpop.f32.mrf.mxu0
  %v302 = vadd.f32 0.0, %v301
  %v303 = vpop.f32.mrf.mxu0
  %304 = vmatprep.mubr.f32.mxu0 %v106
  %305 = vmatmul.mubr.f32.gmra.mxu0 %v105
  %v306 = vpop.f32.mrf.mxu0
  %v307 = vadd.f32 0.0, %v306
  %v308 = vpop.f32.mrf.mxu0
  %309 = vmatprep.mubr.f32.mxu0 %v108
  %310 = vmatmul.mubr.f32.gmra.mxu0 %v107
  %v311 = vpop.f32.mrf.mxu0
  %v312 = vadd.f32 0.0, %v311
  %v313 = vpop.f32.mrf.mxu0
  %314 = vmatprep.mubr.f32.mxu0 %v110
  %315 = vmatmul.mubr.f32.gmra.mxu0 %v109
  %v316 = vpop.f32.mrf.mxu0
  %v317 = vadd.f32 0.0, %v316
  %v318 = vpop.f32.mrf.mxu0
  %319 = vmatprep.mubr.f32.mxu0 %v112
  %320 = vmatmul.mubr.f32.gmra.mxu0 %v111
  %v321 = vpop.f32.mrf.mxu0
  %v322 = vadd.f32 0.0, %v321
  %v323 = vpop.f32.mrf.mxu0
  %324 = vmatprep.mubr.f32.mxu0 %v114
  %325 = vmatmul.mubr.f32.gmra.mxu0 %v113
  %v326 = vpop.f32.mrf.mxu0
  %v327 = vadd.f32 0.0, %v326
  %v328 = vpop.f32.mrf.mxu0
  %329 = vmatprep.mubr.f32.mxu0 %v116
  %330 = vmatmul.mubr.f32.gmra.mxu0 %v115
  %v331 = vpop.f32.mrf.mxu0
  %v332 = vadd.f32 0.0, %v331
  %v333 = vpop.f32.mrf.mxu0
  %334 = vmatprep.mubr.f32.mxu0 %v118
  %335 = vmatmul.mubr.f32.gmra.mxu0 %v117
  %v336 = vpop.f32.mrf.mxu0
  %v337 = vadd.f32 0.0, %v336
  %v338 = vpop.f32.mrf.mxu0
  %339 = vmatprep.mubr.f32.mxu0 %v120
  %340 = vmatmul.mubr.f32.gmra.mxu0 %v119
  %v341 = vpop.f32.mrf.mxu0
  %v342 = vadd.f32 0.0, %v341
  %v343 = vpop.f32.mrf.mxu0
  %344 = vmatprep.mubr.f32.mxu0 %v122
  %345 = vmatmul.mubr.f32.gmra.mxu0 %v121
  %v346 = vpop.f32.mrf.mxu0
  %v347 = vadd.f32 0.0, %v346
  %v348 = vpop.f32.mrf.mxu0
  %349 = vmatprep.mubr.f32.mxu0 %v124
  %350 = vmatmul.mubr.f32.gmra.mxu0 %v123
  %v351 = vpop.f32.mrf.mxu0
  %v352 = vadd.f32 0.0, %v351
  %v353 = vpop.f32.mrf.mxu0
  %354 = vmatprep.mubr.f32.mxu0 %v126
  %355 = vmatmul.mubr.f32.gmra.mxu0 %v125
  %v356 = vpop.f32.mrf.mxu0
  %v357 = vadd.f32 0.0, %v356
  %v358 = vpop.f32.mrf.mxu0
  %359 = vmatprep.mubr.f32.mxu0 %v128
  %360 = vmatmul.mubr.f32.gmra.mxu0 %v127
  %v361 = vpop.f32.mrf.mxu0
  %v362 = vadd.f32 0.0, %v361
  %v363 = vpop.f32.mrf.mxu0
  %364 = vmatprep.mubr.f32.mxu0 %v130
  %365 = vmatmul.mubr.f32.gmra.mxu0 %v129
  %v366 = vpop.f32.mrf.mxu0
  %v367 = vadd.f32 0.0, %v366
  %v368 = vpop.f32.mrf.mxu0
  %369 = vmatprep.mubr.f32.mxu0 %v132
  %370 = vmatmul.mubr.f32.gmra.mxu0 %v131
  %v371 = vpop.f32.mrf.mxu0
  %v372 = vadd.f32 0.0, %v371
  %v373 = vpop.f32.mrf.mxu0
  %374 = vmatprep.mubr.f32.mxu0 %v134
  %375 = vmatmul.mubr.f32.gmra.mxu0 %v133
  %v376 = vpop.f32.mrf.mxu0
  %v377 = vadd.f32 0.0, %v376
  %v378 = vpop.f32.mrf.mxu0
  %379 = vmatprep.mubr.f32.mxu0 %v136
  %380 = vmatmul.mubr.f32.gmra.mxu0 %v135
  %v381 = vpop.f32.mrf.mxu0
  %v382 = vadd.f32 0.0, %v381
  %v383 = vpop.f32.mrf.mxu0
  %384 = vmatprep.mubr.f32.mxu0 %v138
  %385 = vmatmul.mubr.f32.gmra.mxu0 %v137
  %v386 = vpop.f32.mrf.mxu0
  %v387 = vadd.f32 0.0, %v386
  %v388 = vpop.f32.mrf.mxu0
  %389 = vmatprep.mubr.f32.mxu0 %v140
  %390 = vmatmul.mubr.f32.gmra.mxu0 %v139
  %v391 = vpop.f32.mrf.mxu0
  %v392 = vadd.f32 0.0, %v391
  %v393 = vpop.f32.mrf.mxu0
  %394 = vmatprep.mubr.f32.mxu0 %v142
  %395 = vmatmul.mubr.f32.gmra.mxu0 %v141
  %v396 = vpop.f32.mrf.mxu0
  %v397 = vadd.f32 0.0, %v396
  %v398 = vpop.f32.mrf.mxu0
  %399 = vdwg.mxu0
  %v400 = vadd.f32 %v47, %v242
  %v401 = vadd.f32 %v48, %v247
  %v402 = vadd.f32 %v49, %v252
  %v403 = vadd.f32 %v50, %v257
  %v404 = vadd.f32 %v51, %v262
  %v405 = vadd.f32 %v52, %v267
  %v406 = vadd.f32 %v53, %v272
  %v407 = vadd.f32 %v54, %v277
  %v408 = vadd.f32 %v55, %v282
  %v409 = vadd.f32 %v56, %v287
  %v410 = vadd.f32 %v57, %v292
  %v411 = vadd.f32 %v58, %v297
  %v412 = vadd.f32 %v59, %v302
  %v413 = vadd.f32 %v60, %v307
  %v414 = vadd.f32 %v61, %v312
  %v415 = vadd.f32 %v62, %v317
  %v416 = vadd.f32 %v63, %v322
  %v417 = vadd.f32 %v64, %v327
  %v418 = vadd.f32 %v65, %v332
  %v419 = vadd.f32 %v66, %v337
  %v420 = vadd.f32 %v67, %v342
  %v421 = vadd.f32 %v68, %v347
  %v422 = vadd.f32 %v69, %v352
  %v423 = vadd.f32 %v70, %v357
  %v424 = vadd.f32 %v71, %v362
  %v425 = vadd.f32 %v72, %v367
  %v426 = vadd.f32 %v73, %v372
  %v427 = vadd.f32 %v74, %v377
  %v428 = vadd.f32 %v75, %v382
  %v429 = vadd.f32 %v76, %v387
  %v430 = vadd.f32 %v77, %v392
  %v431 = vadd.f32 %v78, %v397
  %432 = vst [vmem:[#allocation2] sm:$0xff] %v400
  %433 = vst [vmem:[#allocation2 + $0x8] sm:$0xff] %v401
  %434 = vst [vmem:[#allocation2 + $0x10] sm:$0xff] %v402
  %435 = vst [vmem:[#allocation2 + $0x18] sm:$0xff] %v403
  %436 = vst [vmem:[#allocation2 + $0x20] sm:$0xff] %v404
  %437 = vst [vmem:[#allocation2 + $0x28] sm:$0xff] %v405
  %438 = vst [vmem:[#allocation2 + $0x30] sm:$0xff] %v406
  %439 = vst [vmem:[#allocation2 + $0x38] sm:$0xff] %v407
  %440 = vst [vmem:[#allocation2 + $0x40] sm:$0xff] %v408
  %441 = vst [vmem:[#allocation2 + $0x48] sm:$0xff] %v409
  %442 = vst [vmem:[#allocation2 + $0x50] sm:$0xff] %v410
  %443 = vst [vmem:[#allocation2 + $0x58] sm:$0xff] %v411
  %444 = vst [vmem:[#allocation2 + $0x60] sm:$0xff] %v412
  %445 = vst [vmem:[#allocation2 + $0x68] sm:$0xff] %v413
  %446 = vst [vmem:[#allocation2 + $0x70] sm:$0xff] %v414
  %447 = vst [vmem:[#allocation2 + $0x78] sm:$0xff] %v415
  %448 = vst [vmem:[#allocation2 + $0x80] sm:$0xff] %v416
  %449 = vst [vmem:[#allocation2 + $0x88] sm:$0xff] %v417
  %450 = vst [vmem:[#allocation2 + $0x90] sm:$0xff] %v418
  %451 = vst [vmem:[#allocation2 + $0x98] sm:$0xff] %v419
  %452 = vst [vmem:[#allocation2 + $0xa0] sm:$0xff] %v420
  %453 = vst [vmem:[#allocation2 + $0xa8] sm:$0xff] %v421
  %454 = vst [vmem:[#allocation2 + $0xb0] sm:$0xff] %v422
  %455 = vst [vmem:[#allocation2 + $0xb8] sm:$0xff] %v423
  %456 = vst [vmem:[#allocation2 + $0xc0] sm:$0xff] %v424
  %457 = vst [vmem:[#allocation2 + $0xc8] sm:$0xff] %v425
  %458 = vst [vmem:[#allocation2 + $0xd0] sm:$0xff] %v426
  %459 = vst [vmem:[#allocation2 + $0xd8] sm:$0xff] %v427
  %460 = vst [vmem:[#allocation2 + $0xe0] sm:$0xff] %v428
  %461 = vst [vmem:[#allocation2 + $0xe8] sm:$0xff] %v429
  %462 = vst [vmem:[#allocation2 + $0xf0] sm:$0xff] %v430
  %463 = vst [vmem:[#allocation2 + $0xf8] sm:$0xff] %v431
  // Predicated region
  $region14: #{run.11} parent=0 // pred_check
    %p464 = pneg %p11
  $region15: #{run.11} parent=0 // pred_check_branch
    %466 = sbr.rel (%p464) target = $region17
  $region16: #{run.11} parent=0 // pred_region
    %v467 = vld [vmem:[#allocation2] sm:$0xff]
    %v468 = vld [vmem:[#allocation2 + $0x8] sm:$0xff]
    %v469 = vld [vmem:[#allocation2 + $0x10] sm:$0xff]
    %v470 = vld [vmem:[#allocation2 + $0x18] sm:$0xff]
    %v471 = vld [vmem:[#allocation2 + $0x20] sm:$0xff]
    %v472 = vld [vmem:[#allocation2 + $0x28] sm:$0xff]
    %v473 = vld [vmem:[#allocation2 + $0x30] sm:$0xff]
    %v474 = vld [vmem:[#allocation2 + $0x38] sm:$0xff]
    %v475 = vld [vmem:[#allocation2 + $0x40] sm:$0xff]
    %v476 = vld [vmem:[#allocation2 + $0x48] sm:$0xff]
    %v477 = vld [vmem:[#allocation2 + $0x50] sm:$0xff]
    %v478 = vld [vmem:[#allocation2 + $0x58] sm:$0xff]
    %v479 = vld [vmem:[#allocation2 + $0x60] sm:$0xff]
    %v480 = vld [vmem:[#allocation2 + $0x68] sm:$0xff]
    %v481 = vld [vmem:[#allocation2 + $0x70] sm:$0xff]
    %v482 = vld [vmem:[#allocation2 + $0x78] sm:$0xff]
    %v483 = vld [vmem:[#allocation2 + $0x80] sm:$0xff]
    %v484 = vld [vmem:[#allocation2 + $0x88] sm:$0xff]
    %v485 = vld [vmem:[#allocation2 + $0x90] sm:$0xff]
    %v486 = vld [vmem:[#allocation2 + $0x98] sm:$0xff]
    %v487 = vld [vmem:[#allocation2 + $0xa0] sm:$0xff]
    %v488 = vld [vmem:[#allocation2 + $0xa8] sm:$0xff]
    %v489 = vld [vmem:[#allocation2 + $0xb0] sm:$0xff]
    %v490 = vld [vmem:[#allocation2 + $0xb8] sm:$0xff]
    %v491 = vld [vmem:[#allocation2 + $0xc0] sm:$0xff]
    %v492 = vld [vmem:[#allocation2 + $0xc8] sm:$0xff]
    %v493 = vld [vmem:[#allocation2 + $0xd0] sm:$0xff]
    %v494 = vld [vmem:[#allocation2 + $0xd8] sm:$0xff]
    %v495 = vld [vmem:[#allocation2 + $0xe0] sm:$0xff]
    %v496 = vld [vmem:[#allocation2 + $0xe8] sm:$0xff]
    %v497 = vld [vmem:[#allocation2 + $0xf0] sm:$0xff]
    %v498 = vld [vmem:[#allocation2 + $0xf8] sm:$0xff]
    %499 = vst [vmem:[%s2] sm:$0xff] %v467
    %500 = vst [vmem:[%s2 + $0x8] sm:$0xff] %v468
    %501 = vst [vmem:[%s2 + $0x10] sm:$0xff] %v469
    %502 = vst [vmem:[%s2 + $0x18] sm:$0xff] %v470
    %503 = vst [vmem:[%s2 + $0x20] sm:$0xff] %v471
    %504 = vst [vmem:[%s2 + $0x28] sm:$0xff] %v472
    %505 = vst [vmem:[%s2 + $0x30] sm:$0xff] %v473
    %506 = vst [vmem:[%s2 + $0x38] sm:$0xff] %v474
    %507 = vst [vmem:[%s2 + $0x40] sm:$0xff] %v475
    %508 = vst [vmem:[%s2 + $0x48] sm:$0xff] %v476
    %509 = vst [vmem:[%s2 + $0x50] sm:$0xff] %v477
    %510 = vst [vmem:[%s2 + $0x58] sm:$0xff] %v478
    %511 = vst [vmem:[%s2 + $0x60] sm:$0xff] %v479
    %512 = vst [vmem:[%s2 + $0x68] sm:$0xff] %v480
    %513 = vst [vmem:[%s2 + $0x70] sm:$0xff] %v481
    %514 = vst [vmem:[%s2 + $0x78] sm:$0xff] %v482
    %515 = vst [vmem:[%s2 + $0x80] sm:$0xff] %v483
    %516 = vst [vmem:[%s2 + $0x88] sm:$0xff] %v484
    %517 = vst [vmem:[%s2 + $0x90] sm:$0xff] %v485
    %518 = vst [vmem:[%s2 + $0x98] sm:$0xff] %v486
    %519 = vst [vmem:[%s2 + $0xa0] sm:$0xff] %v487
    %520 = vst [vmem:[%s2 + $0xa8] sm:$0xff] %v488
    %521 = vst [vmem:[%s2 + $0xb0] sm:$0xff] %v489
    %522 = vst [vmem:[%s2 + $0xb8] sm:$0xff] %v490
    %523 = vst [vmem:[%s2 + $0xc0] sm:$0xff] %v491
    %524 = vst [vmem:[%s2 + $0xc8] sm:$0xff] %v492
    %525 = vst [vmem:[%s2 + $0xd0] sm:$0xff] %v493
    %526 = vst [vmem:[%s2 + $0xd8] sm:$0xff] %v494
    %527 = vst [vmem:[%s2 + $0xe0] sm:$0xff] %v495
    %528 = vst [vmem:[%s2 + $0xe8] sm:$0xff] %v496
    %529 = vst [vmem:[%s2 + $0xf0] sm:$0xff] %v497
    %530 = vst [vmem:[%s2 + $0xf8] sm:$0xff] %v498
  $region17: #{run.11} parent=0 // pred_fallthru
    _
  // Predicated region
  $region18: #{run.11} parent=0 // pred_check
    _
  $region19: #{run.11} parent=0 // pred_check_branch
    %532 = sbr.rel (0) target = $region21
  $region20: #{run.11} parent=0 // pred_region
    _
  $region21: #{run.11} parent=0 // pred_fallthru
    _
  // Predicated region
  $region22: #{run.11} parent=0 // pred_check
    _
  $region23: #{run.11} parent=0 // pred_check_branch
    %534 = sbr.rel (0) target = $region25
  $region24: #{run.11} parent=0 // pred_region
    _
  $region25: #{run.11} parent=0 // pred_fallthru
    _

// kernel: run.13
$region0: #{run.13}
  #allocation0 [shape = 'u32[]', space=smem, size = 0x4, offset = 0x4, fixed_abs, tag = 'smem constant byte address 0x4 - core index']
  #allocation1 [shape = 'u32[144,128]{1,0:T(1,128)}', space=vmem, size = 0x12000, scoped, tag = 'internal scratch']
  %s0 = inlined_call_operand.vmem [shape: f32[512,128], index: 0, kind: input, shape index: {}]
  %s1 = inlined_call_operand.vmem [shape: f32[1,128], index: 1, kind: output, shape index: {}]
  %s2 = sld [smem:[#allocation0]]
  $region18: #{run.13} parent=0
    _
  %s4 = ssub.s32 1, %s2
  %s5 = scalar_select 0, %s4, %s2
  // Predicated region
  $region2: #{run.13} parent=0 // pred_check
    _
  $region3: #{run.13} parent=0 // pred_check_branch
    %7 = sbr.rel (0) target = $region5
  $region4: #{run.13} parent=0 // pred_region
    _
  $region5: #{run.13} parent=0 // pred_fallthru
    _
  %p8 = scmp.eq.s32.totalorder 0, 0
  // Predicated region
  $region6: #{run.13} parent=0 // pred_check
    %p9 = pneg %p8
  $region7: #{run.13} parent=0 // pred_check_branch
    %11 = sbr.rel (%p9) target = $region9
  $region8: #{run.13} parent=0 // pred_region
    %12 = vst [vmem:[%s1] sm:$0x1] 0.0
  $region9: #{run.13} parent=0 // pred_fallthru
    _
  %v13 = vld [vmem:[%s1] sm:$0x1]
  %v14 = vld [vmem:[%s0] sm:$0xff]
  %v15 = vld [vmem:[%s0 + $0x8] sm:$0xff]
  %v16 = vld [vmem:[%s0 + $0x10] sm:$0xff]
  %v17 = vld [vmem:[%s0 + $0x18] sm:$0xff]
  %v18 = vld [vmem:[%s0 + $0x20] sm:$0xff]
  %v19 = vld [vmem:[%s0 + $0x28] sm:$0xff]
  %v20 = vld [vmem:[%s0 + $0x30] sm:$0xff]
  %v21 = vld [vmem:[%s0 + $0x38] sm:$0xff]
  %v22 = vld [vmem:[%s0 + $0x40] sm:$0xff]
  %v23 = vld [vmem:[%s0 + $0x48] sm:$0xff]
  %v24 = vld [vmem:[%s0 + $0x50] sm:$0xff]
  %v25 = vld [vmem:[%s0 + $0x58] sm:$0xff]
  %v26 = vld [vmem:[%s0 + $0x60] sm:$0xff]
  %v27 = vld [vmem:[%s0 + $0x68] sm:$0xff]
  %v28 = vld [vmem:[%s0 + $0x70] sm:$0xff]
  %v29 = vld [vmem:[%s0 + $0x78] sm:$0xff]
  %v30 = vld [vmem:[%s0 + $0x80] sm:$0xff]
  %v31 = vld [vmem:[%s0 + $0x88] sm:$0xff]
  %v32 = vld [vmem:[%s0 + $0x90] sm:$0xff]
  %v33 = vld [vmem:[%s0 + $0x98] sm:$0xff]
  %v34 = vld [vmem:[%s0 + $0xa0] sm:$0xff]
  %v35 = vld [vmem:[%s0 + $0xa8] sm:$0xff]
  %v36 = vld [vmem:[%s0 + $0xb0] sm:$0xff]
  %v37 = vld [vmem:[%s0 + $0xb8] sm:$0xff]
  %v38 = vld [vmem:[%s0 + $0xc0] sm:$0xff]
  %v39 = vld [vmem:[%s0 + $0xc8] sm:$0xff]
  %v40 = vld [vmem:[%s0 + $0xd0] sm:$0xff]
  %v41 = vld [vmem:[%s0 + $0xd8] sm:$0xff]
  %v42 = vld [vmem:[%s0 + $0xe0] sm:$0xff]
  %v43 = vld [vmem:[%s0 + $0xe8] sm:$0xff]
  %v44 = vld [vmem:[%s0 + $0xf0] sm:$0xff]
  %v45 = vld [vmem:[%s0 + $0xf8] sm:$0xff]
  %v46 = vld [vmem:[%s0 + $0x100] sm:$0xff]
  %v47 = vld [vmem:[%s0 + $0x108] sm:$0xff]
  %v48 = vld [vmem:[%s0 + $0x110] sm:$0xff]
  %v49 = vld [vmem:[%s0 + $0x118] sm:$0xff]
  %v50 = vld [vmem:[%s0 + $0x120] sm:$0xff]
  %v51 = vld [vmem:[%s0 + $0x128] sm:$0xff]
  %v52 = vld [vmem:[%s0 + $0x130] sm:$0xff]
  %v53 = vld [vmem:[%s0 + $0x138] sm:$0xff]
  %v54 = vld [vmem:[%s0 + $0x140] sm:$0xff]
  %v55 = vld [vmem:[%s0 + $0x148] sm:$0xff]
  %v56 = vld [vmem:[%s0 + $0x150] sm:$0xff]
  %v57 = vld [vmem:[%s0 + $0x158] sm:$0xff]
  %v58 = vld [vmem:[%s0 + $0x160] sm:$0xff]
  %v59 = vld [vmem:[%s0 + $0x168] sm:$0xff]
  %v60 = vld [vmem:[%s0 + $0x170] sm:$0xff]
  %v61 = vld [vmem:[%s0 + $0x178] sm:$0xff]
  %v62 = vld [vmem:[%s0 + $0x180] sm:$0xff]
  %v63 = vld [vmem:[%s0 + $0x188] sm:$0xff]
  %v64 = vld [vmem:[%s0 + $0x190] sm:$0xff]
  %v65 = vld [vmem:[%s0 + $0x198] sm:$0xff]
  %v66 = vld [vmem:[%s0 + $0x1a0] sm:$0xff]
  %v67 = vld [vmem:[%s0 + $0x1a8] sm:$0xff]
  %v68 = vld [vmem:[%s0 + $0x1b0] sm:$0xff]
  %v69 = vld [vmem:[%s0 + $0x1b8] sm:$0xff]
  %v70 = vld [vmem:[%s0 + $0x1c0] sm:$0xff]
  %v71 = vld [vmem:[%s0 + $0x1c8] sm:$0xff]
  %v72 = vld [vmem:[%s0 + $0x1d0] sm:$0xff]
  %v73 = vld [vmem:[%s0 + $0x1d8] sm:$0xff]
  %v74 = vld [vmem:[%s0 + $0x1e0] sm:$0xff]
  %v75 = vld [vmem:[%s0 + $0x1e8] sm:$0xff]
  %v76 = vld [vmem:[%s0 + $0x1f0] sm:$0xff]
  %v77 = vld [vmem:[%s0 + $0x1f8] sm:$0xff]
  %v78 = vand.u32 2147483647, %v14
  %v79 = vand.u32 2147483647, %v15
  %v80 = vand.u32 2147483647, %v16
  %v81 = vand.u32 2147483647, %v17
  %v82 = vand.u32 2147483647, %v18
  %v83 = vand.u32 2147483647, %v19
  %v84 = vand.u32 2147483647, %v20
  %v85 = vand.u32 2147483647, %v21
  %v86 = vand.u32 2147483647, %v22
  %v87 = vand.u32 2147483647, %v23
  %v88 = vand.u32 2147483647, %v24
  %v89 = vand.u32 2147483647, %v25
  %v90 = vand.u32 2147483647, %v26
  %v91 = vand.u32 2147483647, %v27
  %v92 = vand.u32 2147483647, %v28
  %v93 = vand.u32 2147483647, %v29
  %v94 = vand.u32 2147483647, %v30
  %v95 = vand.u32 2147483647, %v31
  %v96 = vand.u32 2147483647, %v32
  %v97 = vand.u32 2147483647, %v33
  %v98 = vand.u32 2147483647, %v34
  %v99 = vand.u32 2147483647, %v35
  %v100 = vand.u32 2147483647, %v36
  %v101 = vand.u32 2147483647, %v37
  %v102 = vand.u32 2147483647, %v38
  %v103 = vand.u32 2147483647, %v39
  %v104 = vand.u32 2147483647, %v40
  %v105 = vand.u32 2147483647, %v41
  %v106 = vand.u32 2147483647, %v42
  %v107 = vand.u32 2147483647, %v43
  %v108 = vand.u32 2147483647, %v44
  %v109 = vand.u32 2147483647, %v45
  %v110 = vand.u32 2147483647, %v46
  %v111 = vand.u32 2147483647, %v47
  %v112 = vand.u32 2147483647, %v48
  %v113 = vand.u32 2147483647, %v49
  %v114 = vand.u32 2147483647, %v50
  %v115 = vand.u32 2147483647, %v51
  %v116 = vand.u32 2147483647, %v52
  %v117 = vand.u32 2147483647, %v53
  %v118 = vand.u32 2147483647, %v54
  %v119 = vand.u32 2147483647, %v55
  %v120 = vand.u32 2147483647, %v56
  %v121 = vand.u32 2147483647, %v57
  %v122 = vand.u32 2147483647, %v58
  %v123 = vand.u32 2147483647, %v59
  %v124 = vand.u32 2147483647, %v60
  %v125 = vand.u32 2147483647, %v61
  %v126 = vand.u32 2147483647, %v62
  %v127 = vand.u32 2147483647, %v63
  %v128 = vand.u32 2147483647, %v64
  %v129 = vand.u32 2147483647, %v65
  %v130 = vand.u32 2147483647, %v66
  %v131 = vand.u32 2147483647, %v67
  %v132 = vand.u32 2147483647, %v68
  %v133 = vand.u32 2147483647, %v69
  %v134 = vand.u32 2147483647, %v70
  %v135 = vand.u32 2147483647, %v71
  %v136 = vand.u32 2147483647, %v72
  %v137 = vand.u32 2147483647, %v73
  %v138 = vand.u32 2147483647, %v74
  %v139 = vand.u32 2147483647, %v75
  %v140 = vand.u32 2147483647, %v76
  %v141 = vand.u32 2147483647, %v77
  %v142 = vadd.f32 %v78, %v79
  %v143 = vadd.f32 %v142, %v80
  %v144 = vadd.f32 %v143, %v81
  %v145 = vadd.f32 %v144, %v82
  %v146 = vadd.f32 %v145, %v83
  %v147 = vadd.f32 %v146, %v84
  %v148 = vadd.f32 %v147, %v85
  %v149 = vadd.f32 %v148, %v86
  %v150 = vadd.f32 %v149, %v87
  %v151 = vadd.f32 %v150, %v88
  %v152 = vadd.f32 %v151, %v89
  %v153 = vadd.f32 %v152, %v90
  %v154 = vadd.f32 %v153, %v91
  %v155 = vadd.f32 %v154, %v92
  %v156 = vadd.f32 %v155, %v93
  %v157 = vadd.f32 %v156, %v94
  %v158 = vadd.f32 %v157, %v95
  %v159 = vadd.f32 %v158, %v96
  %v160 = vadd.f32 %v159, %v97
  %v161 = vadd.f32 %v160, %v98
  %v162 = vadd.f32 %v161, %v99
  %v163 = vadd.f32 %v162, %v100
  %v164 = vadd.f32 %v163, %v101
  %v165 = vadd.f32 %v164, %v102
  %v166 = vadd.f32 %v165, %v103
  %v167 = vadd.f32 %v166, %v104
  %v168 = vadd.f32 %v167, %v105
  %v169 = vadd.f32 %v168, %v106
  %v170 = vadd.f32 %v169, %v107
  %v171 = vadd.f32 %v170, %v108
  %v172 = vadd.f32 %v171, %v109
  %v173 = vadd.f32 %v172, %v110
  %v174 = vadd.f32 %v173, %v111
  %v175 = vadd.f32 %v174, %v112
  %v176 = vadd.f32 %v175, %v113
  %v177 = vadd.f32 %v176, %v114
  %v178 = vadd.f32 %v177, %v115
  %v179 = vadd.f32 %v178, %v116
  %v180 = vadd.f32 %v179, %v117
  %v181 = vadd.f32 %v180, %v118
  %v182 = vadd.f32 %v181, %v119
  %v183 = vadd.f32 %v182, %v120
  %v184 = vadd.f32 %v183, %v121
  %v185 = vadd.f32 %v184, %v122
  %v186 = vadd.f32 %v185, %v123
  %v187 = vadd.f32 %v186, %v124
  %v188 = vadd.f32 %v187, %v125
  %v189 = vadd.f32 %v188, %v126
  %v190 = vadd.f32 %v189, %v127
  %v191 = vadd.f32 %v190, %v128
  %v192 = vadd.f32 %v191, %v129
  %v193 = vadd.f32 %v192, %v130
  %v194 = vadd.f32 %v193, %v131
  %v195 = vadd.f32 %v194, %v132
  %v196 = vadd.f32 %v195, %v133
  %v197 = vadd.f32 %v196, %v134
  %v198 = vadd.f32 %v197, %v135
  %v199 = vadd.f32 %v198, %v136
  %v200 = vadd.f32 %v199, %v137
  %v201 = vadd.f32 %v200, %v138
  %v202 = vadd.f32 %v201, %v139
  %v203 = vadd.f32 %v202, %v140
  %v204 = vadd.f32 %v203, %v141
  %v205 = vrot.slane %v204, 4
  %v206 = vadd.f32 %v204, %v205
  %v207 = vrot.slane %v206, 2
  %v208 = vadd.f32 %v206, %v207
  %v209 = vrot.slane %v208, 1
  %v210 = vadd.f32 %v208, %v209
  %v211 = vadd.f32 %v13, %v210
  %212 = vst [vmem:[%s1] sm:$0x1] %v211
  // Predicated region
  $region10: #{run.13} parent=0 // pred_check
    _
  $region11: #{run.13} parent=0 // pred_check_branch
    %214 = sbr.rel (0) target = $region13
  $region12: #{run.13} parent=0 // pred_region
    _
  $region13: #{run.13} parent=0 // pred_fallthru
    _
  // Predicated region
  $region14: #{run.13} parent=0 // pred_check
    _
  $region15: #{run.13} parent=0 // pred_check_branch
    %216 = sbr.rel (0) target = $region17
  $region16: #{run.13} parent=0 // pred_region
    _
  $region17: #{run.13} parent=0 // pred_fallthru
    _

// kernel: run.15
$region0: #{run.15}
  #allocation0 [shape = 'u32[]', space=smem, size = 0x4, offset = 0x4, fixed_abs, tag = 'smem constant byte address 0x4 - core index']
  #allocation1 [shape = 'u32[144,128]{1,0:T(1,128)}', space=vmem, size = 0x12000, scoped, tag = 'internal scratch']
  #allocation2 [shape = 'f32[8,128]{1,0:T(8,128)}', space=vmem, size = 0x1000, scoped, tag = 'scratch operand']
  %s0 = inlined_call_operand.vmem [shape: f32[8,128], index: 0, kind: input, shape index: {}]
  %s1 = inlined_call_operand.vmem [shape: f32[128,128], index: 1, kind: input, shape index: {}]
  %s2 = inlined_call_operand.vmem [shape: f32[1,128], index: 2, kind: input, shape index: {}]
  %s3 = inlined_call_operand.vmem [shape: f32[8,128], index: 3, kind: output, shape index: {}]
  %s4 = sld [smem:[#allocation0]]
  $region30: #{run.15} parent=0
    _
  %s6 = ssub.s32 1, %s4
  %s7 = scalar_select 0, %s6, %s4
  // Predicated region
  $region2: #{run.15} parent=0 // pred_check
    _
  $region3: #{run.15} parent=0 // pred_check_branch
    %9 = sbr.rel (0) target = $region5
  $region4: #{run.15} parent=0 // pred_region
    _
  $region5: #{run.15} parent=0 // pred_fallthru
    _
  // Predicated region
  $region6: #{run.15} parent=0 // pred_check
    _
  $region7: #{run.15} parent=0 // pred_check_branch
    %11 = sbr.rel (0) target = $region9
  $region8: #{run.15} parent=0 // pred_region
    _
  $region9: #{run.15} parent=0 // pred_fallthru
    _
  // Predicated region
  $region10: #{run.15} parent=0 // pred_check
    _
  $region11: #{run.15} parent=0 // pred_check_branch
    %13 = sbr.rel (0) target = $region13
  $region12: #{run.15} parent=0 // pred_region
    _
  $region13: #{run.15} parent=0 // pred_fallthru
    _
  %p14 = scmp.eq.s32.totalorder 0, 0
  // Predicated region
  $region14: #{run.15} parent=0 // pred_check
    %p15 = pneg %p14
  $region15: #{run.15} parent=0 // pred_check_branch
    %17 = sbr.rel (%p15) target = $region17
  $region16: #{run.15} parent=0 // pred_region
    %18 = vst [vmem:[#allocation2] sm:$0xff] 0.0
  $region17: #{run.15} parent=0 // pred_fallthru
    _
  %v19 = vld [vmem:[#allocation2] sm:$0xff]
  %v20 = vld [vmem:[%s0] sm:$0xff]
  %v21 = vld [vmem:[%s1] sm:$0xff]
  %v22 = vld [vmem:[%s1 + $0x8] sm:$0xff]
  %v23 = vld [vmem:[%s1 + $0x10] sm:$0xff]
  %v24 = vld [vmem:[%s1 + $0x18] sm:$0xff]
  %v25 = vld [vmem:[%s1 + $0x20] sm:$0xff]
  %v26 = vld [vmem:[%s1 + $0x28] sm:$0xff]
  %v27 = vld [vmem:[%s1 + $0x30] sm:$0xff]
  %v28 = vld [vmem:[%s1 + $0x38] sm:$0xff]
  %v29 = vld [vmem:[%s1 + $0x40] sm:$0xff]
  %v30 = vld [vmem:[%s1 + $0x48] sm:$0xff]
  %v31 = vld [vmem:[%s1 + $0x50] sm:$0xff]
  %v32 = vld [vmem:[%s1 + $0x58] sm:$0xff]
  %v33 = vld [vmem:[%s1 + $0x60] sm:$0xff]
  %v34 = vld [vmem:[%s1 + $0x68] sm:$0xff]
  %v35 = vld [vmem:[%s1 + $0x70] sm:$0xff]
  %v36 = vld [vmem:[%s1 + $0x78] sm:$0xff]
  %37 = vmatprep.subr.mxu0 0.0
  %38 = vmatpush1.msra.mxu0 %v36
  %39 = vmatprep.subr.mxu0 0.0
  %40 = vmatpush1.msra.mxu0 %v35
  %41 = vmatprep.subr.mxu0 0.0
  %42 = vmatpush1.msra.mxu0 %v34
  %43 = vmatprep.subr.mxu0 0.0
  %44 = vmatpush1.msra.mxu0 %v33
  %45 = vmatprep.subr.mxu0 0.0
  %46 = vmatpush1.msra.mxu0 %v32
  %47 = vmatprep.subr.mxu0 0.0
  %48 = vmatpush1.msra.mxu0 %v31
  %49 = vmatprep.subr.mxu0 0.0
  %50 = vmatpush1.msra.mxu0 %v30
  %51 = vmatprep.subr.mxu0 0.0
  %52 = vmatpush1.msra.mxu0 %v29
  %53 = vmatprep.subr.mxu0 0.0
  %54 = vmatpush1.msra.mxu0 %v28
  %55 = vmatprep.subr.mxu0 0.0
  %56 = vmatpush1.msra.mxu0 %v27
  %57 = vmatprep.subr.mxu0 0.0
  %58 = vmatpush1.msra.mxu0 %v26
  %59 = vmatprep.subr.mxu0 0.0
  %60 = vmatpush1.msra.mxu0 %v25
  %61 = vmatprep.subr.mxu0 0.0
  %62 = vmatpush1.msra.mxu0 %v24
  %63 = vmatprep.subr.mxu0 0.0
  %64 = vmatpush1.msra.mxu0 %v23
  %65 = vmatprep.subr.mxu0 0.0
  %66 = vmatpush1.msra.mxu0 %v22
  %67 = vmatprep.subr.mxu0 0.0
  %68 = vmatpush1.msra.mxu0 %v21
  %69 = vmatprep.subr.mxu0 0.0
  %70 = vmatpush2.msra.mxu0 0.0
  %71 = vmatprep.subr.mxu0 0.0
  %72 = vmatpush2.msra.mxu0 0.0
  %73 = vmatprep.subr.mxu0 0.0
  %74 = vmatpush2.msra.mxu0 0.0
  %75 = vmatprep.subr.mxu0 0.0
  %76 = vmatpush2.msra.mxu0 0.0
  %77 = vmatprep.subr.mxu0 0.0
  %78 = vmatpush2.msra.mxu0 0.0
  %79 = vmatprep.subr.mxu0 0.0
  %80 = vmatpush2.msra.mxu0 0.0
  %81 = vmatprep.subr.mxu0 0.0
  %82 = vmatpush2.msra.mxu0 0.0
  %83 = vmatprep.subr.mxu0 0.0
  %84 = vmatpush2.msra.mxu0 0.0
  %85 = vmatprep.subr.mxu0 0.0
  %86 = vmatpush2.msra.mxu0 0.0
  %87 = vmatprep.subr.mxu0 0.0
  %88 = vmatpush2.msra.mxu0 0.0
  %89 = vmatprep.subr.mxu0 0.0
  %90 = vmatpush2.msra.mxu0 0.0
  %91 = vmatprep.subr.mxu0 0.0
  %92 = vmatpush2.msra.mxu0 0.0
  %93 = vmatprep.subr.mxu0 0.0
  %94 = vmatpush2.msra.mxu0 0.0
  %95 = vmatprep.subr.mxu0 0.0
  %96 = vmatpush2.msra.mxu0 0.0
  %97 = vmatprep.subr.mxu0 0.0
  %98 = vmatpush2.msra.mxu0 0.0
  %99 = vmatprep.subr.mxu0 0.0
  %100 = vmatpush2.msra.mxu0 0.0
  %101 = vmatprep.mubr.f32.mxu0 0.0
  %102 = vmatmul.mubr.f32.gmra.mxu0 %v20
  %v103 = vpop.f32.mrf.mxu0
  %v104 = vadd.f32 0.0, %v103
  %v105 = vpop.f32.mrf.mxu0
  %106 = vdwg.mxu0
  %v107 = vadd.f32 %v19, %v104
  %108 = vst [vmem:[#allocation2] sm:$0xff] %v107
  // Predicated region
  $region18: #{run.15} parent=0 // pred_check
    %p109 = pneg %p14
  $region19: #{run.15} parent=0 // pred_check_branch
    %111 = sbr.rel (%p109) target = $region21
  $region20: #{run.15} parent=0 // pred_region
    %v112 = vld [vmem:[#allocation2] sm:$0xff]
    %v113 = vld [vmem:[%s2] sm:$0x1]
    %v115 = vlaneseq
    %v116 = vshrl.u32 %v115, 7
    %v117 = vsub.s32 0, %v116
    %v118 = vrot.slane %v113, %v117
    %v120 = vadd.f32 %v112, %v118
    %121 = vst [vmem:[%s3] sm:$0xff] %v120
  $region21: #{run.15} parent=0 // pred_fallthru
    _
  // Predicated region
  $region22: #{run.15} parent=0 // pred_check
    _
  $region23: #{run.15} parent=0 // pred_check_branch
    %123 = sbr.rel (0) target = $region25
  $region24: #{run.15} parent=0 // pred_region
    _
  $region25: #{run.15} parent=0 // pred_fallthru
    _
  // Predicated region
  $region26: #{run.15} parent=0 // pred_check
    _
  $region27: #{run.15} parent=0 // pred_check_branch
    %125 = sbr.rel (0) target = $region29
  $region28: #{run.15} parent=0 // pred_region
    _
  $region29: #{run.15} parent=0 // pred_fallthru
    _

// kernel: run.14
$region0: #{run.14}
  #allocation0 [shape = 'u32[]', space=smem, size = 0x4, offset = 0x4, fixed_abs, tag = 'smem constant byte address 0x4 - core index']
  #allocation1 [shape = 'u32[144,128]{1,0:T(1,128)}', space=vmem, size = 0x12000, scoped, tag = 'internal scratch']
  #allocation2 [shape = 'f32[256,128]{1,0:T(8,128)}', space=vmem, size = 0x20000, scoped, tag = 'scratch operand']
  %s0 = inlined_call_operand.vmem [shape: f32[512,128], index: 0, kind: input, shape index: {}]
  %s1 = inlined_call_operand.vmem [shape: f32[128,128], index: 1, kind: input, shape index: {}]
  %s2 = inlined_call_operand.vmem [shape: f32[512,128], index: 2, kind: output, shape index: {}]
  %s3 = sld [smem:[#allocation0]]
  $region49: #{run.14} parent=0
    _
  %s5 = ssub.s32 1, %s3
  %s6 = scalar_select 0, %s5, %s3
  loop: start=0, step=1, limit=4
  $region2: #{run.14} parent=0 // loop_pre_header
    _
  $region3: #{run.14} parent=0 // loop_header
    %s8 = sphi 0, %s12
    %p9 = scmp.ge.s32.totalorder %s8, 4
    %s15 = sphi 0, %s34
    %s16 = sphi 0, %s30
    %s17 = sphi 0, %s26
    %s18 = sphi 0, %s15
    %s19 = sphi 0, %s16
    %s20 = sphi 0, %s17
    %s21 = sphi 0, %s18
    %s22 = sphi 0, %s19
    %s23 = sphi 0, %s20
    %s39 = sphi 0, %s41
    %s42 = sphi 0, %s39
    %s43 = sphi 0, %s42
    %s59 = sphi 0, %s43
    %s67 = sphi 0, %s69
    %s70 = sphi 0, %s67
    %s71 = sphi 0, %s70
    %s87 = sphi 0, %s71
    %s95 = sphi 0, %s97
    %s98 = sphi 0, %s95
    %s99 = sphi 0, %s98
    %s115 = sphi 0, %s99
  $region4: #{run.14} parent=0 // loop_header_branch
    %11 = sbr.rel (%p9) target = $region8
  $region5: #{run.14} parent=0 // loop_body
    %s13 = ssub.s32 %s8, 1
    %s14 = ssub.s32 %s8, 2
    %s24 = sadd.s32 1, %s17
    %p25 = scmp.ge.s32.totalorder %s24, 1
    %s26 = scalar_select %p25, 0, %s24
    %s27 = sadd.s32 1, %s16
    %s28 = scalar_select %p25, %s27, %s16
    %p29 = scmp.ge.s32.totalorder %s28, 1
    %s30 = scalar_select %p29, 0, %s28
    %s31 = sadd.s32 1, %s15
    %s32 = scalar_select %p29, %s31, %s15
    %p33 = scmp.ge.s32.totalorder %s32, 2
    %s34 = scalar_select %p33, 0, %s32
    %s35 = ssub.s32 %s15, %s34
    %s36 = ssub.s32 %s17, %s26
    %s37 = sor.u32 %s35, %s36
    %p38 = scmp.eq.s32.totalorder %s37, 0
    %s40 = sadd.s32 %s39, 1
    %s41 = scalar_select %p38, %s39, %s40
    %p44 = pneg %p38
    %p45 = scmp.eq.s32.totalorder %s8, 1
    %p46 = por %p44, %p45
    %p47 = scmp.ne.s32.totalorder %s39, %s42
    %p48 = scmp.eq.s32.totalorder %s8, 0
    %p49 = por %p47, %p48
    %p50 = scmp.ne.s32.totalorder %s39, %s42
    %p51 = scmp.eq.s32.totalorder %s13, 1
    %p52 = por %p50, %p51
    %p53 = scmp.ne.s32.totalorder %s42, %s43
    %p54 = scmp.eq.s32.totalorder %s13, 0
    %p55 = por %p53, %p54
    %p56 = scmp.ne.s32.totalorder %s42, %s43
    %p57 = scmp.eq.s32.totalorder %s14, 1
    %p58 = por %p56, %p57
    %p60 = scmp.ne.s32.totalorder %s43, %s59
    %p61 = scmp.eq.s32.totalorder %s14, 0
    %p62 = por %p60, %p61
    %s63 = ssub.s32 %s17, %s26
    %s64 = ssub.s32 %s16, %s30
    %s65 = sor.u32 %s63, %s64
    %p66 = scmp.eq.s32.totalorder %s65, 0
    %s68 = sadd.s32 %s67, 1
    %s69 = scalar_select %p66, %s67, %s68
    %p72 = pneg %p66
    %p73 = scmp.eq.s32.totalorder %s8, 1
    %p74 = por %p72, %p73
    %p75 = scmp.ne.s32.totalorder %s67, %s70
    %p76 = scmp.eq.s32.totalorder %s8, 0
    %p77 = por %p75, %p76
    %p78 = scmp.ne.s32.totalorder %s67, %s70
    %p79 = scmp.eq.s32.totalorder %s13, 1
    %p80 = por %p78, %p79
    %p81 = scmp.ne.s32.totalorder %s70, %s71
    %p82 = scmp.eq.s32.totalorder %s13, 0
    %p83 = por %p81, %p82
    %p84 = scmp.ne.s32.totalorder %s70, %s71
    %p85 = scmp.eq.s32.totalorder %s14, 1
    %p86 = por %p84, %p85
    %p88 = scmp.ne.s32.totalorder %s71, %s87
    %p89 = scmp.eq.s32.totalorder %s14, 0
    %p90 = por %p88, %p89
    %s91 = ssub.s32 %s15, %s34
    %s92 = ssub.s32 %s16, %s30
    %s93 = sor.u32 %s91, %s92
    %p94 = scmp.eq.s32.totalorder %s93, 0
    %s96 = sadd.s32 %s95, 1
    %s97 = scalar_select %p94, %s95, %s96
    %p100 = pneg %p94
    %p101 = scmp.eq.s32.totalorder %s8, 1
    %p102 = por %p100, %p101
    %p103 = scmp.ne.s32.totalorder %s95, %s98
    %p104 = scmp.eq.s32.totalorder %s8, 0
    %p105 = por %p103, %p104
    %p106 = scmp.ne.s32.totalorder %s95, %s98
    %p107 = scmp.eq.s32.totalorder %s13, 1
    %p108 = por %p106, %p107
    %p109 = scmp.ne.s32.totalorder %s98, %s99
    %p110 = scmp.eq.s32.totalorder %s13, 0
    %p111 = por %p109, %p110
    %p112 = scmp.ne.s32.totalorder %s98, %s99
    %p113 = scmp.eq.s32.totalorder %s14, 1
    %p114 = por %p112, %p113
    %p116 = scmp.ne.s32.totalorder %s99, %s115
    %p117 = scmp.eq.s32.totalorder %s14, 0
    %p118 = por %p116, %p117
    %p119 = scmp.le.s32.totalorder 1, %s8
    %p120 = scmp.lt.s32.totalorder %s8, 3
    %p121 = pnand %p119, %p120
    %p122 = pneg %p121
    // Predicated region
    $region9: #{run.14} parent=5 // pred_check
      _
    $region10: #{run.14} parent=5 // pred_check_branch
      %124 = sbr.rel (%p121) target = $region12
    $region11: #{run.14} parent=5 // pred_region
      %s125 = ssub.s32 %s8, 1
      // Predicated region
      $region13: #{run.14} parent=11 // pred_check
        %p126 = pneg %p83
      $region14: #{run.14} parent=11 // pred_check_branch
        %128 = sbr.rel (%p126) target = $region16
      $region15: #{run.14} parent=11 // pred_region
        %s129 = smul.u32 16, %s20
        %p130 = scmp.lt.s32.totalorder %s129, 15
        %s131 = scalar_select %p130, %s129, 15
        %p132 = scmp.lt.s32.totalorder %s19, 0
        %s133 = scalar_select %p132, %s19, 0
        %s134 = sadd.s32 %s133, %s131
        %s135 = smul.addr %s134, 8
        %s136 = scalar_lea.vmem %s1, %s135
        %s137 = smul.u32 16, %s20
      $region16: #{run.14} parent=11 // pred_fallthru
        _
    $region12: #{run.14} parent=5 // pred_fallthru
      _
    %p138 = scmp.lt.s32.totalorder %s8, 2
    // Predicated region
    $region17: #{run.14} parent=5 // pred_check
      %p139 = pneg %p138
    $region18: #{run.14} parent=5 // pred_check_branch
      %141 = sbr.rel (%p139) target = $region20
    $region19: #{run.14} parent=5 // pred_region
      // Predicated region
      $region21: #{run.14} parent=19 // pred_check
        %p142 = pneg %p49
      $region22: #{run.14} parent=19 // pred_check_branch
        %144 = sbr.rel (%p142) target = $region24
      $region23: #{run.14} parent=19 // pred_region
        %s145 = smul.u32 32, %s15
        %p146 = scmp.lt.s32.totalorder %s145, 63
        %s147 = scalar_select %p146, %s145, 63
        %p148 = scmp.lt.s32.totalorder %s17, 0
        %s149 = scalar_select %p148, %s17, 0
        %s150 = sadd.s32 %s149, %s147
        %s151 = smul.addr %s150, 8
        %s152 = scalar_lea.vmem %s0, %s151
        %s153 = smul.u32 32, %s15
      $region24: #{run.14} parent=19 // pred_fallthru
        _
    $region20: #{run.14} parent=5 // pred_fallthru
      _
    %p154 = scmp.le.s32.totalorder 1, %s8
    %p155 = scmp.lt.s32.totalorder %s8, 3
    %p156 = pnand %p154, %p155
    %p157 = pneg %p156
    // Predicated region
    $region25: #{run.14} parent=5 // pred_check
      _
    $region26: #{run.14} parent=5 // pred_check_branch
      %159 = sbr.rel (%p156) target = $region28
    $region27: #{run.14} parent=5 // pred_region
      %s160 = ssub.s32 %s8, 1
      %s161 = smul.u32 32, %s18
      %p162 = scmp.lt.s32.totalorder %s161, 63
      %s163 = scalar_select %p162, %s161, 63
      %p164 = scmp.lt.s32.totalorder %s20, 0
      %s165 = scalar_select %p164, %s20, 0
      %s166 = sadd.s32 %s165, %s163
      %s167 = smul.addr %s166, 8
      %s168 = scalar_lea.vmem %s0, %s167
      %p169 = pneg %p55
      %p170 = pneg %p52
      %s171 = smul.u32 16, %s20
      %p172 = scmp.lt.s32.totalorder %s171, 15
      %s173 = scalar_select %p172, %s171, 15
      %p174 = scmp.lt.s32.totalorder %s19, 0
      %s175 = scalar_select %p174, %s19, 0
      %s176 = sadd.s32 %s175, %s173
      %s177 = smul.addr %s176, 8
      %s178 = scalar_lea.vmem %s1, %s177
      %p179 = pneg %p83
      %p180 = pneg %p80
      %p181 = pneg %p111
      %p182 = pneg %p108
      %s183 = smul.u32 32, %s18
      %p184 = scmp.lt.s32.totalorder %s183, 63
      %s185 = scalar_select %p184, %s183, 63
      %p186 = scmp.lt.s32.totalorder %s19, 0
      %s187 = scalar_select %p186, %s19, 0
      %s188 = sadd.s32 %s187, %s185
      %s189 = smul.addr %s188, 8
      %s190 = scalar_lea.vmem %s2, %s189
      %s191 = smul.u32 32, %s18
      %p192 = scmp.lt.s32.totalorder %s191, 63
      %s193 = scalar_select %p192, %s191, 63
      %p194 = scmp.lt.s32.totalorder %s20, 0
      %s195 = scalar_select %p194, %s20, 0
      %s196 = sadd.s32 %s195, %s193
      %s197 = smul.addr %s196, 8
      %s198 = scalar_lea.vmem %s0, %s197
      %s199 = smul.u32 32, %s18
      %s200 = smul.u32 16, %s20
      %p201 = scmp.lt.s32.totalorder %s200, 15
      %s202 = scalar_select %p201, %s200, 15
      %p203 = scmp.lt.s32.totalorder %s19, 0
      %s204 = scalar_select %p203, %s19, 0
      %s205 = sadd.s32 %s204, %s202
      %s206 = smul.addr %s205, 8
      %s207 = scalar_lea.vmem %s1, %s206
      %s208 = smul.u32 16, %s20
      %s209 = smul.u32 32, %s18
      %p210 = scmp.lt.s32.totalorder %s209, 63
      %s211 = scalar_select %p210, %s209, 63
      %p212 = scmp.lt.s32.totalorder %s19, 0
      %s213 = scalar_select %p212, %s19, 0
      %s214 = sadd.s32 %s213, %s211
      %s215 = smul.addr %s214, 8
      %s216 = scalar_lea.vmem %s2, %s215
      %s217 = smul.u32 32, %s18
      %p218 = scmp.eq.s32.totalorder %s20, 0
      // Predicated region
      $region29: #{run.14} parent=27 // pred_check
        %p219 = pneg %p218
      $region30: #{run.14} parent=27 // pred_check_branch
        %221 = sbr.rel (%p219) target = $region32
      $region31: #{run.14} parent=27 // pred_region
        %222 = vst [vmem:[#allocation2] sm:$0xff] 0.0
        %223 = vst [vmem:[#allocation2 + $0x8] sm:$0xff] 0.0
        %224 = vst [vmem:[#allocation2 + $0x10] sm:$0xff] 0.0
        %225 = vst [vmem:[#allocation2 + $0x18] sm:$0xff] 0.0
        %226 = vst [vmem:[#allocation2 + $0x20] sm:$0xff] 0.0
        %227 = vst [vmem:[#allocation2 + $0x28] sm:$0xff] 0.0
        %228 = vst [vmem:[#allocation2 + $0x30] sm:$0xff] 0.0
        %229 = vst [vmem:[#allocation2 + $0x38] sm:$0xff] 0.0
        %230 = vst [vmem:[#allocation2 + $0x40] sm:$0xff] 0.0
        %231 = vst [vmem:[#allocation2 + $0x48] sm:$0xff] 0.0
        %232 = vst [vmem:[#allocation2 + $0x50] sm:$0xff] 0.0
        %233 = vst [vmem:[#allocation2 + $0x58] sm:$0xff] 0.0
        %234 = vst [vmem:[#allocation2 + $0x60] sm:$0xff] 0.0
        %235 = vst [vmem:[#allocation2 + $0x68] sm:$0xff] 0.0
        %236 = vst [vmem:[#allocation2 + $0x70] sm:$0xff] 0.0
        %237 = vst [vmem:[#allocation2 + $0x78] sm:$0xff] 0.0
        %238 = vst [vmem:[#allocation2 + $0x80] sm:$0xff] 0.0
        %239 = vst [vmem:[#allocation2 + $0x88] sm:$0xff] 0.0
        %240 = vst [vmem:[#allocation2 + $0x90] sm:$0xff] 0.0
        %241 = vst [vmem:[#allocation2 + $0x98] sm:$0xff] 0.0
        %242 = vst [vmem:[#allocation2 + $0xa0] sm:$0xff] 0.0
        %243 = vst [vmem:[#allocation2 + $0xa8] sm:$0xff] 0.0
        %244 = vst [vmem:[#allocation2 + $0xb0] sm:$0xff] 0.0
        %245 = vst [vmem:[#allocation2 + $0xb8] sm:$0xff] 0.0
        %246 = vst [vmem:[#allocation2 + $0xc0] sm:$0xff] 0.0
        %247 = vst [vmem:[#allocation2 + $0xc8] sm:$0xff] 0.0
        %248 = vst [vmem:[#allocation2 + $0xd0] sm:$0xff] 0.0
        %249 = vst [vmem:[#allocation2 + $0xd8] sm:$0xff] 0.0
        %250 = vst [vmem:[#allocation2 + $0xe0] sm:$0xff] 0.0
        %251 = vst [vmem:[#allocation2 + $0xe8] sm:$0xff] 0.0
        %252 = vst [vmem:[#allocation2 + $0xf0] sm:$0xff] 0.0
        %253 = vst [vmem:[#allocation2 + $0xf8] sm:$0xff] 0.0
      $region32: #{run.14} parent=27 // pred_fallthru
        _
      %v254 = vld [vmem:[#allocation2] sm:$0xff]
      %v255 = vld [vmem:[#allocation2 + $0x8] sm:$0xff]
      %v256 = vld [vmem:[#allocation2 + $0x10] sm:$0xff]
      %v257 = vld [vmem:[#allocation2 + $0x18] sm:$0xff]
      %v258 = vld [vmem:[#allocation2 + $0x20] sm:$0xff]
      %v259 = vld [vmem:[#allocation2 + $0x28] sm:$0xff]
      %v260 = vld [vmem:[#allocation2 + $0x30] sm:$0xff]
      %v261 = vld [vmem:[#allocation2 + $0x38] sm:$0xff]
      %v262 = vld [vmem:[#allocation2 + $0x40] sm:$0xff]
      %v263 = vld [vmem:[#allocation2 + $0x48] sm:$0xff]
      %v264 = vld [vmem:[#allocation2 + $0x50] sm:$0xff]
      %v265 = vld [vmem:[#allocation2 + $0x58] sm:$0xff]
      %v266 = vld [vmem:[#allocation2 + $0x60] sm:$0xff]
      %v267 = vld [vmem:[#allocation2 + $0x68] sm:$0xff]
      %v268 = vld [vmem:[#allocation2 + $0x70] sm:$0xff]
      %v269 = vld [vmem:[#allocation2 + $0x78] sm:$0xff]
      %v270 = vld [vmem:[#allocation2 + $0x80] sm:$0xff]
      %v271 = vld [vmem:[#allocation2 + $0x88] sm:$0xff]
      %v272 = vld [vmem:[#allocation2 + $0x90] sm:$0xff]
      %v273 = vld [vmem:[#allocation2 + $0x98] sm:$0xff]
      %v274 = vld [vmem:[#allocation2 + $0xa0] sm:$0xff]
      %v275 = vld [vmem:[#allocation2 + $0xa8] sm:$0xff]
      %v276 = vld [vmem:[#allocation2 + $0xb0] sm:$0xff]
      %v277 = vld [vmem:[#allocation2 + $0xb8] sm:$0xff]
      %v278 = vld [vmem:[#allocation2 + $0xc0] sm:$0xff]
      %v279 = vld [vmem:[#allocation2 + $0xc8] sm:$0xff]
      %v280 = vld [vmem:[#allocation2 + $0xd0] sm:$0xff]
      %v281 = vld [vmem:[#allocation2 + $0xd8] sm:$0xff]
      %v282 = vld [vmem:[#allocation2 + $0xe0] sm:$0xff]
      %v283 = vld [vmem:[#allocation2 + $0xe8] sm:$0xff]
      %v284 = vld [vmem:[#allocation2 + $0xf0] sm:$0xff]
      %v285 = vld [vmem:[#allocation2 + $0xf8] sm:$0xff]
      %v286 = vld [vmem:[%s198] sm:$0xff]
      %v287 = vld [vmem:[%s198 + $0x8] sm:$0xff]
      %v288 = vld [vmem:[%s198 + $0x10] sm:$0xff]
      %v289 = vld [vmem:[%s198 + $0x18] sm:$0xff]
      %v290 = vld [vmem:[%s198 + $0x20] sm:$0xff]
      %v291 = vld [vmem:[%s198 + $0x28] sm:$0xff]
      %v292 = vld [vmem:[%s198 + $0x30] sm:$0xff]
      %v293 = vld [vmem:[%s198 + $0x38] sm:$0xff]
      %v294 = vld [vmem:[%s198 + $0x40] sm:$0xff]
      %v295 = vld [vmem:[%s198 + $0x48] sm:$0xff]
      %v296 = vld [vmem:[%s198 + $0x50] sm:$0xff]
      %v297 = vld [vmem:[%s198 + $0x58] sm:$0xff]
      %v298 = vld [vmem:[%s198 + $0x60] sm:$0xff]
      %v299 = vld [vmem:[%s198 + $0x68] sm:$0xff]
      %v300 = vld [vmem:[%s198 + $0x70] sm:$0xff]
      %v301 = vld [vmem:[%s198 + $0x78] sm:$0xff]
      %v302 = vld [vmem:[%s198 + $0x80] sm:$0xff]
      %v303 = vld [vmem:[%s198 + $0x88] sm:$0xff]
      %v304 = vld [vmem:[%s198 + $0x90] sm:$0xff]
      %v305 = vld [vmem:[%s198 + $0x98] sm:$0xff]
      %v306 = vld [vmem:[%s198 + $0xa0] sm:$0xff]
      %v307 = vld [vmem:[%s198 + $0xa8] sm:$0xff]
      %v308 = vld [vmem:[%s198 + $0xb0] sm:$0xff]
      %v309 = vld [vmem:[%s198 + $0xb8] sm:$0xff]
      %v310 = vld [vmem:[%s198 + $0xc0] sm:$0xff]
      %v311 = vld [vmem:[%s198 + $0xc8] sm:$0xff]
      %v312 = vld [vmem:[%s198 + $0xd0] sm:$0xff]
      %v313 = vld [vmem:[%s198 + $0xd8] sm:$0xff]
      %v314 = vld [vmem:[%s198 + $0xe0] sm:$0xff]
      %v315 = vld [vmem:[%s198 + $0xe8] sm:$0xff]
      %v316 = vld [vmem:[%s198 + $0xf0] sm:$0xff]
      %v317 = vld [vmem:[%s198 + $0xf8] sm:$0xff]
      %v318 = vld [vmem:[%s207] sm:$0xff]
      %v319 = vld [vmem:[%s207 + $0x8] sm:$0xff]
      %v320 = vld [vmem:[%s207 + $0x10] sm:$0xff]
      %v321 = vld [vmem:[%s207 + $0x18] sm:$0xff]
      %v322 = vld [vmem:[%s207 + $0x20] sm:$0xff]
      %v323 = vld [vmem:[%s207 + $0x28] sm:$0xff]
      %v324 = vld [vmem:[%s207 + $0x30] sm:$0xff]
      %v325 = vld [vmem:[%s207 + $0x38] sm:$0xff]
      %v326 = vld [vmem:[%s207 + $0x40] sm:$0xff]
      %v327 = vld [vmem:[%s207 + $0x48] sm:$0xff]
      %v328 = vld [vmem:[%s207 + $0x50] sm:$0xff]
      %v329 = vld [vmem:[%s207 + $0x58] sm:$0xff]
      %v330 = vld [vmem:[%s207 + $0x60] sm:$0xff]
      %v331 = vld [vmem:[%s207 + $0x68] sm:$0xff]
      %v332 = vld [vmem:[%s207 + $0x70] sm:$0xff]
      %v333 = vld [vmem:[%s207 + $0x78] sm:$0xff]
      %334 = vmatprep.subr.mxu0 0.0
      %335 = vmatpush1.msra.mxu0 %v333
      %336 = vmatprep.subr.mxu0 0.0
      %337 = vmatpush1.msra.mxu0 %v332
      %338 = vmatprep.subr.mxu0 0.0
      %339 = vmatpush1.msra.mxu0 %v331
      %340 = vmatprep.subr.mxu0 0.0
      %341 = vmatpush1.msra.mxu0 %v330
      %342 = vmatprep.subr.mxu0 0.0
      %343 = vmatpush1.msra.mxu0 %v329
      %344 = vmatprep.subr.mxu0 0.0
      %345 = vmatpush1.msra.mxu0 %v328
      %346 = vmatprep.subr.mxu0 0.0
      %347 = vmatpush1.msra.mxu0 %v327
      %348 = vmatprep.subr.mxu0 0.0
      %349 = vmatpush1.msra.mxu0 %v326
      %350 = vmatprep.subr.mxu0 0.0
      %351 = vmatpush1.msra.mxu0 %v325
      %352 = vmatprep.subr.mxu0 0.0
      %353 = vmatpush1.msra.mxu0 %v324
      %354 = vmatprep.subr.mxu0 0.0
      %355 = vmatpush1.msra.mxu0 %v323
      %356 = vmatprep.subr.mxu0 0.0
      %357 = vmatpush1.msra.mxu0 %v322
      %358 = vmatprep.subr.mxu0 0.0
      %359 = vmatpush1.msra.mxu0 %v321
      %360 = vmatprep.subr.mxu0 0.0
      %361 = vmatpush1.msra.mxu0 %v320
      %362 = vmatprep.subr.mxu0 0.0
      %363 = vmatpush1.msra.mxu0 %v319
      %364 = vmatprep.subr.mxu0 0.0
      %365 = vmatpush1.msra.mxu0 %v318
      %366 = vmatprep.subr.mxu0 0.0
      %367 = vmatpush2.msra.mxu0 0.0
      %368 = vmatprep.subr.mxu0 0.0
      %369 = vmatpush2.msra.mxu0 0.0
      %370 = vmatprep.subr.mxu0 0.0
      %371 = vmatpush2.msra.mxu0 0.0
      %372 = vmatprep.subr.mxu0 0.0
      %373 = vmatpush2.msra.mxu0 0.0
      %374 = vmatprep.subr.mxu0 0.0
      %375 = vmatpush2.msra.mxu0 0.0
      %376 = vmatprep.subr.mxu0 0.0
      %377 = vmatpush2.msra.mxu0 0.0
      %378 = vmatprep.subr.mxu0 0.0
      %379 = vmatpush2.msra.mxu0 0.0
      %380 = vmatprep.subr.mxu0 0.0
      %381 = vmatpush2.msra.mxu0 0.0
      %382 = vmatprep.subr.mxu0 0.0
      %383 = vmatpush2.msra.mxu0 0.0
      %384 = vmatprep.subr.mxu0 0.0
      %385 = vmatpush2.msra.mxu0 0.0
      %386 = vmatprep.subr.mxu0 0.0
      %387 = vmatpush2.msra.mxu0 0.0
      %388 = vmatprep.subr.mxu0 0.0
      %389 = vmatpush2.msra.mxu0 0.0
      %390 = vmatprep.subr.mxu0 0.0
      %391 = vmatpush2.msra.mxu0 0.0
      %392 = vmatprep.subr.mxu0 0.0
      %393 = vmatpush2.msra.mxu0 0.0
      %394 = vmatprep.subr.mxu0 0.0
      %395 = vmatpush2.msra.mxu0 0.0
      %396 = vmatprep.subr.mxu0 0.0
      %397 = vmatpush2.msra.mxu0 0.0
      %398 = vmatprep.mubr.f32.mxu0 0.0
      %399 = vmatmul.mubr.f32.gmra.mxu0 %v286
      %v400 = vpop.f32.mrf.mxu0
      %v401 = vadd.f32 0.0, %v400
      %v402 = vpop.f32.mrf.mxu0
      %403 = vmatprep.mubr.f32.mxu0 0.0
      %404 = vmatmul.mubr.f32.gmra.mxu0 %v287
      %v405 = vpop.f32.mrf.mxu0
      %v406 = vadd.f32 0.0, %v405
      %v407 = vpop.f32.mrf.mxu0
      %408 = vmatprep.mubr.f32.mxu0 0.0
      %409 = vmatmul.mubr.f32.gmra.mxu0 %v288
      %v410 = vpop.f32.mrf.mxu0
      %v411 = vadd.f32 0.0, %v410
      %v412 = vpop.f32.mrf.mxu0
      %413 = vmatprep.mubr.f32.mxu0 0.0
      %414 = vmatmul.mubr.f32.gmra.mxu0 %v289
      %v415 = vpop.f32.mrf.mxu0
      %v416 = vadd.f32 0.0, %v415
      %v417 = vpop.f32.mrf.mxu0
      %418 = vmatprep.mubr.f32.mxu0 0.0
      %419 = vmatmul.mubr.f32.gmra.mxu0 %v290
      %v420 = vpop.f32.mrf.mxu0
      %v421 = vadd.f32 0.0, %v420
      %v422 = vpop.f32.mrf.mxu0
      %423 = vmatprep.mubr.f32.mxu0 0.0
      %424 = vmatmul.mubr.f32.gmra.mxu0 %v291
      %v425 = vpop.f32.mrf.mxu0
      %v426 = vadd.f32 0.0, %v425
      %v427 = vpop.f32.mrf.mxu0
      %428 = vmatprep.mubr.f32.mxu0 0.0
      %429 = vmatmul.mubr.f32.gmra.mxu0 %v292
      %v430 = vpop.f32.mrf.mxu0
      %v431 = vadd.f32 0.0, %v430
      %v432 = vpop.f32.mrf.mxu0
      %433 = vmatprep.mubr.f32.mxu0 0.0
      %434 = vmatmul.mubr.f32.gmra.mxu0 %v293
      %v435 = vpop.f32.mrf.mxu0
      %v436 = vadd.f32 0.0, %v435
      %v437 = vpop.f32.mrf.mxu0
      %438 = vmatprep.mubr.f32.mxu0 0.0
      %439 = vmatmul.mubr.f32.gmra.mxu0 %v294
      %v440 = vpop.f32.mrf.mxu0
      %v441 = vadd.f32 0.0, %v440
      %v442 = vpop.f32.mrf.mxu0
      %443 = vmatprep.mubr.f32.mxu0 0.0
      %444 = vmatmul.mubr.f32.gmra.mxu0 %v295
      %v445 = vpop.f32.mrf.mxu0
      %v446 = vadd.f32 0.0, %v445
      %v447 = vpop.f32.mrf.mxu0
      %448 = vmatprep.mubr.f32.mxu0 0.0
      %449 = vmatmul.mubr.f32.gmra.mxu0 %v296
      %v450 = vpop.f32.mrf.mxu0
      %v451 = vadd.f32 0.0, %v450
      %v452 = vpop.f32.mrf.mxu0
      %453 = vmatprep.mubr.f32.mxu0 0.0
      %454 = vmatmul.mubr.f32.gmra.mxu0 %v297
      %v455 = vpop.f32.mrf.mxu0
      %v456 = vadd.f32 0.0, %v455
      %v457 = vpop.f32.mrf.mxu0
      %458 = vmatprep.mubr.f32.mxu0 0.0
      %459 = vmatmul.mubr.f32.gmra.mxu0 %v298
      %v460 = vpop.f32.mrf.mxu0
      %v461 = vadd.f32 0.0, %v460
      %v462 = vpop.f32.mrf.mxu0
      %463 = vmatprep.mubr.f32.mxu0 0.0
      %464 = vmatmul.mubr.f32.gmra.mxu0 %v299
      %v465 = vpop.f32.mrf.mxu0
      %v466 = vadd.f32 0.0, %v465
      %v467 = vpop.f32.mrf.mxu0
      %468 = vmatprep.mubr.f32.mxu0 0.0
      %469 = vmatmul.mubr.f32.gmra.mxu0 %v300
      %v470 = vpop.f32.mrf.mxu0
      %v471 = vadd.f32 0.0, %v470
      %v472 = vpop.f32.mrf.mxu0
      %473 = vmatprep.mubr.f32.mxu0 0.0
      %474 = vmatmul.mubr.f32.gmra.mxu0 %v301
      %v475 = vpop.f32.mrf.mxu0
      %v476 = vadd.f32 0.0, %v475
      %v477 = vpop.f32.mrf.mxu0
      %478 = vmatprep.mubr.f32.mxu0 0.0
      %479 = vmatmul.mubr.f32.gmra.mxu0 %v302
      %v480 = vpop.f32.mrf.mxu0
      %v481 = vadd.f32 0.0, %v480
      %v482 = vpop.f32.mrf.mxu0
      %483 = vmatprep.mubr.f32.mxu0 0.0
      %484 = vmatmul.mubr.f32.gmra.mxu0 %v303
      %v485 = vpop.f32.mrf.mxu0
      %v486 = vadd.f32 0.0, %v485
      %v487 = vpop.f32.mrf.mxu0
      %488 = vmatprep.mubr.f32.mxu0 0.0
      %489 = vmatmul.mubr.f32.gmra.mxu0 %v304
      %v490 = vpop.f32.mrf.mxu0
      %v491 = vadd.f32 0.0, %v490
      %v492 = vpop.f32.mrf.mxu0
      %493 = vmatprep.mubr.f32.mxu0 0.0
      %494 = vmatmul.mubr.f32.gmra.mxu0 %v305
      %v495 = vpop.f32.mrf.mxu0
      %v496 = vadd.f32 0.0, %v495
      %v497 = vpop.f32.mrf.mxu0
      %498 = vmatprep.mubr.f32.mxu0 0.0
      %499 = vmatmul.mubr.f32.gmra.mxu0 %v306
      %v500 = vpop.f32.mrf.mxu0
      %v501 = vadd.f32 0.0, %v500
      %v502 = vpop.f32.mrf.mxu0
      %503 = vmatprep.mubr.f32.mxu0 0.0
      %504 = vmatmul.mubr.f32.gmra.mxu0 %v307
      %v505 = vpop.f32.mrf.mxu0
      %v506 = vadd.f32 0.0, %v505
      %v507 = vpop.f32.mrf.mxu0
      %508 = vmatprep.mubr.f32.mxu0 0.0
      %509 = vmatmul.mubr.f32.gmra.mxu0 %v308
      %v510 = vpop.f32.mrf.mxu0
      %v511 = vadd.f32 0.0, %v510
      %v512 = vpop.f32.mrf.mxu0
      %513 = vmatprep.mubr.f32.mxu0 0.0
      %514 = vmatmul.mubr.f32.gmra.mxu0 %v309
      %v515 = vpop.f32.mrf.mxu0
      %v516 = vadd.f32 0.0, %v515
      %v517 = vpop.f32.mrf.mxu0
      %518 = vmatprep.mubr.f32.mxu0 0.0
      %519 = vmatmul.mubr.f32.gmra.mxu0 %v310
      %v520 = vpop.f32.mrf.mxu0
      %v521 = vadd.f32 0.0, %v520
      %v522 = vpop.f32.mrf.mxu0
      %523 = vmatprep.mubr.f32.mxu0 0.0
      %524 = vmatmul.mubr.f32.gmra.mxu0 %v311
      %v525 = vpop.f32.mrf.mxu0
      %v526 = vadd.f32 0.0, %v525
      %v527 = vpop.f32.mrf.mxu0
      %528 = vmatprep.mubr.f32.mxu0 0.0
      %529 = vmatmul.mubr.f32.gmra.mxu0 %v312
      %v530 = vpop.f32.mrf.mxu0
      %v531 = vadd.f32 0.0, %v530
      %v532 = vpop.f32.mrf.mxu0
      %533 = vmatprep.mubr.f32.mxu0 0.0
      %534 = vmatmul.mubr.f32.gmra.mxu0 %v313
      %v535 = vpop.f32.mrf.mxu0
      %v536 = vadd.f32 0.0, %v535
      %v537 = vpop.f32.mrf.mxu0
      %538 = vmatprep.mubr.f32.mxu0 0.0
      %539 = vmatmul.mubr.f32.gmra.mxu0 %v314
      %v540 = vpop.f32.mrf.mxu0
      %v541 = vadd.f32 0.0, %v540
      %v542 = vpop.f32.mrf.mxu0
      %543 = vmatprep.mubr.f32.mxu0 0.0
      %544 = vmatmul.mubr.f32.gmra.mxu0 %v315
      %v545 = vpop.f32.mrf.mxu0
      %v546 = vadd.f32 0.0, %v545
      %v547 = vpop.f32.mrf.mxu0
      %548 = vmatprep.mubr.f32.mxu0 0.0
      %549 = vmatmul.mubr.f32.gmra.mxu0 %v316
      %v550 = vpop.f32.mrf.mxu0
      %v551 = vadd.f32 0.0, %v550
      %v552 = vpop.f32.mrf.mxu0
      %553 = vmatprep.mubr.f32.mxu0 0.0
      %554 = vmatmul.mubr.f32.gmra.mxu0 %v317
      %v555 = vpop.f32.mrf.mxu0
      %v556 = vadd.f32 0.0, %v555
      %v557 = vpop.f32.mrf.mxu0
      %558 = vdwg.mxu0
      %v559 = vadd.f32 %v254, %v401
      %v560 = vadd.f32 %v255, %v406
      %v561 = vadd.f32 %v256, %v411
      %v562 = vadd.f32 %v257, %v416
      %v563 = vadd.f32 %v258, %v421
      %v564 = vadd.f32 %v259, %v426
      %v565 = vadd.f32 %v260, %v431
      %v566 = vadd.f32 %v261, %v436
      %v567 = vadd.f32 %v262, %v441
      %v568 = vadd.f32 %v263, %v446
      %v569 = vadd.f32 %v264, %v451
      %v570 = vadd.f32 %v265, %v456
      %v571 = vadd.f32 %v266, %v461
      %v572 = vadd.f32 %v267, %v466
      %v573 = vadd.f32 %v268, %v471
      %v574 = vadd.f32 %v269, %v476
      %v575 = vadd.f32 %v270, %v481
      %v576 = vadd.f32 %v271, %v486
      %v577 = vadd.f32 %v272, %v491
      %v578 = vadd.f32 %v273, %v496
      %v579 = vadd.f32 %v274, %v501
      %v580 = vadd.f32 %v275, %v506
      %v581 = vadd.f32 %v276, %v511
      %v582 = vadd.f32 %v277, %v516
      %v583 = vadd.f32 %v278, %v521
      %v584 = vadd.f32 %v279, %v526
      %v585 = vadd.f32 %v280, %v531
      %v586 = vadd.f32 %v281, %v536
      %v587 = vadd.f32 %v282, %v541
      %v588 = vadd.f32 %v283, %v546
      %v589 = vadd.f32 %v284, %v551
      %v590 = vadd.f32 %v285, %v556
      %591 = vst [vmem:[#allocation2] sm:$0xff] %v559
      %592 = vst [vmem:[#allocation2 + $0x8] sm:$0xff] %v560
      %593 = vst [vmem:[#allocation2 + $0x10] sm:$0xff] %v561
      %594 = vst [vmem:[#allocation2 + $0x18] sm:$0xff] %v562
      %595 = vst [vmem:[#allocation2 + $0x20] sm:$0xff] %v563
      %596 = vst [vmem:[#allocation2 + $0x28] sm:$0xff] %v564
      %597 = vst [vmem:[#allocation2 + $0x30] sm:$0xff] %v565
      %598 = vst [vmem:[#allocation2 + $0x38] sm:$0xff] %v566
      %599 = vst [vmem:[#allocation2 + $0x40] sm:$0xff] %v567
      %600 = vst [vmem:[#allocation2 + $0x48] sm:$0xff] %v568
      %601 = vst [vmem:[#allocation2 + $0x50] sm:$0xff] %v569
      %602 = vst [vmem:[#allocation2 + $0x58] sm:$0xff] %v570
      %603 = vst [vmem:[#allocation2 + $0x60] sm:$0xff] %v571
      %604 = vst [vmem:[#allocation2 + $0x68] sm:$0xff] %v572
      %605 = vst [vmem:[#allocation2 + $0x70] sm:$0xff] %v573
      %606 = vst [vmem:[#allocation2 + $0x78] sm:$0xff] %v574
      %607 = vst [vmem:[#allocation2 + $0x80] sm:$0xff] %v575
      %608 = vst [vmem:[#allocation2 + $0x88] sm:$0xff] %v576
      %609 = vst [vmem:[#allocation2 + $0x90] sm:$0xff] %v577
      %610 = vst [vmem:[#allocation2 + $0x98] sm:$0xff] %v578
      %611 = vst [vmem:[#allocation2 + $0xa0] sm:$0xff] %v579
      %612 = vst [vmem:[#allocation2 + $0xa8] sm:$0xff] %v580
      %613 = vst [vmem:[#allocation2 + $0xb0] sm:$0xff] %v581
      %614 = vst [vmem:[#allocation2 + $0xb8] sm:$0xff] %v582
      %615 = vst [vmem:[#allocation2 + $0xc0] sm:$0xff] %v583
      %616 = vst [vmem:[#allocation2 + $0xc8] sm:$0xff] %v584
      %617 = vst [vmem:[#allocation2 + $0xd0] sm:$0xff] %v585
      %618 = vst [vmem:[#allocation2 + $0xd8] sm:$0xff] %v586
      %619 = vst [vmem:[#allocation2 + $0xe0] sm:$0xff] %v587
      %620 = vst [vmem:[#allocation2 + $0xe8] sm:$0xff] %v588
      %621 = vst [vmem:[#allocation2 + $0xf0] sm:$0xff] %v589
      %622 = vst [vmem:[#allocation2 + $0xf8] sm:$0xff] %v590
      // Predicated region
      $region33: #{run.14} parent=27 // pred_check
        %p623 = pneg %p218
      $region34: #{run.14} parent=27 // pred_check_branch
        %625 = sbr.rel (%p623) target = $region36
      $region35: #{run.14} parent=27 // pred_region
        %v626 = vld [vmem:[#allocation2] sm:$0xff]
        %v627 = vld [vmem:[#allocation2 + $0x8] sm:$0xff]
        %v628 = vld [vmem:[#allocation2 + $0x10] sm:$0xff]
        %v629 = vld [vmem:[#allocation2 + $0x18] sm:$0xff]
        %v630 = vld [vmem:[#allocation2 + $0x20] sm:$0xff]
        %v631 = vld [vmem:[#allocation2 + $0x28] sm:$0xff]
        %v632 = vld [vmem:[#allocation2 + $0x30] sm:$0xff]
        %v633 = vld [vmem:[#allocation2 + $0x38] sm:$0xff]
        %v634 = vld [vmem:[#allocation2 + $0x40] sm:$0xff]
        %v635 = vld [vmem:[#allocation2 + $0x48] sm:$0xff]
        %v636 = vld [vmem:[#allocation2 + $0x50] sm:$0xff]
        %v637 = vld [vmem:[#allocation2 + $0x58] sm:$0xff]
        %v638 = vld [vmem:[#allocation2 + $0x60] sm:$0xff]
        %v639 = vld [vmem:[#allocation2 + $0x68] sm:$0xff]
        %v640 = vld [vmem:[#allocation2 + $0x70] sm:$0xff]
        %v641 = vld [vmem:[#allocation2 + $0x78] sm:$0xff]
        %v642 = vld [vmem:[#allocation2 + $0x80] sm:$0xff]
        %v643 = vld [vmem:[#allocation2 + $0x88] sm:$0xff]
        %v644 = vld [vmem:[#allocation2 + $0x90] sm:$0xff]
        %v645 = vld [vmem:[#allocation2 + $0x98] sm:$0xff]
        %v646 = vld [vmem:[#allocation2 + $0xa0] sm:$0xff]
        %v647 = vld [vmem:[#allocation2 + $0xa8] sm:$0xff]
        %v648 = vld [vmem:[#allocation2 + $0xb0] sm:$0xff]
        %v649 = vld [vmem:[#allocation2 + $0xb8] sm:$0xff]
        %v650 = vld [vmem:[#allocation2 + $0xc0] sm:$0xff]
        %v651 = vld [vmem:[#allocation2 + $0xc8] sm:$0xff]
        %v652 = vld [vmem:[#allocation2 + $0xd0] sm:$0xff]
        %v653 = vld [vmem:[#allocation2 + $0xd8] sm:$0xff]
        %v654 = vld [vmem:[#allocation2 + $0xe0] sm:$0xff]
        %v655 = vld [vmem:[#allocation2 + $0xe8] sm:$0xff]
        %v656 = vld [vmem:[#allocation2 + $0xf0] sm:$0xff]
        %v657 = vld [vmem:[#allocation2 + $0xf8] sm:$0xff]
        %658 = vst [vmem:[%s216] sm:$0xff] %v626
        %659 = vst [vmem:[%s216 + $0x8] sm:$0xff] %v627
        %660 = vst [vmem:[%s216 + $0x10] sm:$0xff] %v628
        %661 = vst [vmem:[%s216 + $0x18] sm:$0xff] %v629
        %662 = vst [vmem:[%s216 + $0x20] sm:$0xff] %v630
        %663 = vst [vmem:[%s216 + $0x28] sm:$0xff] %v631
        %664 = vst [vmem:[%s216 + $0x30] sm:$0xff] %v632
        %665 = vst [vmem:[%s216 + $0x38] sm:$0xff] %v633
        %666 = vst [vmem:[%s216 + $0x40] sm:$0xff] %v634
        %667 = vst [vmem:[%s216 + $0x48] sm:$0xff] %v635
        %668 = vst [vmem:[%s216 + $0x50] sm:$0xff] %v636
        %669 = vst [vmem:[%s216 + $0x58] sm:$0xff] %v637
        %670 = vst [vmem:[%s216 + $0x60] sm:$0xff] %v638
        %671 = vst [vmem:[%s216 + $0x68] sm:$0xff] %v639
        %672 = vst [vmem:[%s216 + $0x70] sm:$0xff] %v640
        %673 = vst [vmem:[%s216 + $0x78] sm:$0xff] %v641
        %674 = vst [vmem:[%s216 + $0x80] sm:$0xff] %v642
        %675 = vst [vmem:[%s216 + $0x88] sm:$0xff] %v643
        %676 = vst [vmem:[%s216 + $0x90] sm:$0xff] %v644
        %677 = vst [vmem:[%s216 + $0x98] sm:$0xff] %v645
        %678 = vst [vmem:[%s216 + $0xa0] sm:$0xff] %v646
        %679 = vst [vmem:[%s216 + $0xa8] sm:$0xff] %v647
        %680 = vst [vmem:[%s216 + $0xb0] sm:$0xff] %v648
        %681 = vst [vmem:[%s216 + $0xb8] sm:$0xff] %v649
        %682 = vst [vmem:[%s216 + $0xc0] sm:$0xff] %v650
        %683 = vst [vmem:[%s216 + $0xc8] sm:$0xff] %v651
        %684 = vst [vmem:[%s216 + $0xd0] sm:$0xff] %v652
        %685 = vst [vmem:[%s216 + $0xd8] sm:$0xff] %v653
        %686 = vst [vmem:[%s216 + $0xe0] sm:$0xff] %v654
        %687 = vst [vmem:[%s216 + $0xe8] sm:$0xff] %v655
        %688 = vst [vmem:[%s216 + $0xf0] sm:$0xff] %v656
        %689 = vst [vmem:[%s216 + $0xf8] sm:$0xff] %v657
      $region36: #{run.14} parent=27 // pred_fallthru
        _
      %s690 = smul.u32 32, %s18
      %p691 = scmp.lt.s32.totalorder %s690, 63
      %s692 = scalar_select %p691, %s690, 63
      %p693 = scmp.lt.s32.totalorder %s19, 0
      %s694 = scalar_select %p693, %s19, 0
      %s695 = sadd.s32 %s694, %s692
      %s696 = smul.addr %s695, 8
      %s697 = scalar_lea.vmem %s2, %s696
      // Predicated region
      $region37: #{run.14} parent=27 // pred_check
        %p698 = pneg %p108
      $region38: #{run.14} parent=27 // pred_check_branch
        %700 = sbr.rel (%p698) target = $region40
      $region39: #{run.14} parent=27 // pred_region
        %s701 = smul.u32 32, %s18
      $region40: #{run.14} parent=27 // pred_fallthru
        _
    $region28: #{run.14} parent=5 // pred_fallthru
      _
    %p702 = scmp.le.s32.totalorder 2, %s8
    // Predicated region
    $region41: #{run.14} parent=5 // pred_check
      %p703 = pneg %p702
    $region42: #{run.14} parent=5 // pred_check_branch
      %705 = sbr.rel (%p703) target = $region44
    $region43: #{run.14} parent=5 // pred_region
      %s706 = ssub.s32 %s8, 2
      // Predicated region
      $region45: #{run.14} parent=43 // pred_check
        %p707 = pneg %p114
      $region46: #{run.14} parent=43 // pred_check_branch
        %709 = sbr.rel (%p707) target = $region48
      $region47: #{run.14} parent=43 // pred_region
        %s710 = smul.u32 32, %s21
        %p711 = scmp.lt.s32.totalorder %s710, 63
        %s712 = scalar_select %p711, %s710, 63
        %p713 = scmp.lt.s32.totalorder %s22, 0
        %s714 = scalar_select %p713, %s22, 0
        %s715 = sadd.s32 %s714, %s712
        %s716 = smul.addr %s715, 8
        %s717 = scalar_lea.vmem %s2, %s716
      $region48: #{run.14} parent=43 // pred_fallthru
        _
    $region44: #{run.14} parent=5 // pred_fallthru
      _
  $region6: #{run.14} parent=0 // loop_footer
    %s12 = sadd.s32 1, %s8
  $region7: #{run.14} parent=0 // loop_footer_branch
    %7 = sbr.rel target = $region3
  $region8: #{run.14} parent=0 // loop_exit
    _

</llo_original>
